<compile_context>
chip_gen: v6e
topology: v6e:2x2x1
jax: 0.10.0
libtpu: 0.0.40
codegen_flags: <defaults>
</compile_context>

<pallas_src>
import functools
import math

import jax
import jax.numpy as jnp
from jax.experimental import pallas as pl
from jax.experimental.pallas import tpu as pltpu

_LANE = 128
_OUT_BLOCK_BYTES = 4 * 1024 * 1024   # ~4 MiB per output buffer: amortizes ~0.35us/step, v7x-safe
_MIN_GRID_STEPS = 8                  # keep the parallel grid shardable across v7x's 2 TensorCores
_MAX_CONTRACT = 64                   # max features per group (bounds E size / MXU depth)
_MIN_CONTRACT = 32                   # densify tiny-D folds until k*d reaches this (fuller LHS vregs)
_MAX_FOLD_WIDTH = 2048               # cap on the folded output width


def _round_up(v, m):
    return (v + m - 1) // m * m


def _fourier_kernel(x_ref, e_ref, b_ref, o_ref, *, precision):
    # x_ref: (TM, K*Dg) folded input rows
    # e_ref: (K*Dg, W)  constant block-diagonal expansion matrix (2*pi*freq baked in)
    # b_ref: (1, W)     pi/2 on cos lanes, 0 on sin lanes
    # o_ref: (TM, W)    lane-dense output tile (W a multiple of 128 on the fast path)
    phase = jnp.dot(
        x_ref[...],
        e_ref[...],
        preferred_element_type=jnp.float32,
        precision=precision,
    )
    # cos(x) == sin(x + pi/2): one dense transcendental pass over full vregs.
    # TODO(synk): if a bundle profile shows VALU (not HBM) binding on v7x, fold the
    # pi/2 bias into E via an appended ones-column and drop this broadcast add.
    o_ref[...] = jnp.sin(phase + b_ref[...]).astype(o_ref.dtype)


def _expansion_constants(frequencies, d, k):
    """E (k*d, k*d*2F) block-diagonal over k fold groups, bias (1, k*d*2F)."""
    f = frequencies.shape[0]
    out_d = d * 2 * f
    freqs = frequencies.astype(jnp.float32)

    cols = jnp.arange(out_d)
    feat = cols // (2 * f)                              # input feature feeding each column
    w = (2.0 * math.pi) * freqs[cols % f]               # 2*pi*freq per output column
    e_small = jnp.where(jnp.arange(d)[:, None] == feat[None, :], w[None, :], 0.0)
    b_small = jnp.where((cols % (2 * f)) >= f, math.pi / 2.0, 0.0)   # cos = sin(x + pi/2)

    rg = jnp.arange(k * d) // d
    cg = jnp.arange(k * out_d) // out_d
    e_big = jnp.where(rg[:, None] == cg[None, :], jnp.tile(e_small, (k, k)), 0.0)
    b_big = jnp.tile(b_small, (k,))
    return e_big.astype(jnp.float32), b_big.reshape(1, k * out_d).astype(jnp.float32)


def fourier_embedding(x, frequencies, *, out_dtype=jnp.float32,
                      precision=jax.lax.Precision.HIGHEST):
    """x: (B, S, D) float; frequencies: (F,) float -> (B, S, D*2F).

    out_dtype=jnp.bfloat16 halves HBM writeback (opt-in; default keeps the module's
    f32 contract).  precision=HIGH (bf16x3) frees MXU passes when D is large but adds
    ~1e-5-relative phase error; the contraction here is <= 64 deep and memory-bound,
    so HIGHEST (exact f32) costs nothing and stays the default.
    """
    b, s, d = x.shape
    f = int(frequencies.shape[0])
    out_d = d * 2 * f
    n = b * s

    # --- feature grouping: never build an O(D^2) expansion matrix -----------------
    d_g = d
    if d > _MAX_CONTRACT:
        d_g = max(g for g in range(1, _MAX_CONTRACT + 1) if d % g == 0)
    groups = d // d_g
    out_dg = d_g * 2 * f
    n_rows = n * groups                      # (n, d) viewed as (n*groups, d_g) — free reshape

    # --- row fold: make the output block lane-dense (last dim % 128 == 0) ---------
    k_min = _LANE // math.gcd(out_dg, _LANE)
    if k_min * out_dg > 4096:
        k_min = 1                            # pathological width: masked stores, still correct
    k = k_min
    while k * d_g < _MIN_CONTRACT and 2 * k * out_dg <= _MAX_FOLD_WIDTH:
        k *= 2                               # densify tiny-D folds (fuller LHS vregs)
    if n_rows % k:
        kk = k                               # prefer a smaller fold over padding a copy of x
        while kk > k_min and n_rows % kk:
            kk //= 2
        if n_rows % kk == 0:
            k = kk
    w_total = k * out_dg

    # --- wrapper-side layout (contiguous reshapes only; no full-array copies) -----
    x2d = x.reshape(n_rows, d_g)
    if x2d.dtype not in (jnp.dtype(jnp.float32), jnp.dtype(jnp.bfloat16)):
        x2d = x2d.astype(jnp.float32)        # f32 / bf16 inputs feed the MXU directly
    rem = n_rows % k
    if rem:
        # Only the fold remainder (< k rows) is padded; ragged row tiles are handled
        # by Pallas, so we never pad to a tile multiple.
        # TODO(synk): a fully zero-copy ragged tail would need a second tiny call.
        x2d = jnp.pad(x2d, ((0, k - rem), (0, 0)))
    n_rows_pad = x2d.shape[0]
    n_folded = n_rows_pad // k
    x_folded = x2d.reshape(n_folded, k * d_g)

    e_big, bias = _expansion_constants(frequencies, d_g, k)

    # --- row-tile size: ~4 MiB output blocks, >= _MIN_GRID_STEPS grid steps -------
    out_itemsize = jnp.dtype(out_dtype).itemsize
    tm_cap = max(8, (_OUT_BLOCK_BYTES // (w_total * out_itemsize)) // 8 * 8)
    if n_folded <= 8:
        tm = n_folded                        # block == full dim (allowed by the (8,128) rule)
    else:
        tm_bal = _round_up(pl.cdiv(n_folded, _MIN_GRID_STEPS), 8)
        tm = max(8, min(tm_cap, tm_bal))
    grid = (pl.cdiv(n_folded, tm),)

    # --- explicit VMEM budget: 2x in tile + 2x out tile + constants ---------------
    rows_p = _round_up(max(tm, 8), 8)
    in_w_p = _round_up(k * d_g, _LANE)
    out_w_p = _round_up(w_total, _LANE)
    vmem_est = (2 * rows_p * in_w_p * x2d.dtype.itemsize
                + 2 * rows_p * out_w_p * out_itemsize
                + 2 * (_round_up(k * d_g, 8) + 8) * out_w_p * 4)
    vmem_limit = int(min(48 << 20, max(2 * vmem_est + (4 << 20), 24 << 20)))

    kernel = functools.partial(_fourier_kernel, precision=precision)

    def _run(single_buffer_consts):
        const_kwargs = {"pipeline_mode": pl.Buffered(1)} if single_buffer_consts else {}
        return pl.pallas_call(
            kernel,
            out_shape=jax.ShapeDtypeStruct((n_folded, w_total), out_dtype),
            grid_spec=pltpu.PrefetchScalarGridSpec(
                num_scalar_prefetch=0,
                grid=grid,
                in_specs=[
                    pl.BlockSpec((tm, k * d_g), lambda i: (i, 0)),
                    pl.BlockSpec((k * d_g, w_total), lambda i: (0, 0), **const_kwargs),
                    pl.BlockSpec((1, w_total), lambda i: (0, 0), **const_kwargs),
                ],
                out_specs=pl.BlockSpec((tm, w_total), lambda i: (i, 0)),
            ),
            compiler_params=pltpu.CompilerParams(
                dimension_semantics=("parallel",),       # shards the row grid across v7x's 2 TCs
                vmem_limit_bytes=vmem_limit,
            ),
        )(x_folded, e_big, bias)

    try:
        # E / bias are revisited every step; single-buffering them halves their VMEM
        # footprint at zero perf cost (matters once D / E grow, v7x has 64 MiB VMEM).
        out_folded = jax.block_until_ready(_run(True))
    except Exception:   # pl.Buffered(1) / pipeline_mode support varies across jax versions
        out_folded = _run(False)

    out2d = out_folded.reshape(n_rows_pad, out_dg)
    if n_rows_pad != n_rows:
        out2d = out2d[:n_rows]
    return out2d.reshape(b, s, out_d)


def fourier_embedding_ref(x, frequencies):
    """Pure-JAX reference mirroring the PyTorch forward."""
    b, s, _ = x.shape
    phase = x[..., None] * frequencies.reshape(1, 1, 1, -1) * 2.0 * math.pi
    emb = jnp.concatenate([jnp.sin(phase), jnp.cos(phase)], axis=-1)
    return emb.reshape(b, s, -1)


if __name__ == "__main__":
    # Module params (matches nn.Parameter(torch.linspace(1, max_freq, F)))
    num_frequencies = 8
    max_freq = 10.0
    frequencies = jnp.linspace(1.0, max_freq, num_frequencies).astype(jnp.float32)

    key = jax.random.PRNGKey(0)
    k1, k2, k3 = jax.random.split(key, 3)

    # Primary shape from the module spec: batch=2, seq=8, feature dim=4 -> (2, 8, 64).
    x = jax.random.normal(k1, (2, 8, 4), dtype=jnp.float32)
    out = jax.block_until_ready(fourier_embedding(x, frequencies))
    ref = fourier_embedding_ref(x, frequencies)
    assert out.shape == (2, 8, 4 * 2 * num_frequencies), out.shape
    assert jnp.allclose(out, ref, atol=1e-4, rtol=1e-4), float(jnp.max(jnp.abs(out - ref)))

    # Ragged row count: exercises the fold-remainder pad + ragged last row tile.
    x2 = jax.random.normal(k2, (3, 37, 5), dtype=jnp.float32)
    out2 = jax.block_until_ready(fourier_embedding(x2, frequencies))
    ref2 = fourier_embedding_ref(x2, frequencies)
    assert out2.shape == ref2.shape, out2.shape
    assert jnp.allclose(out2, ref2, atol=5e-4, rtol=5e-4), float(jnp.max(jnp.abs(out2 - ref2)))

    # Wide feature dim: exercises the feature-group split (no O(D^2) expansion matrix).
    freqs4 = jnp.linspace(1.0, max_freq, 4).astype(jnp.float32)
    x3 = jax.random.normal(k3, (2, 5, 96), dtype=jnp.float32)
    out3 = jax.block_until_ready(fourier_embedding(x3, freqs4))
    ref3 = fourier_embedding_ref(x3, freqs4)
    assert out3.shape == ref3.shape, out3.shape
    assert jnp.allclose(out3, ref3, atol=5e-4, rtol=5e-4), float(jnp.max(jnp.abs(out3 - ref3)))

    # Opt-in bf16 output (halves HBM writeback; f32 contract preserved by default).
    out_bf16 = jax.block_until_ready(fourier_embedding(x, frequencies, out_dtype=jnp.bfloat16))
    assert jnp.allclose(out_bf16.astype(jnp.float32), ref, atol=2e-2, rtol=2e-2)

    print("KERNEL_OK")
</pallas_src>

<mosaic_0001>
module attributes {stable_mosaic.version = 11 : i64} {
  func.func @_fourier_kernel(%arg0: i32, %arg1: memref<2x32xf32, #tpu.memory_space<vmem>>, %arg2: memref<32x512xf32, #tpu.memory_space<vmem>>, %arg3: memref<1x512xf32, #tpu.memory_space<vmem>>, %arg4: memref<2x512xf32, #tpu.memory_space<vmem>>) attributes {dimension_semantics = [#tpu.dimension_semantics<parallel>], iteration_bounds = array<i64: 1>, scalar_prefetch = 0 : i64, scratch_operands = 0 : i64, tpu.core_type = #tpu.core_type<tc>, window_params = [{transform_indices = @transform_0, window_bounds = array<i64: 2, 32>}, {pipeline_mode = #tpu.pipeline_mode<synchronous>, transform_indices = @transform_1, window_bounds = array<i64: 32, 512>}, {pipeline_mode = #tpu.pipeline_mode<synchronous>, transform_indices = @transform_2, window_bounds = array<i64: 1, 512>}, {transform_indices = @transform_3, window_bounds = array<i64: 2, 512>}]} {
    %c0 = arith.constant 0 : index
    %c0_0 = arith.constant 0 : index
    %0 = vector.load %arg1[%c0, %c0_0] : memref<2x32xf32, #tpu.memory_space<vmem>>, vector<2x32xf32>
    %c0_1 = arith.constant 0 : index
    %c0_2 = arith.constant 0 : index
    %1 = vector.load %arg2[%c0_1, %c0_2] : memref<32x512xf32, #tpu.memory_space<vmem>>, vector<32x512xf32>
    %cst = arith.constant dense<0.000000e+00> : vector<2x512xf32>
    %2 = tpu.matmul %0, %1, %cst {dimension_numbers = #tpu.dot_dimension_numbers<[1], [0], [0], [1], [0, 0, 1, 1], [], []>, precision = #tpu.contract_precision<fp32>} : vector<2x32xf32>, vector<32x512xf32>, vector<2x512xf32> -> vector<2x512xf32>
    %c0_3 = arith.constant 0 : index
    %c0_4 = arith.constant 0 : index
    %3 = vector.load %arg3[%c0_3, %c0_4] : memref<1x512xf32, #tpu.memory_space<vmem>>, vector<1x512xf32>
    %4 = vector.broadcast %3 : vector<1x512xf32> to vector<2x512xf32>
    %5 = arith.addf %2, %4 : vector<2x512xf32>
    %6 = math.sin %5 : vector<2x512xf32>
    %c0_5 = arith.constant 0 : index
    %c0_6 = arith.constant 0 : index
    %7 = vector.load %arg4[%c0_5, %c0_6] : memref<2x512xf32, #tpu.memory_space<vmem>>, vector<2x512xf32>
    tpu.vector_store %arg4[%c0_5, %c0_6], %6 {strides = array<i32>} : memref<2x512xf32, #tpu.memory_space<vmem>>, vector<2x512xf32>,
    return
  }
  func.func @transform_0(%arg0: i32) -> (i32, i32) {
    %c0_i32 = arith.constant 0 : i32
    %c0_i32_0 = arith.constant 0 : i32
    return %arg0, %c0_i32 : i32, i32
  }
  func.func @transform_1(%arg0: i32) -> (i32, i32) {
    %c0_i32 = arith.constant 0 : i32
    %c0_i32_0 = arith.constant 0 : i32
    %c0_i32_1 = arith.constant 0 : i32
    return %c0_i32, %c0_i32_0 : i32, i32
  }
  func.func @transform_2(%arg0: i32) -> (i32, i32) {
    %c0_i32 = arith.constant 0 : i32
    %c0_i32_0 = arith.constant 0 : i32
    %c0_i32_1 = arith.constant 0 : i32
    return %c0_i32, %c0_i32_0 : i32, i32
  }
  func.func @transform_3(%arg0: i32) -> (i32, i32) {
    %c0_i32 = arith.constant 0 : i32
    %c0_i32_0 = arith.constant 0 : i32
    return %arg0, %c0_i32 : i32, i32
  }
}

module attributes {stable_mosaic.version = 11 : i64} {
  func.func @_fourier_kernel(%arg0: i32, %arg1: memref<2x32xf32, #tpu.memory_space<vmem>>, %arg2: memref<32x512xf32, #tpu.memory_space<vmem>>, %arg3: memref<1x512xf32, #tpu.memory_space<vmem>>, %arg4: memref<2x512xf32, #tpu.memory_space<vmem>>) attributes {dimension_semantics = [#tpu.dimension_semantics<parallel>], iteration_bounds = array<i64: 1>, scalar_prefetch = 0 : i64, scratch_operands = 0 : i64, tpu.core_type = #tpu.core_type<tc>, window_params = [{transform_indices = @transform_0, window_bounds = array<i64: 2, 32>}, {pipeline_mode = #tpu.pipeline_mode<synchronous>, transform_indices = @transform_1, window_bounds = array<i64: 32, 512>}, {pipeline_mode = #tpu.pipeline_mode<synchronous>, transform_indices = @transform_2, window_bounds = array<i64: 1, 512>}, {transform_indices = @transform_3, window_bounds = array<i64: 2, 512>}]} {
    %c0 = arith.constant 0 : index
    %c0_0 = arith.constant 0 : index
    %0 = vector.load %arg1[%c0, %c0_0] : memref<2x32xf32, #tpu.memory_space<vmem>>, vector<2x32xf32>
    %c0_1 = arith.constant 0 : index
    %c0_2 = arith.constant 0 : index
    %1 = vector.load %arg2[%c0_1, %c0_2] : memref<32x512xf32, #tpu.memory_space<vmem>>, vector<32x512xf32>
    %cst = arith.constant dense<0.000000e+00> : vector<2x512xf32>
    %2 = tpu.matmul %0, %1, %cst {dimension_numbers = #tpu.dot_dimension_numbers<[1], [0], [0], [1], [0, 0, 1, 1], [], []>, precision = #tpu.contract_precision<fp32>} : vector<2x32xf32>, vector<32x512xf32>, vector<2x512xf32> -> vector<2x512xf32>
    %c0_3 = arith.constant 0 : index
    %c0_4 = arith.constant 0 : index
    %3 = vector.load %arg3[%c0_3, %c0_4] : memref<1x512xf32, #tpu.memory_space<vmem>>, vector<1x512xf32>
    %4 = vector.broadcast %3 : vector<1x512xf32> to vector<2x512xf32>
    %5 = arith.addf %2, %4 : vector<2x512xf32>
    %6 = math.sin %5 : vector<2x512xf32>
    %c0_5 = arith.constant 0 : index
    %c0_6 = arith.constant 0 : index
    %7 = vector.load %arg4[%c0_5, %c0_6] : memref<2x512xf32, #tpu.memory_space<vmem>>, vector<2x512xf32>
    tpu.vector_store %arg4[%c0_5, %c0_6], %6 {strides = array<i32>} : memref<2x512xf32, #tpu.memory_space<vmem>>, vector<2x512xf32>,
    return
  }
  func.func @transform_0(%arg0: i32) -> (i32, i32) {
    %c0_i32 = arith.constant 0 : i32
    %c0_i32_0 = arith.constant 0 : i32
    return %arg0, %c0_i32 : i32, i32
  }
  func.func @transform_1(%arg0: i32) -> (i32, i32) {
    %c0_i32 = arith.constant 0 : i32
    %c0_i32_0 = arith.constant 0 : i32
    %c0_i32_1 = arith.constant 0 : i32
    return %c0_i32, %c0_i32_0 : i32, i32
  }
  func.func @transform_2(%arg0: i32) -> (i32, i32) {
    %c0_i32 = arith.constant 0 : i32
    %c0_i32_0 = arith.constant 0 : i32
    %c0_i32_1 = arith.constant 0 : i32
    return %c0_i32, %c0_i32_0 : i32, i32
  }
  func.func @transform_3(%arg0: i32) -> (i32, i32) {
    %c0_i32 = arith.constant 0 : i32
    %c0_i32_0 = arith.constant 0 : i32
    return %arg0, %c0_i32 : i32, i32
  }
}

</mosaic_0001>

<llo_original>
// kernel: tpu_custom_call.1
$region0: #{tpu_custom_call.1}
  #allocation0 [shape = 'u32[]', space=smem, size = 0x4, offset = 0x4, fixed_abs, tag = 'smem constant byte address 0x4 - core index']
  #allocation1 [shape = 'u32[144,128]{1,0:T(1,128)}', space=vmem, size = 0x12000, scoped, tag = 'internal scratch']
  %s0 = inlined_call_operand.hbm [shape: f32[2,32], index: 0, kind: input, shape index: {}]
  %s1 = inlined_call_operand.hbm [shape: f32[32,512], index: 1, kind: input, shape index: {}]
  %s2 = inlined_call_operand.hbm [shape: f32[1,512], index: 2, kind: input, shape index: {}]
  %s3 = inlined_call_operand.hbm [shape: f32[2,512], index: 3, kind: output, shape index: {}]
  %s4 = sld [smem:[#allocation0]]
  $region34: #{tpu_custom_call.1} parent=0
    _
  %s6 = ssub.s32 1, %s4
  %s7 = scalar_select 0, %s6, %s4
  $region1: #{tpu_custom_call.1} parent=0
    #allocation2 [shape = 'u8[1024]{0}', space=vmem, size = 0x400, scoped, tag = 'input window, operand 0, single buffered']
    #allocation3 [shape = 's32[1]{0}', space=sflag, size = 0x4, scoped, tag = 'scoped memory for tpu_custom_call.1']
    #allocation4 [shape = 's32[1]{0}', space=sflag, size = 0x4, scoped, tag = 'scoped memory for tpu_custom_call.1']
    #allocation5 [shape = 'u8[65536]{0}', space=vmem, size = 0x10000, scoped, tag = 'input window, operand 1, single buffered']
    #allocation6 [shape = 's32[1]{0}', space=sflag, size = 0x4, scoped, tag = 'scoped memory for tpu_custom_call.1']
    #allocation7 [shape = 'u8[2048]{0}', space=vmem, size = 0x800, scoped, tag = 'input window, operand 2, single buffered']
    #allocation8 [shape = 'u8[4096]{0}', space=vmem, size = 0x1000, scoped, tag = 'output window, operand 0, single buffered']
    %8 = vsyncpa [#allocation3], 0
    %9 = vsyncpa [#allocation6], 0
    %10 = vsyncpa [#allocation4], 0
    // Predicated region
    $region2: #{tpu_custom_call.1} parent=1 // pred_check
      _
    $region3: #{tpu_custom_call.1} parent=1 // pred_check_branch
      %12 = sbr.rel (0) target = $region5
    $region4: #{tpu_custom_call.1} parent=1 // pred_region
      %s14 = ssub.s32 32, 32
      %15 = vsyncadd [#allocation3], %s14
      %s17 = sshll.u32 [#allocation2], 4
      %s18 = int_to_ptr.vmem [resolvable:$true] %s17
      %20 = dma.hbm_to_vmem [thread:$0]  %s0, 32, %s18, [#allocation3]
    $region5: #{tpu_custom_call.1} parent=1 // pred_fallthru
      _
    // Predicated region
    $region6: #{tpu_custom_call.1} parent=1 // pred_check
      _
    $region7: #{tpu_custom_call.1} parent=1 // pred_check_branch
      %22 = sbr.rel (0) target = $region9
    $region8: #{tpu_custom_call.1} parent=1 // pred_region
      %s24 = ssub.s32 2048, 2048
      %25 = vsyncadd [#allocation6], %s24
      %s26 = sshll.u32 [#allocation5], 4
      %s27 = int_to_ptr.vmem [resolvable:$true] %s26
      %32 = dma.hbm_to_vmem [thread:$0]  %s1, 2048, %s27, [#allocation6], 512, 512, 32
    $region9: #{tpu_custom_call.1} parent=1 // pred_fallthru
      _
    // Predicated region
    $region10: #{tpu_custom_call.1} parent=1 // pred_check
      _
    $region11: #{tpu_custom_call.1} parent=1 // pred_check_branch
      %34 = sbr.rel (0) target = $region13
    $region12: #{tpu_custom_call.1} parent=1 // pred_region
      %s36 = ssub.s32 64, 64
      %37 = vsyncadd [#allocation6], %s36
      %s39 = sshll.u32 [#allocation7], 4
      %s40 = int_to_ptr.vmem [resolvable:$true] %s39
      %42 = dma.hbm_to_vmem [thread:$0]  %s2, 64, %s40, [#allocation6]
    $region13: #{tpu_custom_call.1} parent=1 // pred_fallthru
      _
    // Predicated region
    $region14: #{tpu_custom_call.1} parent=1 // pred_check
      _
    $region15: #{tpu_custom_call.1} parent=1 // pred_check_branch
      %44 = sbr.rel (0) target = $region17
    $region16: #{tpu_custom_call.1} parent=1 // pred_region
      %45 = dma.done [#allocation3], 32
    $region17: #{tpu_custom_call.1} parent=1 // pred_fallthru
      _
    // Predicated region
    $region18: #{tpu_custom_call.1} parent=1 // pred_check
      _
    $region19: #{tpu_custom_call.1} parent=1 // pred_check_branch
      %47 = sbr.rel (0) target = $region21
    $region20: #{tpu_custom_call.1} parent=1 // pred_region
      %48 = dma.done [#allocation6], 2048
    $region21: #{tpu_custom_call.1} parent=1 // pred_fallthru
      _
    // Predicated region
    $region22: #{tpu_custom_call.1} parent=1 // pred_check
      _
    $region23: #{tpu_custom_call.1} parent=1 // pred_check_branch
      %50 = sbr.rel (0) target = $region25
    $region24: #{tpu_custom_call.1} parent=1 // pred_region
      %51 = dma.done [#allocation6], 64
    $region25: #{tpu_custom_call.1} parent=1 // pred_fallthru
      _
    %v52 = vld [vmem:[#allocation2] sm:$0x3]
    %v53 = vld [vmem:[#allocation5] sm:$0xff]
    %v54 = vld [vmem:[#allocation5 + $0x8] sm:$0xff]
    %v55 = vld [vmem:[#allocation5 + $0x10] sm:$0xff]
    %v56 = vld [vmem:[#allocation5 + $0x18] sm:$0xff]
    %v57 = vld [vmem:[#allocation5 + $0x20] sm:$0xff]
    %v58 = vld [vmem:[#allocation5 + $0x28] sm:$0xff]
    %v59 = vld [vmem:[#allocation5 + $0x30] sm:$0xff]
    %v60 = vld [vmem:[#allocation5 + $0x38] sm:$0xff]
    %v61 = vld [vmem:[#allocation5 + $0x40] sm:$0xff]
    %v62 = vld [vmem:[#allocation5 + $0x48] sm:$0xff]
    %v63 = vld [vmem:[#allocation5 + $0x50] sm:$0xff]
    %v64 = vld [vmem:[#allocation5 + $0x58] sm:$0xff]
    %v65 = vld [vmem:[#allocation5 + $0x60] sm:$0xff]
    %v66 = vld [vmem:[#allocation5 + $0x68] sm:$0xff]
    %v67 = vld [vmem:[#allocation5 + $0x70] sm:$0xff]
    %v68 = vld [vmem:[#allocation5 + $0x78] sm:$0xff]
    %v69 = vld [vmem:[#allocation7] sm:$0xf]
    %v71 = vlaneseq
    %v72 = vshrl.u32 %v71, 7
    %v73 = vsub.s32 0, %v72
    %v74 = vrot.slane %v69, %v73
    %v75 = vlaneseq
    %v76 = vshrl.u32 %v75, 7
    %v77 = vsub.s32 1, %v76
    %v78 = vrot.slane %v69, %v77
    %v79 = vlaneseq
    %v80 = vshrl.u32 %v79, 7
    %v81 = vsub.s32 2, %v80
    %v82 = vrot.slane %v69, %v81
    %v83 = vlaneseq
    %v84 = vshrl.u32 %v83, 7
    %v85 = vsub.s32 3, %v84
    %v86 = vrot.slane %v69, %v85
    %vm91 = vcmask 261120
    %v93 = vsel %vm91, %v52, 0
    %95 = vmatprep.subr.mxu0 0.0
    %96 = vmatpush1.msra.mxu0 0.0
    %97 = vmatprep.subr.mxu0 0.0
    %98 = vmatpush1.msra.mxu0 0.0
    %99 = vmatprep.subr.mxu0 0.0
    %100 = vmatpush1.msra.mxu0 0.0
    %101 = vmatprep.subr.mxu0 0.0
    %102 = vmatpush1.msra.mxu0 0.0
    %103 = vmatprep.subr.mxu0 0.0
    %104 = vmatpush1.msra.mxu0 0.0
    %105 = vmatprep.subr.mxu0 0.0
    %106 = vmatpush1.msra.mxu0 0.0
    %107 = vmatprep.subr.mxu0 0.0
    %108 = vmatpush1.msra.mxu0 0.0
    %109 = vmatprep.subr.mxu0 0.0
    %110 = vmatpush1.msra.mxu0 0.0
    %111 = vmatprep.subr.mxu0 0.0
    %112 = vmatpush1.msra.mxu0 0.0
    %113 = vmatprep.subr.mxu0 0.0
    %114 = vmatpush1.msra.mxu0 0.0
    %115 = vmatprep.subr.mxu0 0.0
    %116 = vmatpush1.msra.mxu0 0.0
    %117 = vmatprep.subr.mxu0 0.0
    %118 = vmatpush1.msra.mxu0 0.0
    %v119 = vand.u32 %v66, 4294901760
    %120 = vmatprep.subr.mxu0 %v119
    %v121 = vand.u32 %v65, 4294901760
    %122 = vmatpush1.msra.mxu0 %v121
    %v123 = vand.u32 %v62, 4294901760
    %124 = vmatprep.subr.mxu0 %v123
    %v125 = vand.u32 %v61, 4294901760
    %126 = vmatpush1.msra.mxu0 %v125
    %v127 = vand.u32 %v58, 4294901760
    %128 = vmatprep.subr.mxu0 %v127
    %v129 = vand.u32 %v57, 4294901760
    %130 = vmatpush1.msra.mxu0 %v129
    %v131 = vand.u32 %v54, 4294901760
    %132 = vmatprep.subr.mxu0 %v131
    %v133 = vand.u32 %v53, 4294901760
    %134 = vmatpush1.msra.mxu0 %v133
    %135 = vmatprep.subr.mxu0 0.0
    %136 = vmatpush2.msra.mxu0 0.0
    %137 = vmatprep.subr.mxu0 0.0
    %138 = vmatpush2.msra.mxu0 0.0
    %139 = vmatprep.subr.mxu0 0.0
    %140 = vmatpush2.msra.mxu0 0.0
    %141 = vmatprep.subr.mxu0 0.0
    %142 = vmatpush2.msra.mxu0 0.0
    %143 = vmatprep.subr.mxu0 0.0
    %144 = vmatpush2.msra.mxu0 0.0
    %145 = vmatprep.subr.mxu0 0.0
    %146 = vmatpush2.msra.mxu0 0.0
    %147 = vmatprep.subr.mxu0 0.0
    %148 = vmatpush2.msra.mxu0 0.0
    %149 = vmatprep.subr.mxu0 0.0
    %150 = vmatpush2.msra.mxu0 0.0
    %151 = vmatprep.subr.mxu0 0.0
    %152 = vmatpush2.msra.mxu0 0.0
    %153 = vmatprep.subr.mxu0 0.0
    %154 = vmatpush2.msra.mxu0 0.0
    %155 = vmatprep.subr.mxu0 0.0
    %156 = vmatpush2.msra.mxu0 0.0
    %157 = vmatprep.subr.mxu0 0.0
    %158 = vmatpush2.msra.mxu0 0.0
    %159 = vmatprep.subr.mxu0 0.0
    %160 = vmatpush2.msra.mxu0 0.0
    %161 = vmatprep.subr.mxu0 0.0
    %162 = vmatpush2.msra.mxu0 0.0
    %163 = vmatprep.subr.mxu0 0.0
    %164 = vmatpush2.msra.mxu0 0.0
    %165 = vmatprep.subr.mxu0 0.0
    %166 = vmatpush2.msra.mxu0 0.0
    %167 = vmatprep.mubr.f32.mxu0 0.0
    %v168 = vand.u32 %v93, 4294901760
    %v169 = vsub.f32 %v93, %v168
    %v170 = vand.u32 %v169, 4294901760
    %v171 = vsub.f32 %v169, %v170
    %v172 = vand.u32 %v171, 4294901760
    %173 = vmatmul.mubr.f32.gmra.mxu0 %v172
    %v174 = vpop.f32.mrf.mxu0
    %v175 = vadd.f32 %v74, %v174
    %v176 = vpop.f32.mrf.mxu0
    %v177 = vadd.f32 %v78, %v176
    %178 = vdwg.mxu0
    %179 = vmatprep.subr.mxu0 0.0
    %180 = vmatpush1.msra.mxu0 0.0
    %181 = vmatprep.subr.mxu0 0.0
    %182 = vmatpush1.msra.mxu0 0.0
    %183 = vmatprep.subr.mxu0 0.0
    %184 = vmatpush1.msra.mxu0 0.0
    %185 = vmatprep.subr.mxu0 0.0
    %186 = vmatpush1.msra.mxu0 0.0
    %187 = vmatprep.subr.mxu0 0.0
    %188 = vmatpush1.msra.mxu0 0.0
    %189 = vmatprep.subr.mxu0 0.0
    %190 = vmatpush1.msra.mxu0 0.0
    %191 = vmatprep.subr.mxu0 0.0
    %192 = vmatpush1.msra.mxu0 0.0
    %193 = vmatprep.subr.mxu0 0.0
    %194 = vmatpush1.msra.mxu0 0.0
    %195 = vmatprep.subr.mxu0 0.0
    %196 = vmatpush1.msra.mxu0 0.0
    %197 = vmatprep.subr.mxu0 0.0
    %198 = vmatpush1.msra.mxu0 0.0
    %199 = vmatprep.subr.mxu0 0.0
    %200 = vmatpush1.msra.mxu0 0.0
    %201 = vmatprep.subr.mxu0 0.0
    %202 = vmatpush1.msra.mxu0 0.0
    %v203 = vand.u32 %v66, 4294901760
    %v204 = vsub.f32 %v66, %v203
    %v205 = vand.u32 %v204, 4294901760
    %v206 = vsub.f32 %v204, %v205
    %v207 = vand.u32 %v206, 4294901760
    %208 = vmatprep.subr.mxu0 %v207
    %v209 = vand.u32 %v65, 4294901760
    %v210 = vsub.f32 %v65, %v209
    %v211 = vand.u32 %v210, 4294901760
    %v212 = vsub.f32 %v210, %v211
    %v213 = vand.u32 %v212, 4294901760
    %214 = vmatpush1.msra.mxu0 %v213
    %v215 = vand.u32 %v62, 4294901760
    %v216 = vsub.f32 %v62, %v215
    %v217 = vand.u32 %v216, 4294901760
    %v218 = vsub.f32 %v216, %v217
    %v219 = vand.u32 %v218, 4294901760
    %220 = vmatprep.subr.mxu0 %v219
    %v221 = vand.u32 %v61, 4294901760
    %v222 = vsub.f32 %v61, %v221
    %v223 = vand.u32 %v222, 4294901760
    %v224 = vsub.f32 %v222, %v223
    %v225 = vand.u32 %v224, 4294901760
    %226 = vmatpush1.msra.mxu0 %v225
    %v227 = vand.u32 %v58, 4294901760
    %v228 = vsub.f32 %v58, %v227
    %v229 = vand.u32 %v228, 4294901760
    %v230 = vsub.f32 %v228, %v229
    %v231 = vand.u32 %v230, 4294901760
    %232 = vmatprep.subr.mxu0 %v231
    %v233 = vand.u32 %v57, 4294901760
    %v234 = vsub.f32 %v57, %v233
    %v235 = vand.u32 %v234, 4294901760
    %v236 = vsub.f32 %v234, %v235
    %v237 = vand.u32 %v236, 4294901760
    %238 = vmatpush1.msra.mxu0 %v237
    %v239 = vand.u32 %v54, 4294901760
    %v240 = vsub.f32 %v54, %v239
    %v241 = vand.u32 %v240, 4294901760
    %v242 = vsub.f32 %v240, %v241
    %v243 = vand.u32 %v242, 4294901760
    %244 = vmatprep.subr.mxu0 %v243
    %v245 = vand.u32 %v53, 4294901760
    %v246 = vsub.f32 %v53, %v245
    %v247 = vand.u32 %v246, 4294901760
    %v248 = vsub.f32 %v246, %v247
    %v249 = vand.u32 %v248, 4294901760
    %250 = vmatpush1.msra.mxu0 %v249
    %251 = vmatprep.subr.mxu0 0.0
    %252 = vmatpush2.msra.mxu0 0.0
    %253 = vmatprep.subr.mxu0 0.0
    %254 = vmatpush2.msra.mxu0 0.0
    %255 = vmatprep.subr.mxu0 0.0
    %256 = vmatpush2.msra.mxu0 0.0
    %257 = vmatprep.subr.mxu0 0.0
    %258 = vmatpush2.msra.mxu0 0.0
    %259 = vmatprep.subr.mxu0 0.0
    %260 = vmatpush2.msra.mxu0 0.0
    %261 = vmatprep.subr.mxu0 0.0
    %262 = vmatpush2.msra.mxu0 0.0
    %263 = vmatprep.subr.mxu0 0.0
    %264 = vmatpush2.msra.mxu0 0.0
    %265 = vmatprep.subr.mxu0 0.0
    %266 = vmatpush2.msra.mxu0 0.0
    %267 = vmatprep.subr.mxu0 0.0
    %268 = vmatpush2.msra.mxu0 0.0
    %269 = vmatprep.subr.mxu0 0.0
    %270 = vmatpush2.msra.mxu0 0.0
    %271 = vmatprep.subr.mxu0 0.0
    %272 = vmatpush2.msra.mxu0 0.0
    %273 = vmatprep.subr.mxu0 0.0
    %274 = vmatpush2.msra.mxu0 0.0
    %275 = vmatprep.subr.mxu0 0.0
    %276 = vmatpush2.msra.mxu0 0.0
    %277 = vmatprep.subr.mxu0 0.0
    %278 = vmatpush2.msra.mxu0 0.0
    %279 = vmatprep.subr.mxu0 0.0
    %280 = vmatpush2.msra.mxu0 0.0
    %281 = vmatprep.subr.mxu0 0.0
    %282 = vmatpush2.msra.mxu0 0.0
    %283 = vmatprep.mubr.f32.mxu0 0.0
    %v284 = vand.u32 %v93, 4294901760
    %285 = vmatmul.mubr.f32.gmra.mxu0 %v284
    %v286 = vpop.f32.mrf.mxu0
    %v287 = vadd.f32 %v175, %v286
    %v288 = vpop.f32.mrf.mxu0
    %v289 = vadd.f32 %v177, %v288
    %290 = vdwg.mxu0
    %291 = vmatprep.subr.mxu0 0.0
    %292 = vmatpush1.msra.mxu0 0.0
    %293 = vmatprep.subr.mxu0 0.0
    %294 = vmatpush1.msra.mxu0 0.0
    %295 = vmatprep.subr.mxu0 0.0
    %296 = vmatpush1.msra.mxu0 0.0
    %297 = vmatprep.subr.mxu0 0.0
    %298 = vmatpush1.msra.mxu0 0.0
    %299 = vmatprep.subr.mxu0 0.0
    %300 = vmatpush1.msra.mxu0 0.0
    %301 = vmatprep.subr.mxu0 0.0
    %302 = vmatpush1.msra.mxu0 0.0
    %303 = vmatprep.subr.mxu0 0.0
    %304 = vmatpush1.msra.mxu0 0.0
    %305 = vmatprep.subr.mxu0 0.0
    %306 = vmatpush1.msra.mxu0 0.0
    %307 = vmatprep.subr.mxu0 0.0
    %308 = vmatpush1.msra.mxu0 0.0
    %309 = vmatprep.subr.mxu0 0.0
    %310 = vmatpush1.msra.mxu0 0.0
    %311 = vmatprep.subr.mxu0 0.0
    %312 = vmatpush1.msra.mxu0 0.0
    %313 = vmatprep.subr.mxu0 0.0
    %314 = vmatpush1.msra.mxu0 0.0
    %v315 = vand.u32 %v66, 4294901760
    %v316 = vsub.f32 %v66, %v315
    %317 = vmatprep.subr.mxu0 %v316
    %v318 = vand.u32 %v65, 4294901760
    %v319 = vsub.f32 %v65, %v318
    %320 = vmatpush1.msra.mxu0 %v319
    %v321 = vand.u32 %v62, 4294901760
    %v322 = vsub.f32 %v62, %v321
    %323 = vmatprep.subr.mxu0 %v322
    %v324 = vand.u32 %v61, 4294901760
    %v325 = vsub.f32 %v61, %v324
    %326 = vmatpush1.msra.mxu0 %v325
    %v327 = vand.u32 %v58, 4294901760
    %v328 = vsub.f32 %v58, %v327
    %329 = vmatprep.subr.mxu0 %v328
    %v330 = vand.u32 %v57, 4294901760
    %v331 = vsub.f32 %v57, %v330
    %332 = vmatpush1.msra.mxu0 %v331
    %v333 = vand.u32 %v54, 4294901760
    %v334 = vsub.f32 %v54, %v333
    %335 = vmatprep.subr.mxu0 %v334
    %v336 = vand.u32 %v53, 4294901760
    %v337 = vsub.f32 %v53, %v336
    %338 = vmatpush1.msra.mxu0 %v337
    %339 = vmatprep.subr.mxu0 0.0
    %340 = vmatpush2.msra.mxu0 0.0
    %341 = vmatprep.subr.mxu0 0.0
    %342 = vmatpush2.msra.mxu0 0.0
    %343 = vmatprep.subr.mxu0 0.0
    %344 = vmatpush2.msra.mxu0 0.0
    %345 = vmatprep.subr.mxu0 0.0
    %346 = vmatpush2.msra.mxu0 0.0
    %347 = vmatprep.subr.mxu0 0.0
    %348 = vmatpush2.msra.mxu0 0.0
    %349 = vmatprep.subr.mxu0 0.0
    %350 = vmatpush2.msra.mxu0 0.0
    %351 = vmatprep.subr.mxu0 0.0
    %352 = vmatpush2.msra.mxu0 0.0
    %353 = vmatprep.subr.mxu0 0.0
    %354 = vmatpush2.msra.mxu0 0.0
    %355 = vmatprep.subr.mxu0 0.0
    %356 = vmatpush2.msra.mxu0 0.0
    %357 = vmatprep.subr.mxu0 0.0
    %358 = vmatpush2.msra.mxu0 0.0
    %359 = vmatprep.subr.mxu0 0.0
    %360 = vmatpush2.msra.mxu0 0.0
    %361 = vmatprep.subr.mxu0 0.0
    %362 = vmatpush2.msra.mxu0 0.0
    %363 = vmatprep.subr.mxu0 0.0
    %364 = vmatpush2.msra.mxu0 0.0
    %365 = vmatprep.subr.mxu0 0.0
    %366 = vmatpush2.msra.mxu0 0.0
    %367 = vmatprep.subr.mxu0 0.0
    %368 = vmatpush2.msra.mxu0 0.0
    %369 = vmatprep.subr.mxu0 0.0
    %370 = vmatpush2.msra.mxu0 0.0
    %371 = vmatprep.mubr.f32.mxu0 0.0
    %v372 = vand.u32 %v93, 4294901760
    %v373 = vsub.f32 %v93, %v372
    %374 = vmatmul.mubr.f32.gmra.mxu0 %v373
    %v375 = vpop.f32.mrf.mxu0
    %v376 = vadd.f32 %v287, %v375
    %v377 = vpop.f32.mrf.mxu0
    %v378 = vadd.f32 %v289, %v377
    %379 = vdwg.mxu0
    %380 = vmatprep.subr.mxu0 0.0
    %381 = vmatpush1.msra.mxu0 0.0
    %382 = vmatprep.subr.mxu0 0.0
    %383 = vmatpush1.msra.mxu0 0.0
    %384 = vmatprep.subr.mxu0 0.0
    %385 = vmatpush1.msra.mxu0 0.0
    %386 = vmatprep.subr.mxu0 0.0
    %387 = vmatpush1.msra.mxu0 0.0
    %388 = vmatprep.subr.mxu0 0.0
    %389 = vmatpush1.msra.mxu0 0.0
    %390 = vmatprep.subr.mxu0 0.0
    %391 = vmatpush1.msra.mxu0 0.0
    %392 = vmatprep.subr.mxu0 0.0
    %393 = vmatpush1.msra.mxu0 0.0
    %394 = vmatprep.subr.mxu0 0.0
    %395 = vmatpush1.msra.mxu0 0.0
    %396 = vmatprep.subr.mxu0 0.0
    %397 = vmatpush1.msra.mxu0 0.0
    %398 = vmatprep.subr.mxu0 0.0
    %399 = vmatpush1.msra.mxu0 0.0
    %400 = vmatprep.subr.mxu0 0.0
    %401 = vmatpush1.msra.mxu0 0.0
    %402 = vmatprep.subr.mxu0 0.0
    %403 = vmatpush1.msra.mxu0 0.0
    %v404 = vand.u32 %v66, 4294901760
    %405 = vmatprep.subr.mxu0 %v404
    %v406 = vand.u32 %v65, 4294901760
    %407 = vmatpush1.msra.mxu0 %v406
    %v408 = vand.u32 %v62, 4294901760
    %409 = vmatprep.subr.mxu0 %v408
    %v410 = vand.u32 %v61, 4294901760
    %411 = vmatpush1.msra.mxu0 %v410
    %v412 = vand.u32 %v58, 4294901760
    %413 = vmatprep.subr.mxu0 %v412
    %v414 = vand.u32 %v57, 4294901760
    %415 = vmatpush1.msra.mxu0 %v414
    %v416 = vand.u32 %v54, 4294901760
    %417 = vmatprep.subr.mxu0 %v416
    %v418 = vand.u32 %v53, 4294901760
    %419 = vmatpush1.msra.mxu0 %v418
    %420 = vmatprep.subr.mxu0 0.0
    %421 = vmatpush2.msra.mxu0 0.0
    %422 = vmatprep.subr.mxu0 0.0
    %423 = vmatpush2.msra.mxu0 0.0
    %424 = vmatprep.subr.mxu0 0.0
    %425 = vmatpush2.msra.mxu0 0.0
    %426 = vmatprep.subr.mxu0 0.0
    %427 = vmatpush2.msra.mxu0 0.0
    %428 = vmatprep.subr.mxu0 0.0
    %429 = vmatpush2.msra.mxu0 0.0
    %430 = vmatprep.subr.mxu0 0.0
    %431 = vmatpush2.msra.mxu0 0.0
    %432 = vmatprep.subr.mxu0 0.0
    %433 = vmatpush2.msra.mxu0 0.0
    %434 = vmatprep.subr.mxu0 0.0
    %435 = vmatpush2.msra.mxu0 0.0
    %436 = vmatprep.subr.mxu0 0.0
    %437 = vmatpush2.msra.mxu0 0.0
    %438 = vmatprep.subr.mxu0 0.0
    %439 = vmatpush2.msra.mxu0 0.0
    %440 = vmatprep.subr.mxu0 0.0
    %441 = vmatpush2.msra.mxu0 0.0
    %442 = vmatprep.subr.mxu0 0.0
    %443 = vmatpush2.msra.mxu0 0.0
    %444 = vmatprep.subr.mxu0 0.0
    %445 = vmatpush2.msra.mxu0 0.0
    %446 = vmatprep.subr.mxu0 0.0
    %447 = vmatpush2.msra.mxu0 0.0
    %448 = vmatprep.subr.mxu0 0.0
    %449 = vmatpush2.msra.mxu0 0.0
    %450 = vmatprep.subr.mxu0 0.0
    %451 = vmatpush2.msra.mxu0 0.0
    %452 = vmatprep.mubr.f32.mxu0 0.0
    %v453 = vand.u32 %v93, 4294901760
    %v454 = vsub.f32 %v93, %v453
    %v455 = vand.u32 %v454, 4294901760
    %456 = vmatmul.mubr.f32.gmra.mxu0 %v455
    %v457 = vpop.f32.mrf.mxu0
    %v458 = vadd.f32 %v376, %v457
    %v459 = vpop.f32.mrf.mxu0
    %v460 = vadd.f32 %v378, %v459
    %461 = vdwg.mxu0
    %462 = vmatprep.subr.mxu0 0.0
    %463 = vmatpush1.msra.mxu0 0.0
    %464 = vmatprep.subr.mxu0 0.0
    %465 = vmatpush1.msra.mxu0 0.0
    %466 = vmatprep.subr.mxu0 0.0
    %467 = vmatpush1.msra.mxu0 0.0
    %468 = vmatprep.subr.mxu0 0.0
    %469 = vmatpush1.msra.mxu0 0.0
    %470 = vmatprep.subr.mxu0 0.0
    %471 = vmatpush1.msra.mxu0 0.0
    %472 = vmatprep.subr.mxu0 0.0
    %473 = vmatpush1.msra.mxu0 0.0
    %474 = vmatprep.subr.mxu0 0.0
    %475 = vmatpush1.msra.mxu0 0.0
    %476 = vmatprep.subr.mxu0 0.0
    %477 = vmatpush1.msra.mxu0 0.0
    %478 = vmatprep.subr.mxu0 0.0
    %479 = vmatpush1.msra.mxu0 0.0
    %480 = vmatprep.subr.mxu0 0.0
    %481 = vmatpush1.msra.mxu0 0.0
    %482 = vmatprep.subr.mxu0 0.0
    %483 = vmatpush1.msra.mxu0 0.0
    %484 = vmatprep.subr.mxu0 0.0
    %485 = vmatpush1.msra.mxu0 0.0
    %v486 = vand.u32 %v66, 4294901760
    %v487 = vsub.f32 %v66, %v486
    %v488 = vand.u32 %v487, 4294901760
    %489 = vmatprep.subr.mxu0 %v488
    %v490 = vand.u32 %v65, 4294901760
    %v491 = vsub.f32 %v65, %v490
    %v492 = vand.u32 %v491, 4294901760
    %493 = vmatpush1.msra.mxu0 %v492
    %v494 = vand.u32 %v62, 4294901760
    %v495 = vsub.f32 %v62, %v494
    %v496 = vand.u32 %v495, 4294901760
    %497 = vmatprep.subr.mxu0 %v496
    %v498 = vand.u32 %v61, 4294901760
    %v499 = vsub.f32 %v61, %v498
    %v500 = vand.u32 %v499, 4294901760
    %501 = vmatpush1.msra.mxu0 %v500
    %v502 = vand.u32 %v58, 4294901760
    %v503 = vsub.f32 %v58, %v502
    %v504 = vand.u32 %v503, 4294901760
    %505 = vmatprep.subr.mxu0 %v504
    %v506 = vand.u32 %v57, 4294901760
    %v507 = vsub.f32 %v57, %v506
    %v508 = vand.u32 %v507, 4294901760
    %509 = vmatpush1.msra.mxu0 %v508
    %v510 = vand.u32 %v54, 4294901760
    %v511 = vsub.f32 %v54, %v510
    %v512 = vand.u32 %v511, 4294901760
    %513 = vmatprep.subr.mxu0 %v512
    %v514 = vand.u32 %v53, 4294901760
    %v515 = vsub.f32 %v53, %v514
    %v516 = vand.u32 %v515, 4294901760
    %517 = vmatpush1.msra.mxu0 %v516
    %518 = vmatprep.subr.mxu0 0.0
    %519 = vmatpush2.msra.mxu0 0.0
    %520 = vmatprep.subr.mxu0 0.0
    %521 = vmatpush2.msra.mxu0 0.0
    %522 = vmatprep.subr.mxu0 0.0
    %523 = vmatpush2.msra.mxu0 0.0
    %524 = vmatprep.subr.mxu0 0.0
    %525 = vmatpush2.msra.mxu0 0.0
    %526 = vmatprep.subr.mxu0 0.0
    %527 = vmatpush2.msra.mxu0 0.0
    %528 = vmatprep.subr.mxu0 0.0
    %529 = vmatpush2.msra.mxu0 0.0
    %530 = vmatprep.subr.mxu0 0.0
    %531 = vmatpush2.msra.mxu0 0.0
    %532 = vmatprep.subr.mxu0 0.0
    %533 = vmatpush2.msra.mxu0 0.0
    %534 = vmatprep.subr.mxu0 0.0
    %535 = vmatpush2.msra.mxu0 0.0
    %536 = vmatprep.subr.mxu0 0.0
    %537 = vmatpush2.msra.mxu0 0.0
    %538 = vmatprep.subr.mxu0 0.0
    %539 = vmatpush2.msra.mxu0 0.0
    %540 = vmatprep.subr.mxu0 0.0
    %541 = vmatpush2.msra.mxu0 0.0
    %542 = vmatprep.subr.mxu0 0.0
    %543 = vmatpush2.msra.mxu0 0.0
    %544 = vmatprep.subr.mxu0 0.0
    %545 = vmatpush2.msra.mxu0 0.0
    %546 = vmatprep.subr.mxu0 0.0
    %547 = vmatpush2.msra.mxu0 0.0
    %548 = vmatprep.subr.mxu0 0.0
    %549 = vmatpush2.msra.mxu0 0.0
    %550 = vmatprep.mubr.f32.mxu0 0.0
    %v551 = vand.u32 %v93, 4294901760
    %552 = vmatmul.mubr.f32.gmra.mxu0 %v551
    %v553 = vpop.f32.mrf.mxu0
    %v554 = vadd.f32 %v458, %v553
    %v555 = vpop.f32.mrf.mxu0
    %v556 = vadd.f32 %v460, %v555
    %557 = vdwg.mxu0
    %558 = vmatprep.subr.mxu0 0.0
    %559 = vmatpush1.msra.mxu0 0.0
    %560 = vmatprep.subr.mxu0 0.0
    %561 = vmatpush1.msra.mxu0 0.0
    %562 = vmatprep.subr.mxu0 0.0
    %563 = vmatpush1.msra.mxu0 0.0
    %564 = vmatprep.subr.mxu0 0.0
    %565 = vmatpush1.msra.mxu0 0.0
    %566 = vmatprep.subr.mxu0 0.0
    %567 = vmatpush1.msra.mxu0 0.0
    %568 = vmatprep.subr.mxu0 0.0
    %569 = vmatpush1.msra.mxu0 0.0
    %570 = vmatprep.subr.mxu0 0.0
    %571 = vmatpush1.msra.mxu0 0.0
    %572 = vmatprep.subr.mxu0 0.0
    %573 = vmatpush1.msra.mxu0 0.0
    %574 = vmatprep.subr.mxu0 0.0
    %575 = vmatpush1.msra.mxu0 0.0
    %576 = vmatprep.subr.mxu0 0.0
    %577 = vmatpush1.msra.mxu0 0.0
    %578 = vmatprep.subr.mxu0 0.0
    %579 = vmatpush1.msra.mxu0 0.0
    %580 = vmatprep.subr.mxu0 0.0
    %581 = vmatpush1.msra.mxu0 0.0
    %v582 = vand.u32 %v66, 4294901760
    %583 = vmatprep.subr.mxu0 %v582
    %v584 = vand.u32 %v65, 4294901760
    %585 = vmatpush1.msra.mxu0 %v584
    %v586 = vand.u32 %v62, 4294901760
    %587 = vmatprep.subr.mxu0 %v586
    %v588 = vand.u32 %v61, 4294901760
    %589 = vmatpush1.msra.mxu0 %v588
    %v590 = vand.u32 %v58, 4294901760
    %591 = vmatprep.subr.mxu0 %v590
    %v592 = vand.u32 %v57, 4294901760
    %593 = vmatpush1.msra.mxu0 %v592
    %v594 = vand.u32 %v54, 4294901760
    %595 = vmatprep.subr.mxu0 %v594
    %v596 = vand.u32 %v53, 4294901760
    %597 = vmatpush1.msra.mxu0 %v596
    %598 = vmatprep.subr.mxu0 0.0
    %599 = vmatpush2.msra.mxu0 0.0
    %600 = vmatprep.subr.mxu0 0.0
    %601 = vmatpush2.msra.mxu0 0.0
    %602 = vmatprep.subr.mxu0 0.0
    %603 = vmatpush2.msra.mxu0 0.0
    %604 = vmatprep.subr.mxu0 0.0
    %605 = vmatpush2.msra.mxu0 0.0
    %606 = vmatprep.subr.mxu0 0.0
    %607 = vmatpush2.msra.mxu0 0.0
    %608 = vmatprep.subr.mxu0 0.0
    %609 = vmatpush2.msra.mxu0 0.0
    %610 = vmatprep.subr.mxu0 0.0
    %611 = vmatpush2.msra.mxu0 0.0
    %612 = vmatprep.subr.mxu0 0.0
    %613 = vmatpush2.msra.mxu0 0.0
    %614 = vmatprep.subr.mxu0 0.0
    %615 = vmatpush2.msra.mxu0 0.0
    %616 = vmatprep.subr.mxu0 0.0
    %617 = vmatpush2.msra.mxu0 0.0
    %618 = vmatprep.subr.mxu0 0.0
    %619 = vmatpush2.msra.mxu0 0.0
    %620 = vmatprep.subr.mxu0 0.0
    %621 = vmatpush2.msra.mxu0 0.0
    %622 = vmatprep.subr.mxu0 0.0
    %623 = vmatpush2.msra.mxu0 0.0
    %624 = vmatprep.subr.mxu0 0.0
    %625 = vmatpush2.msra.mxu0 0.0
    %626 = vmatprep.subr.mxu0 0.0
    %627 = vmatpush2.msra.mxu0 0.0
    %628 = vmatprep.subr.mxu0 0.0
    %629 = vmatpush2.msra.mxu0 0.0
    %630 = vmatprep.mubr.f32.mxu0 0.0
    %v631 = vand.u32 %v93, 4294901760
    %632 = vmatmul.mubr.f32.gmra.mxu0 %v631
    %v633 = vpop.f32.mrf.mxu0
    %v634 = vadd.f32 %v554, %v633
    %v635 = vpop.f32.mrf.mxu0
    %v636 = vadd.f32 %v556, %v635
    %637 = vdwg.mxu0
    %638 = vmatprep.subr.mxu0 0.0
    %639 = vmatpush1.msra.mxu0 0.0
    %640 = vmatprep.subr.mxu0 0.0
    %641 = vmatpush1.msra.mxu0 0.0
    %642 = vmatprep.subr.mxu0 0.0
    %643 = vmatpush1.msra.mxu0 0.0
    %644 = vmatprep.subr.mxu0 0.0
    %645 = vmatpush1.msra.mxu0 0.0
    %646 = vmatprep.subr.mxu0 0.0
    %647 = vmatpush1.msra.mxu0 0.0
    %648 = vmatprep.subr.mxu0 0.0
    %649 = vmatpush1.msra.mxu0 0.0
    %650 = vmatprep.subr.mxu0 0.0
    %651 = vmatpush1.msra.mxu0 0.0
    %652 = vmatprep.subr.mxu0 0.0
    %653 = vmatpush1.msra.mxu0 0.0
    %654 = vmatprep.subr.mxu0 0.0
    %655 = vmatpush1.msra.mxu0 0.0
    %656 = vmatprep.subr.mxu0 0.0
    %657 = vmatpush1.msra.mxu0 0.0
    %658 = vmatprep.subr.mxu0 0.0
    %659 = vmatpush1.msra.mxu0 0.0
    %660 = vmatprep.subr.mxu0 0.0
    %661 = vmatpush1.msra.mxu0 0.0
    %v662 = vand.u32 %v68, 4294901760
    %663 = vmatprep.subr.mxu0 %v662
    %v664 = vand.u32 %v67, 4294901760
    %665 = vmatpush1.msra.mxu0 %v664
    %v666 = vand.u32 %v64, 4294901760
    %667 = vmatprep.subr.mxu0 %v666
    %v668 = vand.u32 %v63, 4294901760
    %669 = vmatpush1.msra.mxu0 %v668
    %v670 = vand.u32 %v60, 4294901760
    %671 = vmatprep.subr.mxu0 %v670
    %v672 = vand.u32 %v59, 4294901760
    %673 = vmatpush1.msra.mxu0 %v672
    %v674 = vand.u32 %v56, 4294901760
    %675 = vmatprep.subr.mxu0 %v674
    %v676 = vand.u32 %v55, 4294901760
    %677 = vmatpush1.msra.mxu0 %v676
    %678 = vmatprep.subr.mxu0 0.0
    %679 = vmatpush2.msra.mxu0 0.0
    %680 = vmatprep.subr.mxu0 0.0
    %681 = vmatpush2.msra.mxu0 0.0
    %682 = vmatprep.subr.mxu0 0.0
    %683 = vmatpush2.msra.mxu0 0.0
    %684 = vmatprep.subr.mxu0 0.0
    %685 = vmatpush2.msra.mxu0 0.0
    %686 = vmatprep.subr.mxu0 0.0
    %687 = vmatpush2.msra.mxu0 0.0
    %688 = vmatprep.subr.mxu0 0.0
    %689 = vmatpush2.msra.mxu0 0.0
    %690 = vmatprep.subr.mxu0 0.0
    %691 = vmatpush2.msra.mxu0 0.0
    %692 = vmatprep.subr.mxu0 0.0
    %693 = vmatpush2.msra.mxu0 0.0
    %694 = vmatprep.subr.mxu0 0.0
    %695 = vmatpush2.msra.mxu0 0.0
    %696 = vmatprep.subr.mxu0 0.0
    %697 = vmatpush2.msra.mxu0 0.0
    %698 = vmatprep.subr.mxu0 0.0
    %699 = vmatpush2.msra.mxu0 0.0
    %700 = vmatprep.subr.mxu0 0.0
    %701 = vmatpush2.msra.mxu0 0.0
    %702 = vmatprep.subr.mxu0 0.0
    %703 = vmatpush2.msra.mxu0 0.0
    %704 = vmatprep.subr.mxu0 0.0
    %705 = vmatpush2.msra.mxu0 0.0
    %706 = vmatprep.subr.mxu0 0.0
    %707 = vmatpush2.msra.mxu0 0.0
    %708 = vmatprep.subr.mxu0 0.0
    %709 = vmatpush2.msra.mxu0 0.0
    %710 = vmatprep.mubr.f32.mxu0 0.0
    %v711 = vand.u32 %v93, 4294901760
    %v712 = vsub.f32 %v93, %v711
    %v713 = vand.u32 %v712, 4294901760
    %v714 = vsub.f32 %v712, %v713
    %v715 = vand.u32 %v714, 4294901760
    %716 = vmatmul.mubr.f32.gmra.mxu0 %v715
    %v717 = vpop.f32.mrf.mxu0
    %v718 = vadd.f32 %v82, %v717
    %v719 = vpop.f32.mrf.mxu0
    %v720 = vadd.f32 %v86, %v719
    %721 = vdwg.mxu0
    %722 = vmatprep.subr.mxu0 0.0
    %723 = vmatpush1.msra.mxu0 0.0
    %724 = vmatprep.subr.mxu0 0.0
    %725 = vmatpush1.msra.mxu0 0.0
    %726 = vmatprep.subr.mxu0 0.0
    %727 = vmatpush1.msra.mxu0 0.0
    %728 = vmatprep.subr.mxu0 0.0
    %729 = vmatpush1.msra.mxu0 0.0
    %730 = vmatprep.subr.mxu0 0.0
    %731 = vmatpush1.msra.mxu0 0.0
    %732 = vmatprep.subr.mxu0 0.0
    %733 = vmatpush1.msra.mxu0 0.0
    %734 = vmatprep.subr.mxu0 0.0
    %735 = vmatpush1.msra.mxu0 0.0
    %736 = vmatprep.subr.mxu0 0.0
    %737 = vmatpush1.msra.mxu0 0.0
    %738 = vmatprep.subr.mxu0 0.0
    %739 = vmatpush1.msra.mxu0 0.0
    %740 = vmatprep.subr.mxu0 0.0
    %741 = vmatpush1.msra.mxu0 0.0
    %742 = vmatprep.subr.mxu0 0.0
    %743 = vmatpush1.msra.mxu0 0.0
    %744 = vmatprep.subr.mxu0 0.0
    %745 = vmatpush1.msra.mxu0 0.0
    %v746 = vand.u32 %v68, 4294901760
    %v747 = vsub.f32 %v68, %v746
    %v748 = vand.u32 %v747, 4294901760
    %v749 = vsub.f32 %v747, %v748
    %v750 = vand.u32 %v749, 4294901760
    %751 = vmatprep.subr.mxu0 %v750
    %v752 = vand.u32 %v67, 4294901760
    %v753 = vsub.f32 %v67, %v752
    %v754 = vand.u32 %v753, 4294901760
    %v755 = vsub.f32 %v753, %v754
    %v756 = vand.u32 %v755, 4294901760
    %757 = vmatpush1.msra.mxu0 %v756
    %v758 = vand.u32 %v64, 4294901760
    %v759 = vsub.f32 %v64, %v758
    %v760 = vand.u32 %v759, 4294901760
    %v761 = vsub.f32 %v759, %v760
    %v762 = vand.u32 %v761, 4294901760
    %763 = vmatprep.subr.mxu0 %v762
    %v764 = vand.u32 %v63, 4294901760
    %v765 = vsub.f32 %v63, %v764
    %v766 = vand.u32 %v765, 4294901760
    %v767 = vsub.f32 %v765, %v766
    %v768 = vand.u32 %v767, 4294901760
    %769 = vmatpush1.msra.mxu0 %v768
    %v770 = vand.u32 %v60, 4294901760
    %v771 = vsub.f32 %v60, %v770
    %v772 = vand.u32 %v771, 4294901760
    %v773 = vsub.f32 %v771, %v772
    %v774 = vand.u32 %v773, 4294901760
    %775 = vmatprep.subr.mxu0 %v774
    %v776 = vand.u32 %v59, 4294901760
    %v777 = vsub.f32 %v59, %v776
    %v778 = vand.u32 %v777, 4294901760
    %v779 = vsub.f32 %v777, %v778
    %v780 = vand.u32 %v779, 4294901760
    %781 = vmatpush1.msra.mxu0 %v780
    %v782 = vand.u32 %v56, 4294901760
    %v783 = vsub.f32 %v56, %v782
    %v784 = vand.u32 %v783, 4294901760
    %v785 = vsub.f32 %v783, %v784
    %v786 = vand.u32 %v785, 4294901760
    %787 = vmatprep.subr.mxu0 %v786
    %v788 = vand.u32 %v55, 4294901760
    %v789 = vsub.f32 %v55, %v788
    %v790 = vand.u32 %v789, 4294901760
    %v791 = vsub.f32 %v789, %v790
    %v792 = vand.u32 %v791, 4294901760
    %793 = vmatpush1.msra.mxu0 %v792
    %794 = vmatprep.subr.mxu0 0.0
    %795 = vmatpush2.msra.mxu0 0.0
    %796 = vmatprep.subr.mxu0 0.0
    %797 = vmatpush2.msra.mxu0 0.0
    %798 = vmatprep.subr.mxu0 0.0
    %799 = vmatpush2.msra.mxu0 0.0
    %800 = vmatprep.subr.mxu0 0.0
    %801 = vmatpush2.msra.mxu0 0.0
    %802 = vmatprep.subr.mxu0 0.0
    %803 = vmatpush2.msra.mxu0 0.0
    %804 = vmatprep.subr.mxu0 0.0
    %805 = vmatpush2.msra.mxu0 0.0
    %806 = vmatprep.subr.mxu0 0.0
    %807 = vmatpush2.msra.mxu0 0.0
    %808 = vmatprep.subr.mxu0 0.0
    %809 = vmatpush2.msra.mxu0 0.0
    %810 = vmatprep.subr.mxu0 0.0
    %811 = vmatpush2.msra.mxu0 0.0
    %812 = vmatprep.subr.mxu0 0.0
    %813 = vmatpush2.msra.mxu0 0.0
    %814 = vmatprep.subr.mxu0 0.0
    %815 = vmatpush2.msra.mxu0 0.0
    %816 = vmatprep.subr.mxu0 0.0
    %817 = vmatpush2.msra.mxu0 0.0
    %818 = vmatprep.subr.mxu0 0.0
    %819 = vmatpush2.msra.mxu0 0.0
    %820 = vmatprep.subr.mxu0 0.0
    %821 = vmatpush2.msra.mxu0 0.0
    %822 = vmatprep.subr.mxu0 0.0
    %823 = vmatpush2.msra.mxu0 0.0
    %824 = vmatprep.subr.mxu0 0.0
    %825 = vmatpush2.msra.mxu0 0.0
    %826 = vmatprep.mubr.f32.mxu0 0.0
    %v827 = vand.u32 %v93, 4294901760
    %828 = vmatmul.mubr.f32.gmra.mxu0 %v827
    %v829 = vpop.f32.mrf.mxu0
    %v830 = vadd.f32 %v718, %v829
    %v831 = vpop.f32.mrf.mxu0
    %v832 = vadd.f32 %v720, %v831
    %833 = vdwg.mxu0
    %834 = vmatprep.subr.mxu0 0.0
    %835 = vmatpush1.msra.mxu0 0.0
    %836 = vmatprep.subr.mxu0 0.0
    %837 = vmatpush1.msra.mxu0 0.0
    %838 = vmatprep.subr.mxu0 0.0
    %839 = vmatpush1.msra.mxu0 0.0
    %840 = vmatprep.subr.mxu0 0.0
    %841 = vmatpush1.msra.mxu0 0.0
    %842 = vmatprep.subr.mxu0 0.0
    %843 = vmatpush1.msra.mxu0 0.0
    %844 = vmatprep.subr.mxu0 0.0
    %845 = vmatpush1.msra.mxu0 0.0
    %846 = vmatprep.subr.mxu0 0.0
    %847 = vmatpush1.msra.mxu0 0.0
    %848 = vmatprep.subr.mxu0 0.0
    %849 = vmatpush1.msra.mxu0 0.0
    %850 = vmatprep.subr.mxu0 0.0
    %851 = vmatpush1.msra.mxu0 0.0
    %852 = vmatprep.subr.mxu0 0.0
    %853 = vmatpush1.msra.mxu0 0.0
    %854 = vmatprep.subr.mxu0 0.0
    %855 = vmatpush1.msra.mxu0 0.0
    %856 = vmatprep.subr.mxu0 0.0
    %857 = vmatpush1.msra.mxu0 0.0
    %v858 = vand.u32 %v68, 4294901760
    %v859 = vsub.f32 %v68, %v858
    %860 = vmatprep.subr.mxu0 %v859
    %v861 = vand.u32 %v67, 4294901760
    %v862 = vsub.f32 %v67, %v861
    %863 = vmatpush1.msra.mxu0 %v862
    %v864 = vand.u32 %v64, 4294901760
    %v865 = vsub.f32 %v64, %v864
    %866 = vmatprep.subr.mxu0 %v865
    %v867 = vand.u32 %v63, 4294901760
    %v868 = vsub.f32 %v63, %v867
    %869 = vmatpush1.msra.mxu0 %v868
    %v870 = vand.u32 %v60, 4294901760
    %v871 = vsub.f32 %v60, %v870
    %872 = vmatprep.subr.mxu0 %v871
    %v873 = vand.u32 %v59, 4294901760
    %v874 = vsub.f32 %v59, %v873
    %875 = vmatpush1.msra.mxu0 %v874
    %v876 = vand.u32 %v56, 4294901760
    %v877 = vsub.f32 %v56, %v876
    %878 = vmatprep.subr.mxu0 %v877
    %v879 = vand.u32 %v55, 4294901760
    %v880 = vsub.f32 %v55, %v879
    %881 = vmatpush1.msra.mxu0 %v880
    %882 = vmatprep.subr.mxu0 0.0
    %883 = vmatpush2.msra.mxu0 0.0
    %884 = vmatprep.subr.mxu0 0.0
    %885 = vmatpush2.msra.mxu0 0.0
    %886 = vmatprep.subr.mxu0 0.0
    %887 = vmatpush2.msra.mxu0 0.0
    %888 = vmatprep.subr.mxu0 0.0
    %889 = vmatpush2.msra.mxu0 0.0
    %890 = vmatprep.subr.mxu0 0.0
    %891 = vmatpush2.msra.mxu0 0.0
    %892 = vmatprep.subr.mxu0 0.0
    %893 = vmatpush2.msra.mxu0 0.0
    %894 = vmatprep.subr.mxu0 0.0
    %895 = vmatpush2.msra.mxu0 0.0
    %896 = vmatprep.subr.mxu0 0.0
    %897 = vmatpush2.msra.mxu0 0.0
    %898 = vmatprep.subr.mxu0 0.0
    %899 = vmatpush2.msra.mxu0 0.0
    %900 = vmatprep.subr.mxu0 0.0
    %901 = vmatpush2.msra.mxu0 0.0
    %902 = vmatprep.subr.mxu0 0.0
    %903 = vmatpush2.msra.mxu0 0.0
    %904 = vmatprep.subr.mxu0 0.0
    %905 = vmatpush2.msra.mxu0 0.0
    %906 = vmatprep.subr.mxu0 0.0
    %907 = vmatpush2.msra.mxu0 0.0
    %908 = vmatprep.subr.mxu0 0.0
    %909 = vmatpush2.msra.mxu0 0.0
    %910 = vmatprep.subr.mxu0 0.0
    %911 = vmatpush2.msra.mxu0 0.0
    %912 = vmatprep.subr.mxu0 0.0
    %913 = vmatpush2.msra.mxu0 0.0
    %914 = vmatprep.mubr.f32.mxu0 0.0
    %v915 = vand.u32 %v93, 4294901760
    %v916 = vsub.f32 %v93, %v915
    %917 = vmatmul.mubr.f32.gmra.mxu0 %v916
    %v918 = vpop.f32.mrf.mxu0
    %v919 = vadd.f32 %v830, %v918
    %v920 = vpop.f32.mrf.mxu0
    %v921 = vadd.f32 %v832, %v920
    %922 = vdwg.mxu0
    %923 = vmatprep.subr.mxu0 0.0
    %924 = vmatpush1.msra.mxu0 0.0
    %925 = vmatprep.subr.mxu0 0.0
    %926 = vmatpush1.msra.mxu0 0.0
    %927 = vmatprep.subr.mxu0 0.0
    %928 = vmatpush1.msra.mxu0 0.0
    %929 = vmatprep.subr.mxu0 0.0
    %930 = vmatpush1.msra.mxu0 0.0
    %931 = vmatprep.subr.mxu0 0.0
    %932 = vmatpush1.msra.mxu0 0.0
    %933 = vmatprep.subr.mxu0 0.0
    %934 = vmatpush1.msra.mxu0 0.0
    %935 = vmatprep.subr.mxu0 0.0
    %936 = vmatpush1.msra.mxu0 0.0
    %937 = vmatprep.subr.mxu0 0.0
    %938 = vmatpush1.msra.mxu0 0.0
    %939 = vmatprep.subr.mxu0 0.0
    %940 = vmatpush1.msra.mxu0 0.0
    %941 = vmatprep.subr.mxu0 0.0
    %942 = vmatpush1.msra.mxu0 0.0
    %943 = vmatprep.subr.mxu0 0.0
    %944 = vmatpush1.msra.mxu0 0.0
    %945 = vmatprep.subr.mxu0 0.0
    %946 = vmatpush1.msra.mxu0 0.0
    %v947 = vand.u32 %v68, 4294901760
    %948 = vmatprep.subr.mxu0 %v947
    %v949 = vand.u32 %v67, 4294901760
    %950 = vmatpush1.msra.mxu0 %v949
    %v951 = vand.u32 %v64, 4294901760
    %952 = vmatprep.subr.mxu0 %v951
    %v953 = vand.u32 %v63, 4294901760
    %954 = vmatpush1.msra.mxu0 %v953
    %v955 = vand.u32 %v60, 4294901760
    %956 = vmatprep.subr.mxu0 %v955
    %v957 = vand.u32 %v59, 4294901760
    %958 = vmatpush1.msra.mxu0 %v957
    %v959 = vand.u32 %v56, 4294901760
    %960 = vmatprep.subr.mxu0 %v959
    %v961 = vand.u32 %v55, 4294901760
    %962 = vmatpush1.msra.mxu0 %v961
    %963 = vmatprep.subr.mxu0 0.0
    %964 = vmatpush2.msra.mxu0 0.0
    %965 = vmatprep.subr.mxu0 0.0
    %966 = vmatpush2.msra.mxu0 0.0
    %967 = vmatprep.subr.mxu0 0.0
    %968 = vmatpush2.msra.mxu0 0.0
    %969 = vmatprep.subr.mxu0 0.0
    %970 = vmatpush2.msra.mxu0 0.0
    %971 = vmatprep.subr.mxu0 0.0
    %972 = vmatpush2.msra.mxu0 0.0
    %973 = vmatprep.subr.mxu0 0.0
    %974 = vmatpush2.msra.mxu0 0.0
    %975 = vmatprep.subr.mxu0 0.0
    %976 = vmatpush2.msra.mxu0 0.0
    %977 = vmatprep.subr.mxu0 0.0
    %978 = vmatpush2.msra.mxu0 0.0
    %979 = vmatprep.subr.mxu0 0.0
    %980 = vmatpush2.msra.mxu0 0.0
    %981 = vmatprep.subr.mxu0 0.0
    %982 = vmatpush2.msra.mxu0 0.0
    %983 = vmatprep.subr.mxu0 0.0
    %984 = vmatpush2.msra.mxu0 0.0
    %985 = vmatprep.subr.mxu0 0.0
    %986 = vmatpush2.msra.mxu0 0.0
    %987 = vmatprep.subr.mxu0 0.0
    %988 = vmatpush2.msra.mxu0 0.0
    %989 = vmatprep.subr.mxu0 0.0
    %990 = vmatpush2.msra.mxu0 0.0
    %991 = vmatprep.subr.mxu0 0.0
    %992 = vmatpush2.msra.mxu0 0.0
    %993 = vmatprep.subr.mxu0 0.0
    %994 = vmatpush2.msra.mxu0 0.0
    %995 = vmatprep.mubr.f32.mxu0 0.0
    %v996 = vand.u32 %v93, 4294901760
    %v997 = vsub.f32 %v93, %v996
    %v998 = vand.u32 %v997, 4294901760
    %999 = vmatmul.mubr.f32.gmra.mxu0 %v998
    %v1000 = vpop.f32.mrf.mxu0
    %v1001 = vadd.f32 %v919, %v1000
    %v1002 = vpop.f32.mrf.mxu0
    %v1003 = vadd.f32 %v921, %v1002
    %1004 = vdwg.mxu0
    %1005 = vmatprep.subr.mxu0 0.0
    %1006 = vmatpush1.msra.mxu0 0.0
    %1007 = vmatprep.subr.mxu0 0.0
    %1008 = vmatpush1.msra.mxu0 0.0
    %1009 = vmatprep.subr.mxu0 0.0
    %1010 = vmatpush1.msra.mxu0 0.0
    %1011 = vmatprep.subr.mxu0 0.0
    %1012 = vmatpush1.msra.mxu0 0.0
    %1013 = vmatprep.subr.mxu0 0.0
    %1014 = vmatpush1.msra.mxu0 0.0
    %1015 = vmatprep.subr.mxu0 0.0
    %1016 = vmatpush1.msra.mxu0 0.0
    %1017 = vmatprep.subr.mxu0 0.0
    %1018 = vmatpush1.msra.mxu0 0.0
    %1019 = vmatprep.subr.mxu0 0.0
    %1020 = vmatpush1.msra.mxu0 0.0
    %1021 = vmatprep.subr.mxu0 0.0
    %1022 = vmatpush1.msra.mxu0 0.0
    %1023 = vmatprep.subr.mxu0 0.0
    %1024 = vmatpush1.msra.mxu0 0.0
    %1025 = vmatprep.subr.mxu0 0.0
    %1026 = vmatpush1.msra.mxu0 0.0
    %1027 = vmatprep.subr.mxu0 0.0
    %1028 = vmatpush1.msra.mxu0 0.0
    %v1029 = vand.u32 %v68, 4294901760
    %v1030 = vsub.f32 %v68, %v1029
    %v1031 = vand.u32 %v1030, 4294901760
    %1032 = vmatprep.subr.mxu0 %v1031
    %v1033 = vand.u32 %v67, 4294901760
    %v1034 = vsub.f32 %v67, %v1033
    %v1035 = vand.u32 %v1034, 4294901760
    %1036 = vmatpush1.msra.mxu0 %v1035
    %v1037 = vand.u32 %v64, 4294901760
    %v1038 = vsub.f32 %v64, %v1037
    %v1039 = vand.u32 %v1038, 4294901760
    %1040 = vmatprep.subr.mxu0 %v1039
    %v1041 = vand.u32 %v63, 4294901760
    %v1042 = vsub.f32 %v63, %v1041
    %v1043 = vand.u32 %v1042, 4294901760
    %1044 = vmatpush1.msra.mxu0 %v1043
    %v1045 = vand.u32 %v60, 4294901760
    %v1046 = vsub.f32 %v60, %v1045
    %v1047 = vand.u32 %v1046, 4294901760
    %1048 = vmatprep.subr.mxu0 %v1047
    %v1049 = vand.u32 %v59, 4294901760
    %v1050 = vsub.f32 %v59, %v1049
    %v1051 = vand.u32 %v1050, 4294901760
    %1052 = vmatpush1.msra.mxu0 %v1051
    %v1053 = vand.u32 %v56, 4294901760
    %v1054 = vsub.f32 %v56, %v1053
    %v1055 = vand.u32 %v1054, 4294901760
    %1056 = vmatprep.subr.mxu0 %v1055
    %v1057 = vand.u32 %v55, 4294901760
    %v1058 = vsub.f32 %v55, %v1057
    %v1059 = vand.u32 %v1058, 4294901760
    %1060 = vmatpush1.msra.mxu0 %v1059
    %1061 = vmatprep.subr.mxu0 0.0
    %1062 = vmatpush2.msra.mxu0 0.0
    %1063 = vmatprep.subr.mxu0 0.0
    %1064 = vmatpush2.msra.mxu0 0.0
    %1065 = vmatprep.subr.mxu0 0.0
    %1066 = vmatpush2.msra.mxu0 0.0
    %1067 = vmatprep.subr.mxu0 0.0
    %1068 = vmatpush2.msra.mxu0 0.0
    %1069 = vmatprep.subr.mxu0 0.0
    %1070 = vmatpush2.msra.mxu0 0.0
    %1071 = vmatprep.subr.mxu0 0.0
    %1072 = vmatpush2.msra.mxu0 0.0
    %1073 = vmatprep.subr.mxu0 0.0
    %1074 = vmatpush2.msra.mxu0 0.0
    %1075 = vmatprep.subr.mxu0 0.0
    %1076 = vmatpush2.msra.mxu0 0.0
    %1077 = vmatprep.subr.mxu0 0.0
    %1078 = vmatpush2.msra.mxu0 0.0
    %1079 = vmatprep.subr.mxu0 0.0
    %1080 = vmatpush2.msra.mxu0 0.0
    %1081 = vmatprep.subr.mxu0 0.0
    %1082 = vmatpush2.msra.mxu0 0.0
    %1083 = vmatprep.subr.mxu0 0.0
    %1084 = vmatpush2.msra.mxu0 0.0
    %1085 = vmatprep.subr.mxu0 0.0
    %1086 = vmatpush2.msra.mxu0 0.0
    %1087 = vmatprep.subr.mxu0 0.0
    %1088 = vmatpush2.msra.mxu0 0.0
    %1089 = vmatprep.subr.mxu0 0.0
    %1090 = vmatpush2.msra.mxu0 0.0
    %1091 = vmatprep.subr.mxu0 0.0
    %1092 = vmatpush2.msra.mxu0 0.0
    %1093 = vmatprep.mubr.f32.mxu0 0.0
    %v1094 = vand.u32 %v93, 4294901760
    %1095 = vmatmul.mubr.f32.gmra.mxu0 %v1094
    %v1096 = vpop.f32.mrf.mxu0
    %v1097 = vadd.f32 %v1001, %v1096
    %v1098 = vpop.f32.mrf.mxu0
    %v1099 = vadd.f32 %v1003, %v1098
    %1100 = vdwg.mxu0
    %1101 = vmatprep.subr.mxu0 0.0
    %1102 = vmatpush1.msra.mxu0 0.0
    %1103 = vmatprep.subr.mxu0 0.0
    %1104 = vmatpush1.msra.mxu0 0.0
    %1105 = vmatprep.subr.mxu0 0.0
    %1106 = vmatpush1.msra.mxu0 0.0
    %1107 = vmatprep.subr.mxu0 0.0
    %1108 = vmatpush1.msra.mxu0 0.0
    %1109 = vmatprep.subr.mxu0 0.0
    %1110 = vmatpush1.msra.mxu0 0.0
    %1111 = vmatprep.subr.mxu0 0.0
    %1112 = vmatpush1.msra.mxu0 0.0
    %1113 = vmatprep.subr.mxu0 0.0
    %1114 = vmatpush1.msra.mxu0 0.0
    %1115 = vmatprep.subr.mxu0 0.0
    %1116 = vmatpush1.msra.mxu0 0.0
    %1117 = vmatprep.subr.mxu0 0.0
    %1118 = vmatpush1.msra.mxu0 0.0
    %1119 = vmatprep.subr.mxu0 0.0
    %1120 = vmatpush1.msra.mxu0 0.0
    %1121 = vmatprep.subr.mxu0 0.0
    %1122 = vmatpush1.msra.mxu0 0.0
    %1123 = vmatprep.subr.mxu0 0.0
    %1124 = vmatpush1.msra.mxu0 0.0
    %v1125 = vand.u32 %v68, 4294901760
    %1126 = vmatprep.subr.mxu0 %v1125
    %v1127 = vand.u32 %v67, 4294901760
    %1128 = vmatpush1.msra.mxu0 %v1127
    %v1129 = vand.u32 %v64, 4294901760
    %1130 = vmatprep.subr.mxu0 %v1129
    %v1131 = vand.u32 %v63, 4294901760
    %1132 = vmatpush1.msra.mxu0 %v1131
    %v1133 = vand.u32 %v60, 4294901760
    %1134 = vmatprep.subr.mxu0 %v1133
    %v1135 = vand.u32 %v59, 4294901760
    %1136 = vmatpush1.msra.mxu0 %v1135
    %v1137 = vand.u32 %v56, 4294901760
    %1138 = vmatprep.subr.mxu0 %v1137
    %v1139 = vand.u32 %v55, 4294901760
    %1140 = vmatpush1.msra.mxu0 %v1139
    %1141 = vmatprep.subr.mxu0 0.0
    %1142 = vmatpush2.msra.mxu0 0.0
    %1143 = vmatprep.subr.mxu0 0.0
    %1144 = vmatpush2.msra.mxu0 0.0
    %1145 = vmatprep.subr.mxu0 0.0
    %1146 = vmatpush2.msra.mxu0 0.0
    %1147 = vmatprep.subr.mxu0 0.0
    %1148 = vmatpush2.msra.mxu0 0.0
    %1149 = vmatprep.subr.mxu0 0.0
    %1150 = vmatpush2.msra.mxu0 0.0
    %1151 = vmatprep.subr.mxu0 0.0
    %1152 = vmatpush2.msra.mxu0 0.0
    %1153 = vmatprep.subr.mxu0 0.0
    %1154 = vmatpush2.msra.mxu0 0.0
    %1155 = vmatprep.subr.mxu0 0.0
    %1156 = vmatpush2.msra.mxu0 0.0
    %1157 = vmatprep.subr.mxu0 0.0
    %1158 = vmatpush2.msra.mxu0 0.0
    %1159 = vmatprep.subr.mxu0 0.0
    %1160 = vmatpush2.msra.mxu0 0.0
    %1161 = vmatprep.subr.mxu0 0.0
    %1162 = vmatpush2.msra.mxu0 0.0
    %1163 = vmatprep.subr.mxu0 0.0
    %1164 = vmatpush2.msra.mxu0 0.0
    %1165 = vmatprep.subr.mxu0 0.0
    %1166 = vmatpush2.msra.mxu0 0.0
    %1167 = vmatprep.subr.mxu0 0.0
    %1168 = vmatpush2.msra.mxu0 0.0
    %1169 = vmatprep.subr.mxu0 0.0
    %1170 = vmatpush2.msra.mxu0 0.0
    %1171 = vmatprep.subr.mxu0 0.0
    %1172 = vmatpush2.msra.mxu0 0.0
    %1173 = vmatprep.mubr.f32.mxu0 0.0
    %v1174 = vand.u32 %v93, 4294901760
    %1175 = vmatmul.mubr.f32.gmra.mxu0 %v1174
    %v1176 = vpop.f32.mrf.mxu0
    %v1177 = vadd.f32 %v1097, %v1176
    %v1178 = vpop.f32.mrf.mxu0
    %v1179 = vadd.f32 %v1099, %v1178
    %1180 = vdwg.mxu0
    %v1181 = vand.u32 2147483647, %v634
    %vm1182 = vcmp.le.f32.partialorder %v1181, 0.7853982
    %vm1183 = vcmp.lt.s32.totalorder %v634, 0
    %v1184 = vand.u32 %v634, 2139095040
    %v1185 = vshrl.u32 %v1184, 23
    %v1186 = vsub.s32 %v1185, 127
    %v1187 = vand.u32 2147483647, %v634
    %v1188 = vand.u32 %v1187, 8388607
    %v1189 = vor.u32 %v1188, 8388608
    %v1190 = vsub.s32 0, %v1189
    %v1191 = vadd.s32 %v1186, 1
    %vm1192 = vcmp.gt.s32.totalorder %v1191, 0
    %v1193 = vsel %vm1192, %v1191, 0
    %v1194 = vshrl.u32 %v1193, 5
    %v1195 = vand.u32 %v1193, 31
    %v1196 = vsub.s32 32, %v1195
    %v1197 = vshrl.u32 683565275, %v1196
    %v1198 = vshll.u32 683565275, %v1195
    %v1199 = vshrl.u32 2475754826, %v1196
    %v1200 = vor.u32 %v1198, %v1199
    %v1201 = vshll.u32 2475754826, %v1195
    %v1202 = vshrl.u32 2131351028, %v1196
    %v1203 = vor.u32 %v1201, %v1202
    %v1204 = vshll.u32 2131351028, %v1195
    %v1205 = vshrl.u32 2102212464, %v1196
    %v1206 = vor.u32 %v1204, %v1205
    %v1207 = vshll.u32 2102212464, %v1195
    %v1208 = vshrl.u32 920167782, %v1196
    %v1209 = vor.u32 %v1207, %v1208
    %v1210 = vshll.u32 920167782, %v1195
    %v1211 = vshrl.u32 1326507024, %v1196
    %v1212 = vor.u32 %v1210, %v1211
    %vm1213 = vcmp.lt.s32.totalorder %v1194, 1
    %vm1214 = vcmp.lt.s32.totalorder %v1194, 2
    %vm1215 = vcmp.lt.s32.totalorder %v1194, 3
    %vm1216 = vcmp.lt.s32.totalorder %v1194, 4
    %v1217 = vsel %vm1213, %v1197, %v1200
    %v1218 = vsel %vm1216, %v1206, 2102212464
    %v1219 = vsel %vm1215, %v1203, %v1218
    %v1220 = vsel %vm1214, %v1217, %v1219
    %v1221 = vsel %vm1213, %v1200, %v1203
    %v1222 = vsel %vm1216, %v1209, 920167782
    %v1223 = vsel %vm1215, %v1206, %v1222
    %v1224 = vsel %vm1214, %v1221, %v1223
    %v1225 = vsel %vm1213, %v1203, %v1206
    %v1226 = vsel %vm1216, %v1212, 1326507024
    %v1227 = vsel %vm1215, %v1209, %v1226
    %v1228 = vsel %vm1214, %v1225, %v1227
    %v1229 = vshll.u32 %v1189, 8
    %v1230 = vmul.u32.u64.compose %v1229, %v1228
    %v1231 = vextract.low.u32 %v1230
    %v1232 = vextract.high.u32 %v1230
    %v1233 = vmul.u32.u64.compose %v1229, %v1224
    %v1234 = vextract.low.u32 %v1233
    %v1235 = vextract.high.u32 %v1233
    %v1236 = vmul.u32 %v1229, %v1220
    %v1237 = vadd.s32 %v1232, %v1234
    %vm1238 = vc.u32 %v1232, %v1234
    %v1239 = vadd.s32 %v1235, 1
    %v1240 = vsel %vm1238, %v1239, %v1235
    %v1241 = vadd.s32 %v1236, %v1240
    %v1242 = vadd.s32 %v1241, 536870912
    %v1243 = vshrl.u32 %v1242, 30
    %v1244 = vshll.u32 %v1243, 30
    %v1245 = vsub.s32 %v1241, %v1244
    %vm1246 = vcmp.lt.s32.totalorder %v1245, 0
    %v1247 = vsub.s32 0, %v1245
    %v1248 = vsel %vm1246, %v1247, %v1245
    %v1249 = vclz %v1248
    %v1250 = vsub.s32 %v1249, 2
    %vm1251 = vcmp.gt.s32.totalorder 0, %v1250
    %v1252 = vsel %vm1251, 0, %v1250
    %v1253 = vsub.s32 32, %v1252
    %v1254 = vshll.u32 %v1245, %v1252
    %v1255 = vshrl.u32 %v1237, %v1253
    %v1256 = vor.u32 %v1254, %v1255
    %v1257 = vsub.s32 4294967266, %v1252
    %v1258 = vadd.s32 %v1257, 127
    %v1259 = vshll.u32 %v1258, 23
    %v1260 = vor.u32 4788187, %v1259
    %v1261 = vand.u32 2147483647, %v1260
    %v1263 = vcvt.s32.f32 %v1256
    %v1264 = vmul.f32 %v1263, %v1261
    %v1265 = vxor.u32 %v1264, 2147483648
    %v1266 = vsel %vm1183, %v1265, %v1264
    %v1267 = vsub.s32 4, %v1243
    %v1268 = vsel %vm1183, %v1267, %v1243
    %v1269 = vsel %vm1182, %v634, %v1266
    %v1270 = vsel %vm1182, 0, %v1268
    %v1271 = vcosq.f32.pop %v1269
    %v1272 = vsinq.f32.pop %v1269
    %vm1273 = vweird.f32 %v634
    %v1274 = vadd.s32 %v1270, 3
    %v1275 = vand.u32 %v1274, 3
    %vm1276 = vcmp.lt.s32.totalorder %v1275, 2
    %vm1277 = vcmp.eq.s32.totalorder %v1275, 0
    %v1278 = vxor.u32 %v1272, 2147483648
    %v1279 = vsel %vm1277, %v1271, %v1278
    %vm1280 = vcmp.eq.s32.totalorder %v1275, 2
    %v1281 = vxor.u32 %v1271, 2147483648
    %v1282 = vsel %vm1280, %v1281, %v1272
    %v1283 = vsel %vm1276, %v1279, %v1282
    %v1284 = vsel %vm1273, nan, %v1283
    %v1285 = vand.u32 2147483647, %v636
    %vm1286 = vcmp.le.f32.partialorder %v1285, 0.7853982
    %vm1287 = vcmp.lt.s32.totalorder %v636, 0
    %v1288 = vand.u32 %v636, 2139095040
    %v1289 = vshrl.u32 %v1288, 23
    %v1290 = vsub.s32 %v1289, 127
    %v1291 = vand.u32 2147483647, %v636
    %v1292 = vand.u32 %v1291, 8388607
    %v1293 = vor.u32 %v1292, 8388608
    %v1294 = vsub.s32 0, %v1293
    %v1295 = vadd.s32 %v1290, 1
    %vm1296 = vcmp.gt.s32.totalorder %v1295, 0
    %v1297 = vsel %vm1296, %v1295, 0
    %v1298 = vshrl.u32 %v1297, 5
    %v1299 = vand.u32 %v1297, 31
    %v1300 = vsub.s32 32, %v1299
    %v1301 = vshrl.u32 683565275, %v1300
    %v1302 = vshll.u32 683565275, %v1299
    %v1303 = vshrl.u32 2475754826, %v1300
    %v1304 = vor.u32 %v1302, %v1303
    %v1305 = vshll.u32 2475754826, %v1299
    %v1306 = vshrl.u32 2131351028, %v1300
    %v1307 = vor.u32 %v1305, %v1306
    %v1308 = vshll.u32 2131351028, %v1299
    %v1309 = vshrl.u32 2102212464, %v1300
    %v1310 = vor.u32 %v1308, %v1309
    %v1311 = vshll.u32 2102212464, %v1299
    %v1312 = vshrl.u32 920167782, %v1300
    %v1313 = vor.u32 %v1311, %v1312
    %v1314 = vshll.u32 920167782, %v1299
    %v1315 = vshrl.u32 1326507024, %v1300
    %v1316 = vor.u32 %v1314, %v1315
    %vm1317 = vcmp.lt.s32.totalorder %v1298, 1
    %vm1318 = vcmp.lt.s32.totalorder %v1298, 2
    %vm1319 = vcmp.lt.s32.totalorder %v1298, 3
    %vm1320 = vcmp.lt.s32.totalorder %v1298, 4
    %v1321 = vsel %vm1317, %v1301, %v1304
    %v1322 = vsel %vm1320, %v1310, 2102212464
    %v1323 = vsel %vm1319, %v1307, %v1322
    %v1324 = vsel %vm1318, %v1321, %v1323
    %v1325 = vsel %vm1317, %v1304, %v1307
    %v1326 = vsel %vm1320, %v1313, 920167782
    %v1327 = vsel %vm1319, %v1310, %v1326
    %v1328 = vsel %vm1318, %v1325, %v1327
    %v1329 = vsel %vm1317, %v1307, %v1310
    %v1330 = vsel %vm1320, %v1316, 1326507024
    %v1331 = vsel %vm1319, %v1313, %v1330
    %v1332 = vsel %vm1318, %v1329, %v1331
    %v1333 = vshll.u32 %v1293, 8
    %v1334 = vmul.u32.u64.compose %v1333, %v1332
    %v1335 = vextract.low.u32 %v1334
    %v1336 = vextract.high.u32 %v1334
    %v1337 = vmul.u32.u64.compose %v1333, %v1328
    %v1338 = vextract.low.u32 %v1337
    %v1339 = vextract.high.u32 %v1337
    %v1340 = vmul.u32 %v1333, %v1324
    %v1341 = vadd.s32 %v1336, %v1338
    %vm1342 = vc.u32 %v1336, %v1338
    %v1343 = vadd.s32 %v1339, 1
    %v1344 = vsel %vm1342, %v1343, %v1339
    %v1345 = vadd.s32 %v1340, %v1344
    %v1346 = vadd.s32 %v1345, 536870912
    %v1347 = vshrl.u32 %v1346, 30
    %v1348 = vshll.u32 %v1347, 30
    %v1349 = vsub.s32 %v1345, %v1348
    %vm1350 = vcmp.lt.s32.totalorder %v1349, 0
    %v1351 = vsub.s32 0, %v1349
    %v1352 = vsel %vm1350, %v1351, %v1349
    %v1353 = vclz %v1352
    %v1354 = vsub.s32 %v1353, 2
    %vm1355 = vcmp.gt.s32.totalorder 0, %v1354
    %v1356 = vsel %vm1355, 0, %v1354
    %v1357 = vsub.s32 32, %v1356
    %v1358 = vshll.u32 %v1349, %v1356
    %v1359 = vshrl.u32 %v1341, %v1357
    %v1360 = vor.u32 %v1358, %v1359
    %v1361 = vsub.s32 4294967266, %v1356
    %v1362 = vadd.s32 %v1361, 127
    %v1363 = vshll.u32 %v1362, 23
    %v1364 = vor.u32 4788187, %v1363
    %v1365 = vand.u32 2147483647, %v1364
    %v1367 = vcvt.s32.f32 %v1360
    %v1368 = vmul.f32 %v1367, %v1365
    %v1369 = vxor.u32 %v1368, 2147483648
    %v1370 = vsel %vm1287, %v1369, %v1368
    %v1371 = vsub.s32 4, %v1347
    %v1372 = vsel %vm1287, %v1371, %v1347
    %v1373 = vsel %vm1286, %v636, %v1370
    %v1374 = vsel %vm1286, 0, %v1372
    %v1375 = vcosq.f32.pop %v1373
    %v1376 = vsinq.f32.pop %v1373
    %vm1377 = vweird.f32 %v636
    %v1378 = vadd.s32 %v1374, 3
    %v1379 = vand.u32 %v1378, 3
    %vm1380 = vcmp.lt.s32.totalorder %v1379, 2
    %vm1381 = vcmp.eq.s32.totalorder %v1379, 0
    %v1382 = vxor.u32 %v1376, 2147483648
    %v1383 = vsel %vm1381, %v1375, %v1382
    %vm1384 = vcmp.eq.s32.totalorder %v1379, 2
    %v1385 = vxor.u32 %v1375, 2147483648
    %v1386 = vsel %vm1384, %v1385, %v1376
    %v1387 = vsel %vm1380, %v1383, %v1386
    %v1388 = vsel %vm1377, nan, %v1387
    %v1389 = vand.u32 2147483647, %v1177
    %vm1390 = vcmp.le.f32.partialorder %v1389, 0.7853982
    %vm1391 = vcmp.lt.s32.totalorder %v1177, 0
    %v1392 = vand.u32 %v1177, 2139095040
    %v1393 = vshrl.u32 %v1392, 23
    %v1394 = vsub.s32 %v1393, 127
    %v1395 = vand.u32 2147483647, %v1177
    %v1396 = vand.u32 %v1395, 8388607
    %v1397 = vor.u32 %v1396, 8388608
    %v1398 = vsub.s32 0, %v1397
    %v1399 = vadd.s32 %v1394, 1
    %vm1400 = vcmp.gt.s32.totalorder %v1399, 0
    %v1401 = vsel %vm1400, %v1399, 0
    %v1402 = vshrl.u32 %v1401, 5
    %v1403 = vand.u32 %v1401, 31
    %v1404 = vsub.s32 32, %v1403
    %v1405 = vshrl.u32 683565275, %v1404
    %v1406 = vshll.u32 683565275, %v1403
    %v1407 = vshrl.u32 2475754826, %v1404
    %v1408 = vor.u32 %v1406, %v1407
    %v1409 = vshll.u32 2475754826, %v1403
    %v1410 = vshrl.u32 2131351028, %v1404
    %v1411 = vor.u32 %v1409, %v1410
    %v1412 = vshll.u32 2131351028, %v1403
    %v1413 = vshrl.u32 2102212464, %v1404
    %v1414 = vor.u32 %v1412, %v1413
    %v1415 = vshll.u32 2102212464, %v1403
    %v1416 = vshrl.u32 920167782, %v1404
    %v1417 = vor.u32 %v1415, %v1416
    %v1418 = vshll.u32 920167782, %v1403
    %v1419 = vshrl.u32 1326507024, %v1404
    %v1420 = vor.u32 %v1418, %v1419
    %vm1421 = vcmp.lt.s32.totalorder %v1402, 1
    %vm1422 = vcmp.lt.s32.totalorder %v1402, 2
    %vm1423 = vcmp.lt.s32.totalorder %v1402, 3
    %vm1424 = vcmp.lt.s32.totalorder %v1402, 4
    %v1425 = vsel %vm1421, %v1405, %v1408
    %v1426 = vsel %vm1424, %v1414, 2102212464
    %v1427 = vsel %vm1423, %v1411, %v1426
    %v1428 = vsel %vm1422, %v1425, %v1427
    %v1429 = vsel %vm1421, %v1408, %v1411
    %v1430 = vsel %vm1424, %v1417, 920167782
    %v1431 = vsel %vm1423, %v1414, %v1430
    %v1432 = vsel %vm1422, %v1429, %v1431
    %v1433 = vsel %vm1421, %v1411, %v1414
    %v1434 = vsel %vm1424, %v1420, 1326507024
    %v1435 = vsel %vm1423, %v1417, %v1434
    %v1436 = vsel %vm1422, %v1433, %v1435
    %v1437 = vshll.u32 %v1397, 8
    %v1438 = vmul.u32.u64.compose %v1437, %v1436
    %v1439 = vextract.low.u32 %v1438
    %v1440 = vextract.high.u32 %v1438
    %v1441 = vmul.u32.u64.compose %v1437, %v1432
    %v1442 = vextract.low.u32 %v1441
    %v1443 = vextract.high.u32 %v1441
    %v1444 = vmul.u32 %v1437, %v1428
    %v1445 = vadd.s32 %v1440, %v1442
    %vm1446 = vc.u32 %v1440, %v1442
    %v1447 = vadd.s32 %v1443, 1
    %v1448 = vsel %vm1446, %v1447, %v1443
    %v1449 = vadd.s32 %v1444, %v1448
    %v1450 = vadd.s32 %v1449, 536870912
    %v1451 = vshrl.u32 %v1450, 30
    %v1452 = vshll.u32 %v1451, 30
    %v1453 = vsub.s32 %v1449, %v1452
    %vm1454 = vcmp.lt.s32.totalorder %v1453, 0
    %v1455 = vsub.s32 0, %v1453
    %v1456 = vsel %vm1454, %v1455, %v1453
    %v1457 = vclz %v1456
    %v1458 = vsub.s32 %v1457, 2
    %vm1459 = vcmp.gt.s32.totalorder 0, %v1458
    %v1460 = vsel %vm1459, 0, %v1458
    %v1461 = vsub.s32 32, %v1460
    %v1462 = vshll.u32 %v1453, %v1460
    %v1463 = vshrl.u32 %v1445, %v1461
    %v1464 = vor.u32 %v1462, %v1463
    %v1465 = vsub.s32 4294967266, %v1460
    %v1466 = vadd.s32 %v1465, 127
    %v1467 = vshll.u32 %v1466, 23
    %v1468 = vor.u32 4788187, %v1467
    %v1469 = vand.u32 2147483647, %v1468
    %v1471 = vcvt.s32.f32 %v1464
    %v1472 = vmul.f32 %v1471, %v1469
    %v1473 = vxor.u32 %v1472, 2147483648
    %v1474 = vsel %vm1391, %v1473, %v1472
    %v1475 = vsub.s32 4, %v1451
    %v1476 = vsel %vm1391, %v1475, %v1451
    %v1477 = vsel %vm1390, %v1177, %v1474
    %v1478 = vsel %vm1390, 0, %v1476
    %v1479 = vcosq.f32.pop %v1477
    %v1480 = vsinq.f32.pop %v1477
    %vm1481 = vweird.f32 %v1177
    %v1482 = vadd.s32 %v1478, 3
    %v1483 = vand.u32 %v1482, 3
    %vm1484 = vcmp.lt.s32.totalorder %v1483, 2
    %vm1485 = vcmp.eq.s32.totalorder %v1483, 0
    %v1486 = vxor.u32 %v1480, 2147483648
    %v1487 = vsel %vm1485, %v1479, %v1486
    %vm1488 = vcmp.eq.s32.totalorder %v1483, 2
    %v1489 = vxor.u32 %v1479, 2147483648
    %v1490 = vsel %vm1488, %v1489, %v1480
    %v1491 = vsel %vm1484, %v1487, %v1490
    %v1492 = vsel %vm1481, nan, %v1491
    %v1493 = vand.u32 2147483647, %v1179
    %vm1494 = vcmp.le.f32.partialorder %v1493, 0.7853982
    %vm1495 = vcmp.lt.s32.totalorder %v1179, 0
    %v1496 = vand.u32 %v1179, 2139095040
    %v1497 = vshrl.u32 %v1496, 23
    %v1498 = vsub.s32 %v1497, 127
    %v1499 = vand.u32 2147483647, %v1179
    %v1500 = vand.u32 %v1499, 8388607
    %v1501 = vor.u32 %v1500, 8388608
    %v1502 = vsub.s32 0, %v1501
    %v1503 = vadd.s32 %v1498, 1
    %vm1504 = vcmp.gt.s32.totalorder %v1503, 0
    %v1505 = vsel %vm1504, %v1503, 0
    %v1506 = vshrl.u32 %v1505, 5
    %v1507 = vand.u32 %v1505, 31
    %v1508 = vsub.s32 32, %v1507
    %v1509 = vshrl.u32 683565275, %v1508
    %v1510 = vshll.u32 683565275, %v1507
    %v1511 = vshrl.u32 2475754826, %v1508
    %v1512 = vor.u32 %v1510, %v1511
    %v1513 = vshll.u32 2475754826, %v1507
    %v1514 = vshrl.u32 2131351028, %v1508
    %v1515 = vor.u32 %v1513, %v1514
    %v1516 = vshll.u32 2131351028, %v1507
    %v1517 = vshrl.u32 2102212464, %v1508
    %v1518 = vor.u32 %v1516, %v1517
    %v1519 = vshll.u32 2102212464, %v1507
    %v1520 = vshrl.u32 920167782, %v1508
    %v1521 = vor.u32 %v1519, %v1520
    %v1522 = vshll.u32 920167782, %v1507
    %v1523 = vshrl.u32 1326507024, %v1508
    %v1524 = vor.u32 %v1522, %v1523
    %vm1525 = vcmp.lt.s32.totalorder %v1506, 1
    %vm1526 = vcmp.lt.s32.totalorder %v1506, 2
    %vm1527 = vcmp.lt.s32.totalorder %v1506, 3
    %vm1528 = vcmp.lt.s32.totalorder %v1506, 4
    %v1529 = vsel %vm1525, %v1509, %v1512
    %v1530 = vsel %vm1528, %v1518, 2102212464
    %v1531 = vsel %vm1527, %v1515, %v1530
    %v1532 = vsel %vm1526, %v1529, %v1531
    %v1533 = vsel %vm1525, %v1512, %v1515
    %v1534 = vsel %vm1528, %v1521, 920167782
    %v1535 = vsel %vm1527, %v1518, %v1534
    %v1536 = vsel %vm1526, %v1533, %v1535
    %v1537 = vsel %vm1525, %v1515, %v1518
    %v1538 = vsel %vm1528, %v1524, 1326507024
    %v1539 = vsel %vm1527, %v1521, %v1538
    %v1540 = vsel %vm1526, %v1537, %v1539
    %v1541 = vshll.u32 %v1501, 8
    %v1542 = vmul.u32.u64.compose %v1541, %v1540
    %v1543 = vextract.low.u32 %v1542
    %v1544 = vextract.high.u32 %v1542
    %v1545 = vmul.u32.u64.compose %v1541, %v1536
    %v1546 = vextract.low.u32 %v1545
    %v1547 = vextract.high.u32 %v1545
    %v1548 = vmul.u32 %v1541, %v1532
    %v1549 = vadd.s32 %v1544, %v1546
    %vm1550 = vc.u32 %v1544, %v1546
    %v1551 = vadd.s32 %v1547, 1
    %v1552 = vsel %vm1550, %v1551, %v1547
    %v1553 = vadd.s32 %v1548, %v1552
    %v1554 = vadd.s32 %v1553, 536870912
    %v1555 = vshrl.u32 %v1554, 30
    %v1556 = vshll.u32 %v1555, 30
    %v1557 = vsub.s32 %v1553, %v1556
    %vm1558 = vcmp.lt.s32.totalorder %v1557, 0
    %v1559 = vsub.s32 0, %v1557
    %v1560 = vsel %vm1558, %v1559, %v1557
    %v1561 = vclz %v1560
    %v1562 = vsub.s32 %v1561, 2
    %vm1563 = vcmp.gt.s32.totalorder 0, %v1562
    %v1564 = vsel %vm1563, 0, %v1562
    %v1565 = vsub.s32 32, %v1564
    %v1566 = vshll.u32 %v1557, %v1564
    %v1567 = vshrl.u32 %v1549, %v1565
    %v1568 = vor.u32 %v1566, %v1567
    %v1569 = vsub.s32 4294967266, %v1564
    %v1570 = vadd.s32 %v1569, 127
    %v1571 = vshll.u32 %v1570, 23
    %v1572 = vor.u32 4788187, %v1571
    %v1573 = vand.u32 2147483647, %v1572
    %v1575 = vcvt.s32.f32 %v1568
    %v1576 = vmul.f32 %v1575, %v1573
    %v1577 = vxor.u32 %v1576, 2147483648
    %v1578 = vsel %vm1495, %v1577, %v1576
    %v1579 = vsub.s32 4, %v1555
    %v1580 = vsel %vm1495, %v1579, %v1555
    %v1581 = vsel %vm1494, %v1179, %v1578
    %v1582 = vsel %vm1494, 0, %v1580
    %v1583 = vcosq.f32.pop %v1581
    %v1584 = vsinq.f32.pop %v1581
    %vm1585 = vweird.f32 %v1179
    %v1586 = vadd.s32 %v1582, 3
    %v1587 = vand.u32 %v1586, 3
    %vm1588 = vcmp.lt.s32.totalorder %v1587, 2
    %vm1589 = vcmp.eq.s32.totalorder %v1587, 0
    %v1590 = vxor.u32 %v1584, 2147483648
    %v1591 = vsel %vm1589, %v1583, %v1590
    %vm1592 = vcmp.eq.s32.totalorder %v1587, 2
    %v1593 = vxor.u32 %v1583, 2147483648
    %v1594 = vsel %vm1592, %v1593, %v1584
    %v1595 = vsel %vm1588, %v1591, %v1594
    %v1596 = vsel %vm1585, nan, %v1595
    %v1601 = vcombine.low %v1284, %v1388
    %v1602 = vcombine.low %v1492, %v1596
    %v1604 = vunpack.c.l.s4 1983009808
    %v1605 = vunpack.c.0.s8 %v1604
    %v1606 = vlaneseq
    %v1607 = vshrl.u32 %v1606, 7
    %v1608 = vsub.s32 %v1605, %v1607
    %v1609 = vrot.slane %v1601, %v1608
    %v1611 = vunpack.c.l.s4 1983009808
    %v1612 = vunpack.c.0.s8 %v1611
    %v1613 = vlaneseq
    %v1614 = vshrl.u32 %v1613, 7
    %v1615 = vsub.s32 %v1612, %v1614
    %v1616 = vrot.slane %v1602, %v1615
    %v1617 = vcombine.low %v1609, %v1616
    %1619 = vst [vmem:[#allocation8] sm:$0xff] %v1617
    // Predicated region
    $region26: #{tpu_custom_call.1} parent=1 // pred_check
      _
    $region27: #{tpu_custom_call.1} parent=1 // pred_check_branch
      %1621 = sbr.rel (0) target = $region29
    $region28: #{tpu_custom_call.1} parent=1 // pred_region
      %s1623 = ssub.s32 128, 128
      %1624 = vsyncadd [#allocation4], %s1623
      %s1626 = sshll.u32 [#allocation8], 4
      %s1627 = int_to_ptr.vmem [resolvable:$true] %s1626
      %1629 = dma.vmem_to_hbm [thread:$0]  %s1627, 128, %s3, [#allocation4]
    $region29: #{tpu_custom_call.1} parent=1 // pred_fallthru
      _
    // Predicated region
    $region30: #{tpu_custom_call.1} parent=1 // pred_check
      _
    $region31: #{tpu_custom_call.1} parent=1 // pred_check_branch
      %1631 = sbr.rel (0) target = $region33
    $region32: #{tpu_custom_call.1} parent=1 // pred_region
      %1632 = dma.done [#allocation4], 128
    $region33: #{tpu_custom_call.1} parent=1 // pred_fallthru
      _
    %1633 = vsyncpa [#allocation3], 1
    %1634 = vsyncpa [#allocation6], 1
    %1635 = vsyncpa [#allocation4], 1

// kernel: tpu_custom_call.1
$region0: #{tpu_custom_call.1}
  #allocation0 [shape = 'u32[]', space=smem, size = 0x4, offset = 0x4, fixed_abs, tag = 'smem constant byte address 0x4 - core index']
  #allocation1 [shape = 'u32[144,128]{1,0:T(1,128)}', space=vmem, size = 0x12000, scoped, tag = 'internal scratch']
  %s0 = inlined_call_operand.hbm [shape: f32[2,32], index: 0, kind: input, shape index: {}]
  %s1 = inlined_call_operand.hbm [shape: f32[32,512], index: 1, kind: input, shape index: {}]
  %s2 = inlined_call_operand.hbm [shape: f32[1,512], index: 2, kind: input, shape index: {}]
  %s3 = inlined_call_operand.hbm [shape: f32[2,512], index: 3, kind: output, shape index: {}]
  %s4 = sld [smem:[#allocation0]]
  $region34: #{tpu_custom_call.1} parent=0
    _
  %s6 = ssub.s32 1, %s4
  %s7 = scalar_select 0, %s6, %s4
  $region1: #{tpu_custom_call.1} parent=0
    #allocation2 [shape = 'u8[1024]{0}', space=vmem, size = 0x400, scoped, tag = 'input window, operand 0, single buffered']
    #allocation3 [shape = 's32[1]{0}', space=sflag, size = 0x4, scoped, tag = 'scoped memory for tpu_custom_call.1']
    #allocation4 [shape = 's32[1]{0}', space=sflag, size = 0x4, scoped, tag = 'scoped memory for tpu_custom_call.1']
    #allocation5 [shape = 'u8[65536]{0}', space=vmem, size = 0x10000, scoped, tag = 'input window, operand 1, single buffered']
    #allocation6 [shape = 's32[1]{0}', space=sflag, size = 0x4, scoped, tag = 'scoped memory for tpu_custom_call.1']
    #allocation7 [shape = 'u8[2048]{0}', space=vmem, size = 0x800, scoped, tag = 'input window, operand 2, single buffered']
    #allocation8 [shape = 'u8[4096]{0}', space=vmem, size = 0x1000, scoped, tag = 'output window, operand 0, single buffered']
    %8 = vsyncpa [#allocation3], 0
    %9 = vsyncpa [#allocation6], 0
    %10 = vsyncpa [#allocation4], 0
    // Predicated region
    $region2: #{tpu_custom_call.1} parent=1 // pred_check
      _
    $region3: #{tpu_custom_call.1} parent=1 // pred_check_branch
      %12 = sbr.rel (0) target = $region5
    $region4: #{tpu_custom_call.1} parent=1 // pred_region
      %s14 = ssub.s32 32, 32
      %15 = vsyncadd [#allocation3], %s14
      %s17 = sshll.u32 [#allocation2], 4
      %s18 = int_to_ptr.vmem [resolvable:$true] %s17
      %20 = dma.hbm_to_vmem [thread:$0]  %s0, 32, %s18, [#allocation3]
    $region5: #{tpu_custom_call.1} parent=1 // pred_fallthru
      _
    // Predicated region
    $region6: #{tpu_custom_call.1} parent=1 // pred_check
      _
    $region7: #{tpu_custom_call.1} parent=1 // pred_check_branch
      %22 = sbr.rel (0) target = $region9
    $region8: #{tpu_custom_call.1} parent=1 // pred_region
      %s24 = ssub.s32 2048, 2048
      %25 = vsyncadd [#allocation6], %s24
      %s26 = sshll.u32 [#allocation5], 4
      %s27 = int_to_ptr.vmem [resolvable:$true] %s26
      %32 = dma.hbm_to_vmem [thread:$0]  %s1, 2048, %s27, [#allocation6], 512, 512, 32
    $region9: #{tpu_custom_call.1} parent=1 // pred_fallthru
      _
    // Predicated region
    $region10: #{tpu_custom_call.1} parent=1 // pred_check
      _
    $region11: #{tpu_custom_call.1} parent=1 // pred_check_branch
      %34 = sbr.rel (0) target = $region13
    $region12: #{tpu_custom_call.1} parent=1 // pred_region
      %s36 = ssub.s32 64, 64
      %37 = vsyncadd [#allocation6], %s36
      %s39 = sshll.u32 [#allocation7], 4
      %s40 = int_to_ptr.vmem [resolvable:$true] %s39
      %42 = dma.hbm_to_vmem [thread:$0]  %s2, 64, %s40, [#allocation6]
    $region13: #{tpu_custom_call.1} parent=1 // pred_fallthru
      _
    // Predicated region
    $region14: #{tpu_custom_call.1} parent=1 // pred_check
      _
    $region15: #{tpu_custom_call.1} parent=1 // pred_check_branch
      %44 = sbr.rel (0) target = $region17
    $region16: #{tpu_custom_call.1} parent=1 // pred_region
      %45 = dma.done [#allocation3], 32
    $region17: #{tpu_custom_call.1} parent=1 // pred_fallthru
      _
    // Predicated region
    $region18: #{tpu_custom_call.1} parent=1 // pred_check
      _
    $region19: #{tpu_custom_call.1} parent=1 // pred_check_branch
      %47 = sbr.rel (0) target = $region21
    $region20: #{tpu_custom_call.1} parent=1 // pred_region
      %48 = dma.done [#allocation6], 2048
    $region21: #{tpu_custom_call.1} parent=1 // pred_fallthru
      _
    // Predicated region
    $region22: #{tpu_custom_call.1} parent=1 // pred_check
      _
    $region23: #{tpu_custom_call.1} parent=1 // pred_check_branch
      %50 = sbr.rel (0) target = $region25
    $region24: #{tpu_custom_call.1} parent=1 // pred_region
      %51 = dma.done [#allocation6], 64
    $region25: #{tpu_custom_call.1} parent=1 // pred_fallthru
      _
    %v52 = vld [vmem:[#allocation2] sm:$0x3]
    %v53 = vld [vmem:[#allocation5] sm:$0xff]
    %v54 = vld [vmem:[#allocation5 + $0x8] sm:$0xff]
    %v55 = vld [vmem:[#allocation5 + $0x10] sm:$0xff]
    %v56 = vld [vmem:[#allocation5 + $0x18] sm:$0xff]
    %v57 = vld [vmem:[#allocation5 + $0x20] sm:$0xff]
    %v58 = vld [vmem:[#allocation5 + $0x28] sm:$0xff]
    %v59 = vld [vmem:[#allocation5 + $0x30] sm:$0xff]
    %v60 = vld [vmem:[#allocation5 + $0x38] sm:$0xff]
    %v61 = vld [vmem:[#allocation5 + $0x40] sm:$0xff]
    %v62 = vld [vmem:[#allocation5 + $0x48] sm:$0xff]
    %v63 = vld [vmem:[#allocation5 + $0x50] sm:$0xff]
    %v64 = vld [vmem:[#allocation5 + $0x58] sm:$0xff]
    %v65 = vld [vmem:[#allocation5 + $0x60] sm:$0xff]
    %v66 = vld [vmem:[#allocation5 + $0x68] sm:$0xff]
    %v67 = vld [vmem:[#allocation5 + $0x70] sm:$0xff]
    %v68 = vld [vmem:[#allocation5 + $0x78] sm:$0xff]
    %v69 = vld [vmem:[#allocation7] sm:$0xf]
    %v71 = vlaneseq
    %v72 = vshrl.u32 %v71, 7
    %v73 = vsub.s32 0, %v72
    %v74 = vrot.slane %v69, %v73
    %v75 = vlaneseq
    %v76 = vshrl.u32 %v75, 7
    %v77 = vsub.s32 1, %v76
    %v78 = vrot.slane %v69, %v77
    %v79 = vlaneseq
    %v80 = vshrl.u32 %v79, 7
    %v81 = vsub.s32 2, %v80
    %v82 = vrot.slane %v69, %v81
    %v83 = vlaneseq
    %v84 = vshrl.u32 %v83, 7
    %v85 = vsub.s32 3, %v84
    %v86 = vrot.slane %v69, %v85
    %vm91 = vcmask 261120
    %v93 = vsel %vm91, %v52, 0
    %95 = vmatprep.subr.mxu0 0.0
    %96 = vmatpush1.msra.mxu0 0.0
    %97 = vmatprep.subr.mxu0 0.0
    %98 = vmatpush1.msra.mxu0 0.0
    %99 = vmatprep.subr.mxu0 0.0
    %100 = vmatpush1.msra.mxu0 0.0
    %101 = vmatprep.subr.mxu0 0.0
    %102 = vmatpush1.msra.mxu0 0.0
    %103 = vmatprep.subr.mxu0 0.0
    %104 = vmatpush1.msra.mxu0 0.0
    %105 = vmatprep.subr.mxu0 0.0
    %106 = vmatpush1.msra.mxu0 0.0
    %107 = vmatprep.subr.mxu0 0.0
    %108 = vmatpush1.msra.mxu0 0.0
    %109 = vmatprep.subr.mxu0 0.0
    %110 = vmatpush1.msra.mxu0 0.0
    %111 = vmatprep.subr.mxu0 0.0
    %112 = vmatpush1.msra.mxu0 0.0
    %113 = vmatprep.subr.mxu0 0.0
    %114 = vmatpush1.msra.mxu0 0.0
    %115 = vmatprep.subr.mxu0 0.0
    %116 = vmatpush1.msra.mxu0 0.0
    %117 = vmatprep.subr.mxu0 0.0
    %118 = vmatpush1.msra.mxu0 0.0
    %v119 = vand.u32 %v66, 4294901760
    %120 = vmatprep.subr.mxu0 %v119
    %v121 = vand.u32 %v65, 4294901760
    %122 = vmatpush1.msra.mxu0 %v121
    %v123 = vand.u32 %v62, 4294901760
    %124 = vmatprep.subr.mxu0 %v123
    %v125 = vand.u32 %v61, 4294901760
    %126 = vmatpush1.msra.mxu0 %v125
    %v127 = vand.u32 %v58, 4294901760
    %128 = vmatprep.subr.mxu0 %v127
    %v129 = vand.u32 %v57, 4294901760
    %130 = vmatpush1.msra.mxu0 %v129
    %v131 = vand.u32 %v54, 4294901760
    %132 = vmatprep.subr.mxu0 %v131
    %v133 = vand.u32 %v53, 4294901760
    %134 = vmatpush1.msra.mxu0 %v133
    %135 = vmatprep.subr.mxu0 0.0
    %136 = vmatpush2.msra.mxu0 0.0
    %137 = vmatprep.subr.mxu0 0.0
    %138 = vmatpush2.msra.mxu0 0.0
    %139 = vmatprep.subr.mxu0 0.0
    %140 = vmatpush2.msra.mxu0 0.0
    %141 = vmatprep.subr.mxu0 0.0
    %142 = vmatpush2.msra.mxu0 0.0
    %143 = vmatprep.subr.mxu0 0.0
    %144 = vmatpush2.msra.mxu0 0.0
    %145 = vmatprep.subr.mxu0 0.0
    %146 = vmatpush2.msra.mxu0 0.0
    %147 = vmatprep.subr.mxu0 0.0
    %148 = vmatpush2.msra.mxu0 0.0
    %149 = vmatprep.subr.mxu0 0.0
    %150 = vmatpush2.msra.mxu0 0.0
    %151 = vmatprep.subr.mxu0 0.0
    %152 = vmatpush2.msra.mxu0 0.0
    %153 = vmatprep.subr.mxu0 0.0
    %154 = vmatpush2.msra.mxu0 0.0
    %155 = vmatprep.subr.mxu0 0.0
    %156 = vmatpush2.msra.mxu0 0.0
    %157 = vmatprep.subr.mxu0 0.0
    %158 = vmatpush2.msra.mxu0 0.0
    %159 = vmatprep.subr.mxu0 0.0
    %160 = vmatpush2.msra.mxu0 0.0
    %161 = vmatprep.subr.mxu0 0.0
    %162 = vmatpush2.msra.mxu0 0.0
    %163 = vmatprep.subr.mxu0 0.0
    %164 = vmatpush2.msra.mxu0 0.0
    %165 = vmatprep.subr.mxu0 0.0
    %166 = vmatpush2.msra.mxu0 0.0
    %167 = vmatprep.mubr.f32.mxu0 0.0
    %v168 = vand.u32 %v93, 4294901760
    %v169 = vsub.f32 %v93, %v168
    %v170 = vand.u32 %v169, 4294901760
    %v171 = vsub.f32 %v169, %v170
    %v172 = vand.u32 %v171, 4294901760
    %173 = vmatmul.mubr.f32.gmra.mxu0 %v172
    %v174 = vpop.f32.mrf.mxu0
    %v175 = vadd.f32 %v74, %v174
    %v176 = vpop.f32.mrf.mxu0
    %v177 = vadd.f32 %v78, %v176
    %178 = vdwg.mxu0
    %179 = vmatprep.subr.mxu0 0.0
    %180 = vmatpush1.msra.mxu0 0.0
    %181 = vmatprep.subr.mxu0 0.0
    %182 = vmatpush1.msra.mxu0 0.0
    %183 = vmatprep.subr.mxu0 0.0
    %184 = vmatpush1.msra.mxu0 0.0
    %185 = vmatprep.subr.mxu0 0.0
    %186 = vmatpush1.msra.mxu0 0.0
    %187 = vmatprep.subr.mxu0 0.0
    %188 = vmatpush1.msra.mxu0 0.0
    %189 = vmatprep.subr.mxu0 0.0
    %190 = vmatpush1.msra.mxu0 0.0
    %191 = vmatprep.subr.mxu0 0.0
    %192 = vmatpush1.msra.mxu0 0.0
    %193 = vmatprep.subr.mxu0 0.0
    %194 = vmatpush1.msra.mxu0 0.0
    %195 = vmatprep.subr.mxu0 0.0
    %196 = vmatpush1.msra.mxu0 0.0
    %197 = vmatprep.subr.mxu0 0.0
    %198 = vmatpush1.msra.mxu0 0.0
    %199 = vmatprep.subr.mxu0 0.0
    %200 = vmatpush1.msra.mxu0 0.0
    %201 = vmatprep.subr.mxu0 0.0
    %202 = vmatpush1.msra.mxu0 0.0
    %v203 = vand.u32 %v66, 4294901760
    %v204 = vsub.f32 %v66, %v203
    %v205 = vand.u32 %v204, 4294901760
    %v206 = vsub.f32 %v204, %v205
    %v207 = vand.u32 %v206, 4294901760
    %208 = vmatprep.subr.mxu0 %v207
    %v209 = vand.u32 %v65, 4294901760
    %v210 = vsub.f32 %v65, %v209
    %v211 = vand.u32 %v210, 4294901760
    %v212 = vsub.f32 %v210, %v211
    %v213 = vand.u32 %v212, 4294901760
    %214 = vmatpush1.msra.mxu0 %v213
    %v215 = vand.u32 %v62, 4294901760
    %v216 = vsub.f32 %v62, %v215
    %v217 = vand.u32 %v216, 4294901760
    %v218 = vsub.f32 %v216, %v217
    %v219 = vand.u32 %v218, 4294901760
    %220 = vmatprep.subr.mxu0 %v219
    %v221 = vand.u32 %v61, 4294901760
    %v222 = vsub.f32 %v61, %v221
    %v223 = vand.u32 %v222, 4294901760
    %v224 = vsub.f32 %v222, %v223
    %v225 = vand.u32 %v224, 4294901760
    %226 = vmatpush1.msra.mxu0 %v225
    %v227 = vand.u32 %v58, 4294901760
    %v228 = vsub.f32 %v58, %v227
    %v229 = vand.u32 %v228, 4294901760
    %v230 = vsub.f32 %v228, %v229
    %v231 = vand.u32 %v230, 4294901760
    %232 = vmatprep.subr.mxu0 %v231
    %v233 = vand.u32 %v57, 4294901760
    %v234 = vsub.f32 %v57, %v233
    %v235 = vand.u32 %v234, 4294901760
    %v236 = vsub.f32 %v234, %v235
    %v237 = vand.u32 %v236, 4294901760
    %238 = vmatpush1.msra.mxu0 %v237
    %v239 = vand.u32 %v54, 4294901760
    %v240 = vsub.f32 %v54, %v239
    %v241 = vand.u32 %v240, 4294901760
    %v242 = vsub.f32 %v240, %v241
    %v243 = vand.u32 %v242, 4294901760
    %244 = vmatprep.subr.mxu0 %v243
    %v245 = vand.u32 %v53, 4294901760
    %v246 = vsub.f32 %v53, %v245
    %v247 = vand.u32 %v246, 4294901760
    %v248 = vsub.f32 %v246, %v247
    %v249 = vand.u32 %v248, 4294901760
    %250 = vmatpush1.msra.mxu0 %v249
    %251 = vmatprep.subr.mxu0 0.0
    %252 = vmatpush2.msra.mxu0 0.0
    %253 = vmatprep.subr.mxu0 0.0
    %254 = vmatpush2.msra.mxu0 0.0
    %255 = vmatprep.subr.mxu0 0.0
    %256 = vmatpush2.msra.mxu0 0.0
    %257 = vmatprep.subr.mxu0 0.0
    %258 = vmatpush2.msra.mxu0 0.0
    %259 = vmatprep.subr.mxu0 0.0
    %260 = vmatpush2.msra.mxu0 0.0
    %261 = vmatprep.subr.mxu0 0.0
    %262 = vmatpush2.msra.mxu0 0.0
    %263 = vmatprep.subr.mxu0 0.0
    %264 = vmatpush2.msra.mxu0 0.0
    %265 = vmatprep.subr.mxu0 0.0
    %266 = vmatpush2.msra.mxu0 0.0
    %267 = vmatprep.subr.mxu0 0.0
    %268 = vmatpush2.msra.mxu0 0.0
    %269 = vmatprep.subr.mxu0 0.0
    %270 = vmatpush2.msra.mxu0 0.0
    %271 = vmatprep.subr.mxu0 0.0
    %272 = vmatpush2.msra.mxu0 0.0
    %273 = vmatprep.subr.mxu0 0.0
    %274 = vmatpush2.msra.mxu0 0.0
    %275 = vmatprep.subr.mxu0 0.0
    %276 = vmatpush2.msra.mxu0 0.0
    %277 = vmatprep.subr.mxu0 0.0
    %278 = vmatpush2.msra.mxu0 0.0
    %279 = vmatprep.subr.mxu0 0.0
    %280 = vmatpush2.msra.mxu0 0.0
    %281 = vmatprep.subr.mxu0 0.0
    %282 = vmatpush2.msra.mxu0 0.0
    %283 = vmatprep.mubr.f32.mxu0 0.0
    %v284 = vand.u32 %v93, 4294901760
    %285 = vmatmul.mubr.f32.gmra.mxu0 %v284
    %v286 = vpop.f32.mrf.mxu0
    %v287 = vadd.f32 %v175, %v286
    %v288 = vpop.f32.mrf.mxu0
    %v289 = vadd.f32 %v177, %v288
    %290 = vdwg.mxu0
    %291 = vmatprep.subr.mxu0 0.0
    %292 = vmatpush1.msra.mxu0 0.0
    %293 = vmatprep.subr.mxu0 0.0
    %294 = vmatpush1.msra.mxu0 0.0
    %295 = vmatprep.subr.mxu0 0.0
    %296 = vmatpush1.msra.mxu0 0.0
    %297 = vmatprep.subr.mxu0 0.0
    %298 = vmatpush1.msra.mxu0 0.0
    %299 = vmatprep.subr.mxu0 0.0
    %300 = vmatpush1.msra.mxu0 0.0
    %301 = vmatprep.subr.mxu0 0.0
    %302 = vmatpush1.msra.mxu0 0.0
    %303 = vmatprep.subr.mxu0 0.0
    %304 = vmatpush1.msra.mxu0 0.0
    %305 = vmatprep.subr.mxu0 0.0
    %306 = vmatpush1.msra.mxu0 0.0
    %307 = vmatprep.subr.mxu0 0.0
    %308 = vmatpush1.msra.mxu0 0.0
    %309 = vmatprep.subr.mxu0 0.0
    %310 = vmatpush1.msra.mxu0 0.0
    %311 = vmatprep.subr.mxu0 0.0
    %312 = vmatpush1.msra.mxu0 0.0
    %313 = vmatprep.subr.mxu0 0.0
    %314 = vmatpush1.msra.mxu0 0.0
    %v315 = vand.u32 %v66, 4294901760
    %v316 = vsub.f32 %v66, %v315
    %317 = vmatprep.subr.mxu0 %v316
    %v318 = vand.u32 %v65, 4294901760
    %v319 = vsub.f32 %v65, %v318
    %320 = vmatpush1.msra.mxu0 %v319
    %v321 = vand.u32 %v62, 4294901760
    %v322 = vsub.f32 %v62, %v321
    %323 = vmatprep.subr.mxu0 %v322
    %v324 = vand.u32 %v61, 4294901760
    %v325 = vsub.f32 %v61, %v324
    %326 = vmatpush1.msra.mxu0 %v325
    %v327 = vand.u32 %v58, 4294901760
    %v328 = vsub.f32 %v58, %v327
    %329 = vmatprep.subr.mxu0 %v328
    %v330 = vand.u32 %v57, 4294901760
    %v331 = vsub.f32 %v57, %v330
    %332 = vmatpush1.msra.mxu0 %v331
    %v333 = vand.u32 %v54, 4294901760
    %v334 = vsub.f32 %v54, %v333
    %335 = vmatprep.subr.mxu0 %v334
    %v336 = vand.u32 %v53, 4294901760
    %v337 = vsub.f32 %v53, %v336
    %338 = vmatpush1.msra.mxu0 %v337
    %339 = vmatprep.subr.mxu0 0.0
    %340 = vmatpush2.msra.mxu0 0.0
    %341 = vmatprep.subr.mxu0 0.0
    %342 = vmatpush2.msra.mxu0 0.0
    %343 = vmatprep.subr.mxu0 0.0
    %344 = vmatpush2.msra.mxu0 0.0
    %345 = vmatprep.subr.mxu0 0.0
    %346 = vmatpush2.msra.mxu0 0.0
    %347 = vmatprep.subr.mxu0 0.0
    %348 = vmatpush2.msra.mxu0 0.0
    %349 = vmatprep.subr.mxu0 0.0
    %350 = vmatpush2.msra.mxu0 0.0
    %351 = vmatprep.subr.mxu0 0.0
    %352 = vmatpush2.msra.mxu0 0.0
    %353 = vmatprep.subr.mxu0 0.0
    %354 = vmatpush2.msra.mxu0 0.0
    %355 = vmatprep.subr.mxu0 0.0
    %356 = vmatpush2.msra.mxu0 0.0
    %357 = vmatprep.subr.mxu0 0.0
    %358 = vmatpush2.msra.mxu0 0.0
    %359 = vmatprep.subr.mxu0 0.0
    %360 = vmatpush2.msra.mxu0 0.0
    %361 = vmatprep.subr.mxu0 0.0
    %362 = vmatpush2.msra.mxu0 0.0
    %363 = vmatprep.subr.mxu0 0.0
    %364 = vmatpush2.msra.mxu0 0.0
    %365 = vmatprep.subr.mxu0 0.0
    %366 = vmatpush2.msra.mxu0 0.0
    %367 = vmatprep.subr.mxu0 0.0
    %368 = vmatpush2.msra.mxu0 0.0
    %369 = vmatprep.subr.mxu0 0.0
    %370 = vmatpush2.msra.mxu0 0.0
    %371 = vmatprep.mubr.f32.mxu0 0.0
    %v372 = vand.u32 %v93, 4294901760
    %v373 = vsub.f32 %v93, %v372
    %374 = vmatmul.mubr.f32.gmra.mxu0 %v373
    %v375 = vpop.f32.mrf.mxu0
    %v376 = vadd.f32 %v287, %v375
    %v377 = vpop.f32.mrf.mxu0
    %v378 = vadd.f32 %v289, %v377
    %379 = vdwg.mxu0
    %380 = vmatprep.subr.mxu0 0.0
    %381 = vmatpush1.msra.mxu0 0.0
    %382 = vmatprep.subr.mxu0 0.0
    %383 = vmatpush1.msra.mxu0 0.0
    %384 = vmatprep.subr.mxu0 0.0
    %385 = vmatpush1.msra.mxu0 0.0
    %386 = vmatprep.subr.mxu0 0.0
    %387 = vmatpush1.msra.mxu0 0.0
    %388 = vmatprep.subr.mxu0 0.0
    %389 = vmatpush1.msra.mxu0 0.0
    %390 = vmatprep.subr.mxu0 0.0
    %391 = vmatpush1.msra.mxu0 0.0
    %392 = vmatprep.subr.mxu0 0.0
    %393 = vmatpush1.msra.mxu0 0.0
    %394 = vmatprep.subr.mxu0 0.0
    %395 = vmatpush1.msra.mxu0 0.0
    %396 = vmatprep.subr.mxu0 0.0
    %397 = vmatpush1.msra.mxu0 0.0
    %398 = vmatprep.subr.mxu0 0.0
    %399 = vmatpush1.msra.mxu0 0.0
    %400 = vmatprep.subr.mxu0 0.0
    %401 = vmatpush1.msra.mxu0 0.0
    %402 = vmatprep.subr.mxu0 0.0
    %403 = vmatpush1.msra.mxu0 0.0
    %v404 = vand.u32 %v66, 4294901760
    %405 = vmatprep.subr.mxu0 %v404
    %v406 = vand.u32 %v65, 4294901760
    %407 = vmatpush1.msra.mxu0 %v406
    %v408 = vand.u32 %v62, 4294901760
    %409 = vmatprep.subr.mxu0 %v408
    %v410 = vand.u32 %v61, 4294901760
    %411 = vmatpush1.msra.mxu0 %v410
    %v412 = vand.u32 %v58, 4294901760
    %413 = vmatprep.subr.mxu0 %v412
    %v414 = vand.u32 %v57, 4294901760
    %415 = vmatpush1.msra.mxu0 %v414
    %v416 = vand.u32 %v54, 4294901760
    %417 = vmatprep.subr.mxu0 %v416
    %v418 = vand.u32 %v53, 4294901760
    %419 = vmatpush1.msra.mxu0 %v418
    %420 = vmatprep.subr.mxu0 0.0
    %421 = vmatpush2.msra.mxu0 0.0
    %422 = vmatprep.subr.mxu0 0.0
    %423 = vmatpush2.msra.mxu0 0.0
    %424 = vmatprep.subr.mxu0 0.0
    %425 = vmatpush2.msra.mxu0 0.0
    %426 = vmatprep.subr.mxu0 0.0
    %427 = vmatpush2.msra.mxu0 0.0
    %428 = vmatprep.subr.mxu0 0.0
    %429 = vmatpush2.msra.mxu0 0.0
    %430 = vmatprep.subr.mxu0 0.0
    %431 = vmatpush2.msra.mxu0 0.0
    %432 = vmatprep.subr.mxu0 0.0
    %433 = vmatpush2.msra.mxu0 0.0
    %434 = vmatprep.subr.mxu0 0.0
    %435 = vmatpush2.msra.mxu0 0.0
    %436 = vmatprep.subr.mxu0 0.0
    %437 = vmatpush2.msra.mxu0 0.0
    %438 = vmatprep.subr.mxu0 0.0
    %439 = vmatpush2.msra.mxu0 0.0
    %440 = vmatprep.subr.mxu0 0.0
    %441 = vmatpush2.msra.mxu0 0.0
    %442 = vmatprep.subr.mxu0 0.0
    %443 = vmatpush2.msra.mxu0 0.0
    %444 = vmatprep.subr.mxu0 0.0
    %445 = vmatpush2.msra.mxu0 0.0
    %446 = vmatprep.subr.mxu0 0.0
    %447 = vmatpush2.msra.mxu0 0.0
    %448 = vmatprep.subr.mxu0 0.0
    %449 = vmatpush2.msra.mxu0 0.0
    %450 = vmatprep.subr.mxu0 0.0
    %451 = vmatpush2.msra.mxu0 0.0
    %452 = vmatprep.mubr.f32.mxu0 0.0
    %v453 = vand.u32 %v93, 4294901760
    %v454 = vsub.f32 %v93, %v453
    %v455 = vand.u32 %v454, 4294901760
    %456 = vmatmul.mubr.f32.gmra.mxu0 %v455
    %v457 = vpop.f32.mrf.mxu0
    %v458 = vadd.f32 %v376, %v457
    %v459 = vpop.f32.mrf.mxu0
    %v460 = vadd.f32 %v378, %v459
    %461 = vdwg.mxu0
    %462 = vmatprep.subr.mxu0 0.0
    %463 = vmatpush1.msra.mxu0 0.0
    %464 = vmatprep.subr.mxu0 0.0
    %465 = vmatpush1.msra.mxu0 0.0
    %466 = vmatprep.subr.mxu0 0.0
    %467 = vmatpush1.msra.mxu0 0.0
    %468 = vmatprep.subr.mxu0 0.0
    %469 = vmatpush1.msra.mxu0 0.0
    %470 = vmatprep.subr.mxu0 0.0
    %471 = vmatpush1.msra.mxu0 0.0
    %472 = vmatprep.subr.mxu0 0.0
    %473 = vmatpush1.msra.mxu0 0.0
    %474 = vmatprep.subr.mxu0 0.0
    %475 = vmatpush1.msra.mxu0 0.0
    %476 = vmatprep.subr.mxu0 0.0
    %477 = vmatpush1.msra.mxu0 0.0
    %478 = vmatprep.subr.mxu0 0.0
    %479 = vmatpush1.msra.mxu0 0.0
    %480 = vmatprep.subr.mxu0 0.0
    %481 = vmatpush1.msra.mxu0 0.0
    %482 = vmatprep.subr.mxu0 0.0
    %483 = vmatpush1.msra.mxu0 0.0
    %484 = vmatprep.subr.mxu0 0.0
    %485 = vmatpush1.msra.mxu0 0.0
    %v486 = vand.u32 %v66, 4294901760
    %v487 = vsub.f32 %v66, %v486
    %v488 = vand.u32 %v487, 4294901760
    %489 = vmatprep.subr.mxu0 %v488
    %v490 = vand.u32 %v65, 4294901760
    %v491 = vsub.f32 %v65, %v490
    %v492 = vand.u32 %v491, 4294901760
    %493 = vmatpush1.msra.mxu0 %v492
    %v494 = vand.u32 %v62, 4294901760
    %v495 = vsub.f32 %v62, %v494
    %v496 = vand.u32 %v495, 4294901760
    %497 = vmatprep.subr.mxu0 %v496
    %v498 = vand.u32 %v61, 4294901760
    %v499 = vsub.f32 %v61, %v498
    %v500 = vand.u32 %v499, 4294901760
    %501 = vmatpush1.msra.mxu0 %v500
    %v502 = vand.u32 %v58, 4294901760
    %v503 = vsub.f32 %v58, %v502
    %v504 = vand.u32 %v503, 4294901760
    %505 = vmatprep.subr.mxu0 %v504
    %v506 = vand.u32 %v57, 4294901760
    %v507 = vsub.f32 %v57, %v506
    %v508 = vand.u32 %v507, 4294901760
    %509 = vmatpush1.msra.mxu0 %v508
    %v510 = vand.u32 %v54, 4294901760
    %v511 = vsub.f32 %v54, %v510
    %v512 = vand.u32 %v511, 4294901760
    %513 = vmatprep.subr.mxu0 %v512
    %v514 = vand.u32 %v53, 4294901760
    %v515 = vsub.f32 %v53, %v514
    %v516 = vand.u32 %v515, 4294901760
    %517 = vmatpush1.msra.mxu0 %v516
    %518 = vmatprep.subr.mxu0 0.0
    %519 = vmatpush2.msra.mxu0 0.0
    %520 = vmatprep.subr.mxu0 0.0
    %521 = vmatpush2.msra.mxu0 0.0
    %522 = vmatprep.subr.mxu0 0.0
    %523 = vmatpush2.msra.mxu0 0.0
    %524 = vmatprep.subr.mxu0 0.0
    %525 = vmatpush2.msra.mxu0 0.0
    %526 = vmatprep.subr.mxu0 0.0
    %527 = vmatpush2.msra.mxu0 0.0
    %528 = vmatprep.subr.mxu0 0.0
    %529 = vmatpush2.msra.mxu0 0.0
    %530 = vmatprep.subr.mxu0 0.0
    %531 = vmatpush2.msra.mxu0 0.0
    %532 = vmatprep.subr.mxu0 0.0
    %533 = vmatpush2.msra.mxu0 0.0
    %534 = vmatprep.subr.mxu0 0.0
    %535 = vmatpush2.msra.mxu0 0.0
    %536 = vmatprep.subr.mxu0 0.0
    %537 = vmatpush2.msra.mxu0 0.0
    %538 = vmatprep.subr.mxu0 0.0
    %539 = vmatpush2.msra.mxu0 0.0
    %540 = vmatprep.subr.mxu0 0.0
    %541 = vmatpush2.msra.mxu0 0.0
    %542 = vmatprep.subr.mxu0 0.0
    %543 = vmatpush2.msra.mxu0 0.0
    %544 = vmatprep.subr.mxu0 0.0
    %545 = vmatpush2.msra.mxu0 0.0
    %546 = vmatprep.subr.mxu0 0.0
    %547 = vmatpush2.msra.mxu0 0.0
    %548 = vmatprep.subr.mxu0 0.0
    %549 = vmatpush2.msra.mxu0 0.0
    %550 = vmatprep.mubr.f32.mxu0 0.0
    %v551 = vand.u32 %v93, 4294901760
    %552 = vmatmul.mubr.f32.gmra.mxu0 %v551
    %v553 = vpop.f32.mrf.mxu0
    %v554 = vadd.f32 %v458, %v553
    %v555 = vpop.f32.mrf.mxu0
    %v556 = vadd.f32 %v460, %v555
    %557 = vdwg.mxu0
    %558 = vmatprep.subr.mxu0 0.0
    %559 = vmatpush1.msra.mxu0 0.0
    %560 = vmatprep.subr.mxu0 0.0
    %561 = vmatpush1.msra.mxu0 0.0
    %562 = vmatprep.subr.mxu0 0.0
    %563 = vmatpush1.msra.mxu0 0.0
    %564 = vmatprep.subr.mxu0 0.0
    %565 = vmatpush1.msra.mxu0 0.0
    %566 = vmatprep.subr.mxu0 0.0
    %567 = vmatpush1.msra.mxu0 0.0
    %568 = vmatprep.subr.mxu0 0.0
    %569 = vmatpush1.msra.mxu0 0.0
    %570 = vmatprep.subr.mxu0 0.0
    %571 = vmatpush1.msra.mxu0 0.0
    %572 = vmatprep.subr.mxu0 0.0
    %573 = vmatpush1.msra.mxu0 0.0
    %574 = vmatprep.subr.mxu0 0.0
    %575 = vmatpush1.msra.mxu0 0.0
    %576 = vmatprep.subr.mxu0 0.0
    %577 = vmatpush1.msra.mxu0 0.0
    %578 = vmatprep.subr.mxu0 0.0
    %579 = vmatpush1.msra.mxu0 0.0
    %580 = vmatprep.subr.mxu0 0.0
    %581 = vmatpush1.msra.mxu0 0.0
    %v582 = vand.u32 %v66, 4294901760
    %583 = vmatprep.subr.mxu0 %v582
    %v584 = vand.u32 %v65, 4294901760
    %585 = vmatpush1.msra.mxu0 %v584
    %v586 = vand.u32 %v62, 4294901760
    %587 = vmatprep.subr.mxu0 %v586
    %v588 = vand.u32 %v61, 4294901760
    %589 = vmatpush1.msra.mxu0 %v588
    %v590 = vand.u32 %v58, 4294901760
    %591 = vmatprep.subr.mxu0 %v590
    %v592 = vand.u32 %v57, 4294901760
    %593 = vmatpush1.msra.mxu0 %v592
    %v594 = vand.u32 %v54, 4294901760
    %595 = vmatprep.subr.mxu0 %v594
    %v596 = vand.u32 %v53, 4294901760
    %597 = vmatpush1.msra.mxu0 %v596
    %598 = vmatprep.subr.mxu0 0.0
    %599 = vmatpush2.msra.mxu0 0.0
    %600 = vmatprep.subr.mxu0 0.0
    %601 = vmatpush2.msra.mxu0 0.0
    %602 = vmatprep.subr.mxu0 0.0
    %603 = vmatpush2.msra.mxu0 0.0
    %604 = vmatprep.subr.mxu0 0.0
    %605 = vmatpush2.msra.mxu0 0.0
    %606 = vmatprep.subr.mxu0 0.0
    %607 = vmatpush2.msra.mxu0 0.0
    %608 = vmatprep.subr.mxu0 0.0
    %609 = vmatpush2.msra.mxu0 0.0
    %610 = vmatprep.subr.mxu0 0.0
    %611 = vmatpush2.msra.mxu0 0.0
    %612 = vmatprep.subr.mxu0 0.0
    %613 = vmatpush2.msra.mxu0 0.0
    %614 = vmatprep.subr.mxu0 0.0
    %615 = vmatpush2.msra.mxu0 0.0
    %616 = vmatprep.subr.mxu0 0.0
    %617 = vmatpush2.msra.mxu0 0.0
    %618 = vmatprep.subr.mxu0 0.0
    %619 = vmatpush2.msra.mxu0 0.0
    %620 = vmatprep.subr.mxu0 0.0
    %621 = vmatpush2.msra.mxu0 0.0
    %622 = vmatprep.subr.mxu0 0.0
    %623 = vmatpush2.msra.mxu0 0.0
    %624 = vmatprep.subr.mxu0 0.0
    %625 = vmatpush2.msra.mxu0 0.0
    %626 = vmatprep.subr.mxu0 0.0
    %627 = vmatpush2.msra.mxu0 0.0
    %628 = vmatprep.subr.mxu0 0.0
    %629 = vmatpush2.msra.mxu0 0.0
    %630 = vmatprep.mubr.f32.mxu0 0.0
    %v631 = vand.u32 %v93, 4294901760
    %632 = vmatmul.mubr.f32.gmra.mxu0 %v631
    %v633 = vpop.f32.mrf.mxu0
    %v634 = vadd.f32 %v554, %v633
    %v635 = vpop.f32.mrf.mxu0
    %v636 = vadd.f32 %v556, %v635
    %637 = vdwg.mxu0
    %638 = vmatprep.subr.mxu0 0.0
    %639 = vmatpush1.msra.mxu0 0.0
    %640 = vmatprep.subr.mxu0 0.0
    %641 = vmatpush1.msra.mxu0 0.0
    %642 = vmatprep.subr.mxu0 0.0
    %643 = vmatpush1.msra.mxu0 0.0
    %644 = vmatprep.subr.mxu0 0.0
    %645 = vmatpush1.msra.mxu0 0.0
    %646 = vmatprep.subr.mxu0 0.0
    %647 = vmatpush1.msra.mxu0 0.0
    %648 = vmatprep.subr.mxu0 0.0
    %649 = vmatpush1.msra.mxu0 0.0
    %650 = vmatprep.subr.mxu0 0.0
    %651 = vmatpush1.msra.mxu0 0.0
    %652 = vmatprep.subr.mxu0 0.0
    %653 = vmatpush1.msra.mxu0 0.0
    %654 = vmatprep.subr.mxu0 0.0
    %655 = vmatpush1.msra.mxu0 0.0
    %656 = vmatprep.subr.mxu0 0.0
    %657 = vmatpush1.msra.mxu0 0.0
    %658 = vmatprep.subr.mxu0 0.0
    %659 = vmatpush1.msra.mxu0 0.0
    %660 = vmatprep.subr.mxu0 0.0
    %661 = vmatpush1.msra.mxu0 0.0
    %v662 = vand.u32 %v68, 4294901760
    %663 = vmatprep.subr.mxu0 %v662
    %v664 = vand.u32 %v67, 4294901760
    %665 = vmatpush1.msra.mxu0 %v664
    %v666 = vand.u32 %v64, 4294901760
    %667 = vmatprep.subr.mxu0 %v666
    %v668 = vand.u32 %v63, 4294901760
    %669 = vmatpush1.msra.mxu0 %v668
    %v670 = vand.u32 %v60, 4294901760
    %671 = vmatprep.subr.mxu0 %v670
    %v672 = vand.u32 %v59, 4294901760
    %673 = vmatpush1.msra.mxu0 %v672
    %v674 = vand.u32 %v56, 4294901760
    %675 = vmatprep.subr.mxu0 %v674
    %v676 = vand.u32 %v55, 4294901760
    %677 = vmatpush1.msra.mxu0 %v676
    %678 = vmatprep.subr.mxu0 0.0
    %679 = vmatpush2.msra.mxu0 0.0
    %680 = vmatprep.subr.mxu0 0.0
    %681 = vmatpush2.msra.mxu0 0.0
    %682 = vmatprep.subr.mxu0 0.0
    %683 = vmatpush2.msra.mxu0 0.0
    %684 = vmatprep.subr.mxu0 0.0
    %685 = vmatpush2.msra.mxu0 0.0
    %686 = vmatprep.subr.mxu0 0.0
    %687 = vmatpush2.msra.mxu0 0.0
    %688 = vmatprep.subr.mxu0 0.0
    %689 = vmatpush2.msra.mxu0 0.0
    %690 = vmatprep.subr.mxu0 0.0
    %691 = vmatpush2.msra.mxu0 0.0
    %692 = vmatprep.subr.mxu0 0.0
    %693 = vmatpush2.msra.mxu0 0.0
    %694 = vmatprep.subr.mxu0 0.0
    %695 = vmatpush2.msra.mxu0 0.0
    %696 = vmatprep.subr.mxu0 0.0
    %697 = vmatpush2.msra.mxu0 0.0
    %698 = vmatprep.subr.mxu0 0.0
    %699 = vmatpush2.msra.mxu0 0.0
    %700 = vmatprep.subr.mxu0 0.0
    %701 = vmatpush2.msra.mxu0 0.0
    %702 = vmatprep.subr.mxu0 0.0
    %703 = vmatpush2.msra.mxu0 0.0
    %704 = vmatprep.subr.mxu0 0.0
    %705 = vmatpush2.msra.mxu0 0.0
    %706 = vmatprep.subr.mxu0 0.0
    %707 = vmatpush2.msra.mxu0 0.0
    %708 = vmatprep.subr.mxu0 0.0
    %709 = vmatpush2.msra.mxu0 0.0
    %710 = vmatprep.mubr.f32.mxu0 0.0
    %v711 = vand.u32 %v93, 4294901760
    %v712 = vsub.f32 %v93, %v711
    %v713 = vand.u32 %v712, 4294901760
    %v714 = vsub.f32 %v712, %v713
    %v715 = vand.u32 %v714, 4294901760
    %716 = vmatmul.mubr.f32.gmra.mxu0 %v715
    %v717 = vpop.f32.mrf.mxu0
    %v718 = vadd.f32 %v82, %v717
    %v719 = vpop.f32.mrf.mxu0
    %v720 = vadd.f32 %v86, %v719
    %721 = vdwg.mxu0
    %722 = vmatprep.subr.mxu0 0.0
    %723 = vmatpush1.msra.mxu0 0.0
    %724 = vmatprep.subr.mxu0 0.0
    %725 = vmatpush1.msra.mxu0 0.0
    %726 = vmatprep.subr.mxu0 0.0
    %727 = vmatpush1.msra.mxu0 0.0
    %728 = vmatprep.subr.mxu0 0.0
    %729 = vmatpush1.msra.mxu0 0.0
    %730 = vmatprep.subr.mxu0 0.0
    %731 = vmatpush1.msra.mxu0 0.0
    %732 = vmatprep.subr.mxu0 0.0
    %733 = vmatpush1.msra.mxu0 0.0
    %734 = vmatprep.subr.mxu0 0.0
    %735 = vmatpush1.msra.mxu0 0.0
    %736 = vmatprep.subr.mxu0 0.0
    %737 = vmatpush1.msra.mxu0 0.0
    %738 = vmatprep.subr.mxu0 0.0
    %739 = vmatpush1.msra.mxu0 0.0
    %740 = vmatprep.subr.mxu0 0.0
    %741 = vmatpush1.msra.mxu0 0.0
    %742 = vmatprep.subr.mxu0 0.0
    %743 = vmatpush1.msra.mxu0 0.0
    %744 = vmatprep.subr.mxu0 0.0
    %745 = vmatpush1.msra.mxu0 0.0
    %v746 = vand.u32 %v68, 4294901760
    %v747 = vsub.f32 %v68, %v746
    %v748 = vand.u32 %v747, 4294901760
    %v749 = vsub.f32 %v747, %v748
    %v750 = vand.u32 %v749, 4294901760
    %751 = vmatprep.subr.mxu0 %v750
    %v752 = vand.u32 %v67, 4294901760
    %v753 = vsub.f32 %v67, %v752
    %v754 = vand.u32 %v753, 4294901760
    %v755 = vsub.f32 %v753, %v754
    %v756 = vand.u32 %v755, 4294901760
    %757 = vmatpush1.msra.mxu0 %v756
    %v758 = vand.u32 %v64, 4294901760
    %v759 = vsub.f32 %v64, %v758
    %v760 = vand.u32 %v759, 4294901760
    %v761 = vsub.f32 %v759, %v760
    %v762 = vand.u32 %v761, 4294901760
    %763 = vmatprep.subr.mxu0 %v762
    %v764 = vand.u32 %v63, 4294901760
    %v765 = vsub.f32 %v63, %v764
    %v766 = vand.u32 %v765, 4294901760
    %v767 = vsub.f32 %v765, %v766
    %v768 = vand.u32 %v767, 4294901760
    %769 = vmatpush1.msra.mxu0 %v768
    %v770 = vand.u32 %v60, 4294901760
    %v771 = vsub.f32 %v60, %v770
    %v772 = vand.u32 %v771, 4294901760
    %v773 = vsub.f32 %v771, %v772
    %v774 = vand.u32 %v773, 4294901760
    %775 = vmatprep.subr.mxu0 %v774
    %v776 = vand.u32 %v59, 4294901760
    %v777 = vsub.f32 %v59, %v776
    %v778 = vand.u32 %v777, 4294901760
    %v779 = vsub.f32 %v777, %v778
    %v780 = vand.u32 %v779, 4294901760
    %781 = vmatpush1.msra.mxu0 %v780
    %v782 = vand.u32 %v56, 4294901760
    %v783 = vsub.f32 %v56, %v782
    %v784 = vand.u32 %v783, 4294901760
    %v785 = vsub.f32 %v783, %v784
    %v786 = vand.u32 %v785, 4294901760
    %787 = vmatprep.subr.mxu0 %v786
    %v788 = vand.u32 %v55, 4294901760
    %v789 = vsub.f32 %v55, %v788
    %v790 = vand.u32 %v789, 4294901760
    %v791 = vsub.f32 %v789, %v790
    %v792 = vand.u32 %v791, 4294901760
    %793 = vmatpush1.msra.mxu0 %v792
    %794 = vmatprep.subr.mxu0 0.0
    %795 = vmatpush2.msra.mxu0 0.0
    %796 = vmatprep.subr.mxu0 0.0
    %797 = vmatpush2.msra.mxu0 0.0
    %798 = vmatprep.subr.mxu0 0.0
    %799 = vmatpush2.msra.mxu0 0.0
    %800 = vmatprep.subr.mxu0 0.0
    %801 = vmatpush2.msra.mxu0 0.0
    %802 = vmatprep.subr.mxu0 0.0
    %803 = vmatpush2.msra.mxu0 0.0
    %804 = vmatprep.subr.mxu0 0.0
    %805 = vmatpush2.msra.mxu0 0.0
    %806 = vmatprep.subr.mxu0 0.0
    %807 = vmatpush2.msra.mxu0 0.0
    %808 = vmatprep.subr.mxu0 0.0
    %809 = vmatpush2.msra.mxu0 0.0
    %810 = vmatprep.subr.mxu0 0.0
    %811 = vmatpush2.msra.mxu0 0.0
    %812 = vmatprep.subr.mxu0 0.0
    %813 = vmatpush2.msra.mxu0 0.0
    %814 = vmatprep.subr.mxu0 0.0
    %815 = vmatpush2.msra.mxu0 0.0
    %816 = vmatprep.subr.mxu0 0.0
    %817 = vmatpush2.msra.mxu0 0.0
    %818 = vmatprep.subr.mxu0 0.0
    %819 = vmatpush2.msra.mxu0 0.0
    %820 = vmatprep.subr.mxu0 0.0
    %821 = vmatpush2.msra.mxu0 0.0
    %822 = vmatprep.subr.mxu0 0.0
    %823 = vmatpush2.msra.mxu0 0.0
    %824 = vmatprep.subr.mxu0 0.0
    %825 = vmatpush2.msra.mxu0 0.0
    %826 = vmatprep.mubr.f32.mxu0 0.0
    %v827 = vand.u32 %v93, 4294901760
    %828 = vmatmul.mubr.f32.gmra.mxu0 %v827
    %v829 = vpop.f32.mrf.mxu0
    %v830 = vadd.f32 %v718, %v829
    %v831 = vpop.f32.mrf.mxu0
    %v832 = vadd.f32 %v720, %v831
    %833 = vdwg.mxu0
    %834 = vmatprep.subr.mxu0 0.0
    %835 = vmatpush1.msra.mxu0 0.0
    %836 = vmatprep.subr.mxu0 0.0
    %837 = vmatpush1.msra.mxu0 0.0
    %838 = vmatprep.subr.mxu0 0.0
    %839 = vmatpush1.msra.mxu0 0.0
    %840 = vmatprep.subr.mxu0 0.0
    %841 = vmatpush1.msra.mxu0 0.0
    %842 = vmatprep.subr.mxu0 0.0
    %843 = vmatpush1.msra.mxu0 0.0
    %844 = vmatprep.subr.mxu0 0.0
    %845 = vmatpush1.msra.mxu0 0.0
    %846 = vmatprep.subr.mxu0 0.0
    %847 = vmatpush1.msra.mxu0 0.0
    %848 = vmatprep.subr.mxu0 0.0
    %849 = vmatpush1.msra.mxu0 0.0
    %850 = vmatprep.subr.mxu0 0.0
    %851 = vmatpush1.msra.mxu0 0.0
    %852 = vmatprep.subr.mxu0 0.0
    %853 = vmatpush1.msra.mxu0 0.0
    %854 = vmatprep.subr.mxu0 0.0
    %855 = vmatpush1.msra.mxu0 0.0
    %856 = vmatprep.subr.mxu0 0.0
    %857 = vmatpush1.msra.mxu0 0.0
    %v858 = vand.u32 %v68, 4294901760
    %v859 = vsub.f32 %v68, %v858
    %860 = vmatprep.subr.mxu0 %v859
    %v861 = vand.u32 %v67, 4294901760
    %v862 = vsub.f32 %v67, %v861
    %863 = vmatpush1.msra.mxu0 %v862
    %v864 = vand.u32 %v64, 4294901760
    %v865 = vsub.f32 %v64, %v864
    %866 = vmatprep.subr.mxu0 %v865
    %v867 = vand.u32 %v63, 4294901760
    %v868 = vsub.f32 %v63, %v867
    %869 = vmatpush1.msra.mxu0 %v868
    %v870 = vand.u32 %v60, 4294901760
    %v871 = vsub.f32 %v60, %v870
    %872 = vmatprep.subr.mxu0 %v871
    %v873 = vand.u32 %v59, 4294901760
    %v874 = vsub.f32 %v59, %v873
    %875 = vmatpush1.msra.mxu0 %v874
    %v876 = vand.u32 %v56, 4294901760
    %v877 = vsub.f32 %v56, %v876
    %878 = vmatprep.subr.mxu0 %v877
    %v879 = vand.u32 %v55, 4294901760
    %v880 = vsub.f32 %v55, %v879
    %881 = vmatpush1.msra.mxu0 %v880
    %882 = vmatprep.subr.mxu0 0.0
    %883 = vmatpush2.msra.mxu0 0.0
    %884 = vmatprep.subr.mxu0 0.0
    %885 = vmatpush2.msra.mxu0 0.0
    %886 = vmatprep.subr.mxu0 0.0
    %887 = vmatpush2.msra.mxu0 0.0
    %888 = vmatprep.subr.mxu0 0.0
    %889 = vmatpush2.msra.mxu0 0.0
    %890 = vmatprep.subr.mxu0 0.0
    %891 = vmatpush2.msra.mxu0 0.0
    %892 = vmatprep.subr.mxu0 0.0
    %893 = vmatpush2.msra.mxu0 0.0
    %894 = vmatprep.subr.mxu0 0.0
    %895 = vmatpush2.msra.mxu0 0.0
    %896 = vmatprep.subr.mxu0 0.0
    %897 = vmatpush2.msra.mxu0 0.0
    %898 = vmatprep.subr.mxu0 0.0
    %899 = vmatpush2.msra.mxu0 0.0
    %900 = vmatprep.subr.mxu0 0.0
    %901 = vmatpush2.msra.mxu0 0.0
    %902 = vmatprep.subr.mxu0 0.0
    %903 = vmatpush2.msra.mxu0 0.0
    %904 = vmatprep.subr.mxu0 0.0
    %905 = vmatpush2.msra.mxu0 0.0
    %906 = vmatprep.subr.mxu0 0.0
    %907 = vmatpush2.msra.mxu0 0.0
    %908 = vmatprep.subr.mxu0 0.0
    %909 = vmatpush2.msra.mxu0 0.0
    %910 = vmatprep.subr.mxu0 0.0
    %911 = vmatpush2.msra.mxu0 0.0
    %912 = vmatprep.subr.mxu0 0.0
    %913 = vmatpush2.msra.mxu0 0.0
    %914 = vmatprep.mubr.f32.mxu0 0.0
    %v915 = vand.u32 %v93, 4294901760
    %v916 = vsub.f32 %v93, %v915
    %917 = vmatmul.mubr.f32.gmra.mxu0 %v916
    %v918 = vpop.f32.mrf.mxu0
    %v919 = vadd.f32 %v830, %v918
    %v920 = vpop.f32.mrf.mxu0
    %v921 = vadd.f32 %v832, %v920
    %922 = vdwg.mxu0
    %923 = vmatprep.subr.mxu0 0.0
    %924 = vmatpush1.msra.mxu0 0.0
    %925 = vmatprep.subr.mxu0 0.0
    %926 = vmatpush1.msra.mxu0 0.0
    %927 = vmatprep.subr.mxu0 0.0
    %928 = vmatpush1.msra.mxu0 0.0
    %929 = vmatprep.subr.mxu0 0.0
    %930 = vmatpush1.msra.mxu0 0.0
    %931 = vmatprep.subr.mxu0 0.0
    %932 = vmatpush1.msra.mxu0 0.0
    %933 = vmatprep.subr.mxu0 0.0
    %934 = vmatpush1.msra.mxu0 0.0
    %935 = vmatprep.subr.mxu0 0.0
    %936 = vmatpush1.msra.mxu0 0.0
    %937 = vmatprep.subr.mxu0 0.0
    %938 = vmatpush1.msra.mxu0 0.0
    %939 = vmatprep.subr.mxu0 0.0
    %940 = vmatpush1.msra.mxu0 0.0
    %941 = vmatprep.subr.mxu0 0.0
    %942 = vmatpush1.msra.mxu0 0.0
    %943 = vmatprep.subr.mxu0 0.0
    %944 = vmatpush1.msra.mxu0 0.0
    %945 = vmatprep.subr.mxu0 0.0
    %946 = vmatpush1.msra.mxu0 0.0
    %v947 = vand.u32 %v68, 4294901760
    %948 = vmatprep.subr.mxu0 %v947
    %v949 = vand.u32 %v67, 4294901760
    %950 = vmatpush1.msra.mxu0 %v949
    %v951 = vand.u32 %v64, 4294901760
    %952 = vmatprep.subr.mxu0 %v951
    %v953 = vand.u32 %v63, 4294901760
    %954 = vmatpush1.msra.mxu0 %v953
    %v955 = vand.u32 %v60, 4294901760
    %956 = vmatprep.subr.mxu0 %v955
    %v957 = vand.u32 %v59, 4294901760
    %958 = vmatpush1.msra.mxu0 %v957
    %v959 = vand.u32 %v56, 4294901760
    %960 = vmatprep.subr.mxu0 %v959
    %v961 = vand.u32 %v55, 4294901760
    %962 = vmatpush1.msra.mxu0 %v961
    %963 = vmatprep.subr.mxu0 0.0
    %964 = vmatpush2.msra.mxu0 0.0
    %965 = vmatprep.subr.mxu0 0.0
    %966 = vmatpush2.msra.mxu0 0.0
    %967 = vmatprep.subr.mxu0 0.0
    %968 = vmatpush2.msra.mxu0 0.0
    %969 = vmatprep.subr.mxu0 0.0
    %970 = vmatpush2.msra.mxu0 0.0
    %971 = vmatprep.subr.mxu0 0.0
    %972 = vmatpush2.msra.mxu0 0.0
    %973 = vmatprep.subr.mxu0 0.0
    %974 = vmatpush2.msra.mxu0 0.0
    %975 = vmatprep.subr.mxu0 0.0
    %976 = vmatpush2.msra.mxu0 0.0
    %977 = vmatprep.subr.mxu0 0.0
    %978 = vmatpush2.msra.mxu0 0.0
    %979 = vmatprep.subr.mxu0 0.0
    %980 = vmatpush2.msra.mxu0 0.0
    %981 = vmatprep.subr.mxu0 0.0
    %982 = vmatpush2.msra.mxu0 0.0
    %983 = vmatprep.subr.mxu0 0.0
    %984 = vmatpush2.msra.mxu0 0.0
    %985 = vmatprep.subr.mxu0 0.0
    %986 = vmatpush2.msra.mxu0 0.0
    %987 = vmatprep.subr.mxu0 0.0
    %988 = vmatpush2.msra.mxu0 0.0
    %989 = vmatprep.subr.mxu0 0.0
    %990 = vmatpush2.msra.mxu0 0.0
    %991 = vmatprep.subr.mxu0 0.0
    %992 = vmatpush2.msra.mxu0 0.0
    %993 = vmatprep.subr.mxu0 0.0
    %994 = vmatpush2.msra.mxu0 0.0
    %995 = vmatprep.mubr.f32.mxu0 0.0
    %v996 = vand.u32 %v93, 4294901760
    %v997 = vsub.f32 %v93, %v996
    %v998 = vand.u32 %v997, 4294901760
    %999 = vmatmul.mubr.f32.gmra.mxu0 %v998
    %v1000 = vpop.f32.mrf.mxu0
    %v1001 = vadd.f32 %v919, %v1000
    %v1002 = vpop.f32.mrf.mxu0
    %v1003 = vadd.f32 %v921, %v1002
    %1004 = vdwg.mxu0
    %1005 = vmatprep.subr.mxu0 0.0
    %1006 = vmatpush1.msra.mxu0 0.0
    %1007 = vmatprep.subr.mxu0 0.0
    %1008 = vmatpush1.msra.mxu0 0.0
    %1009 = vmatprep.subr.mxu0 0.0
    %1010 = vmatpush1.msra.mxu0 0.0
    %1011 = vmatprep.subr.mxu0 0.0
    %1012 = vmatpush1.msra.mxu0 0.0
    %1013 = vmatprep.subr.mxu0 0.0
    %1014 = vmatpush1.msra.mxu0 0.0
    %1015 = vmatprep.subr.mxu0 0.0
    %1016 = vmatpush1.msra.mxu0 0.0
    %1017 = vmatprep.subr.mxu0 0.0
    %1018 = vmatpush1.msra.mxu0 0.0
    %1019 = vmatprep.subr.mxu0 0.0
    %1020 = vmatpush1.msra.mxu0 0.0
    %1021 = vmatprep.subr.mxu0 0.0
    %1022 = vmatpush1.msra.mxu0 0.0
    %1023 = vmatprep.subr.mxu0 0.0
    %1024 = vmatpush1.msra.mxu0 0.0
    %1025 = vmatprep.subr.mxu0 0.0
    %1026 = vmatpush1.msra.mxu0 0.0
    %1027 = vmatprep.subr.mxu0 0.0
    %1028 = vmatpush1.msra.mxu0 0.0
    %v1029 = vand.u32 %v68, 4294901760
    %v1030 = vsub.f32 %v68, %v1029
    %v1031 = vand.u32 %v1030, 4294901760
    %1032 = vmatprep.subr.mxu0 %v1031
    %v1033 = vand.u32 %v67, 4294901760
    %v1034 = vsub.f32 %v67, %v1033
    %v1035 = vand.u32 %v1034, 4294901760
    %1036 = vmatpush1.msra.mxu0 %v1035
    %v1037 = vand.u32 %v64, 4294901760
    %v1038 = vsub.f32 %v64, %v1037
    %v1039 = vand.u32 %v1038, 4294901760
    %1040 = vmatprep.subr.mxu0 %v1039
    %v1041 = vand.u32 %v63, 4294901760
    %v1042 = vsub.f32 %v63, %v1041
    %v1043 = vand.u32 %v1042, 4294901760
    %1044 = vmatpush1.msra.mxu0 %v1043
    %v1045 = vand.u32 %v60, 4294901760
    %v1046 = vsub.f32 %v60, %v1045
    %v1047 = vand.u32 %v1046, 4294901760
    %1048 = vmatprep.subr.mxu0 %v1047
    %v1049 = vand.u32 %v59, 4294901760
    %v1050 = vsub.f32 %v59, %v1049
    %v1051 = vand.u32 %v1050, 4294901760
    %1052 = vmatpush1.msra.mxu0 %v1051
    %v1053 = vand.u32 %v56, 4294901760
    %v1054 = vsub.f32 %v56, %v1053
    %v1055 = vand.u32 %v1054, 4294901760
    %1056 = vmatprep.subr.mxu0 %v1055
    %v1057 = vand.u32 %v55, 4294901760
    %v1058 = vsub.f32 %v55, %v1057
    %v1059 = vand.u32 %v1058, 4294901760
    %1060 = vmatpush1.msra.mxu0 %v1059
    %1061 = vmatprep.subr.mxu0 0.0
    %1062 = vmatpush2.msra.mxu0 0.0
    %1063 = vmatprep.subr.mxu0 0.0
    %1064 = vmatpush2.msra.mxu0 0.0
    %1065 = vmatprep.subr.mxu0 0.0
    %1066 = vmatpush2.msra.mxu0 0.0
    %1067 = vmatprep.subr.mxu0 0.0
    %1068 = vmatpush2.msra.mxu0 0.0
    %1069 = vmatprep.subr.mxu0 0.0
    %1070 = vmatpush2.msra.mxu0 0.0
    %1071 = vmatprep.subr.mxu0 0.0
    %1072 = vmatpush2.msra.mxu0 0.0
    %1073 = vmatprep.subr.mxu0 0.0
    %1074 = vmatpush2.msra.mxu0 0.0
    %1075 = vmatprep.subr.mxu0 0.0
    %1076 = vmatpush2.msra.mxu0 0.0
    %1077 = vmatprep.subr.mxu0 0.0
    %1078 = vmatpush2.msra.mxu0 0.0
    %1079 = vmatprep.subr.mxu0 0.0
    %1080 = vmatpush2.msra.mxu0 0.0
    %1081 = vmatprep.subr.mxu0 0.0
    %1082 = vmatpush2.msra.mxu0 0.0
    %1083 = vmatprep.subr.mxu0 0.0
    %1084 = vmatpush2.msra.mxu0 0.0
    %1085 = vmatprep.subr.mxu0 0.0
    %1086 = vmatpush2.msra.mxu0 0.0
    %1087 = vmatprep.subr.mxu0 0.0
    %1088 = vmatpush2.msra.mxu0 0.0
    %1089 = vmatprep.subr.mxu0 0.0
    %1090 = vmatpush2.msra.mxu0 0.0
    %1091 = vmatprep.subr.mxu0 0.0
    %1092 = vmatpush2.msra.mxu0 0.0
    %1093 = vmatprep.mubr.f32.mxu0 0.0
    %v1094 = vand.u32 %v93, 4294901760
    %1095 = vmatmul.mubr.f32.gmra.mxu0 %v1094
    %v1096 = vpop.f32.mrf.mxu0
    %v1097 = vadd.f32 %v1001, %v1096
    %v1098 = vpop.f32.mrf.mxu0
    %v1099 = vadd.f32 %v1003, %v1098
    %1100 = vdwg.mxu0
    %1101 = vmatprep.subr.mxu0 0.0
    %1102 = vmatpush1.msra.mxu0 0.0
    %1103 = vmatprep.subr.mxu0 0.0
    %1104 = vmatpush1.msra.mxu0 0.0
    %1105 = vmatprep.subr.mxu0 0.0
    %1106 = vmatpush1.msra.mxu0 0.0
    %1107 = vmatprep.subr.mxu0 0.0
    %1108 = vmatpush1.msra.mxu0 0.0
    %1109 = vmatprep.subr.mxu0 0.0
    %1110 = vmatpush1.msra.mxu0 0.0
    %1111 = vmatprep.subr.mxu0 0.0
    %1112 = vmatpush1.msra.mxu0 0.0
    %1113 = vmatprep.subr.mxu0 0.0
    %1114 = vmatpush1.msra.mxu0 0.0
    %1115 = vmatprep.subr.mxu0 0.0
    %1116 = vmatpush1.msra.mxu0 0.0
    %1117 = vmatprep.subr.mxu0 0.0
    %1118 = vmatpush1.msra.mxu0 0.0
    %1119 = vmatprep.subr.mxu0 0.0
    %1120 = vmatpush1.msra.mxu0 0.0
    %1121 = vmatprep.subr.mxu0 0.0
    %1122 = vmatpush1.msra.mxu0 0.0
    %1123 = vmatprep.subr.mxu0 0.0
    %1124 = vmatpush1.msra.mxu0 0.0
    %v1125 = vand.u32 %v68, 4294901760
    %1126 = vmatprep.subr.mxu0 %v1125
    %v1127 = vand.u32 %v67, 4294901760
    %1128 = vmatpush1.msra.mxu0 %v1127
    %v1129 = vand.u32 %v64, 4294901760
    %1130 = vmatprep.subr.mxu0 %v1129
    %v1131 = vand.u32 %v63, 4294901760
    %1132 = vmatpush1.msra.mxu0 %v1131
    %v1133 = vand.u32 %v60, 4294901760
    %1134 = vmatprep.subr.mxu0 %v1133
    %v1135 = vand.u32 %v59, 4294901760
    %1136 = vmatpush1.msra.mxu0 %v1135
    %v1137 = vand.u32 %v56, 4294901760
    %1138 = vmatprep.subr.mxu0 %v1137
    %v1139 = vand.u32 %v55, 4294901760
    %1140 = vmatpush1.msra.mxu0 %v1139
    %1141 = vmatprep.subr.mxu0 0.0
    %1142 = vmatpush2.msra.mxu0 0.0
    %1143 = vmatprep.subr.mxu0 0.0
    %1144 = vmatpush2.msra.mxu0 0.0
    %1145 = vmatprep.subr.mxu0 0.0
    %1146 = vmatpush2.msra.mxu0 0.0
    %1147 = vmatprep.subr.mxu0 0.0
    %1148 = vmatpush2.msra.mxu0 0.0
    %1149 = vmatprep.subr.mxu0 0.0
    %1150 = vmatpush2.msra.mxu0 0.0
    %1151 = vmatprep.subr.mxu0 0.0
    %1152 = vmatpush2.msra.mxu0 0.0
    %1153 = vmatprep.subr.mxu0 0.0
    %1154 = vmatpush2.msra.mxu0 0.0
    %1155 = vmatprep.subr.mxu0 0.0
    %1156 = vmatpush2.msra.mxu0 0.0
    %1157 = vmatprep.subr.mxu0 0.0
    %1158 = vmatpush2.msra.mxu0 0.0
    %1159 = vmatprep.subr.mxu0 0.0
    %1160 = vmatpush2.msra.mxu0 0.0
    %1161 = vmatprep.subr.mxu0 0.0
    %1162 = vmatpush2.msra.mxu0 0.0
    %1163 = vmatprep.subr.mxu0 0.0
    %1164 = vmatpush2.msra.mxu0 0.0
    %1165 = vmatprep.subr.mxu0 0.0
    %1166 = vmatpush2.msra.mxu0 0.0
    %1167 = vmatprep.subr.mxu0 0.0
    %1168 = vmatpush2.msra.mxu0 0.0
    %1169 = vmatprep.subr.mxu0 0.0
    %1170 = vmatpush2.msra.mxu0 0.0
    %1171 = vmatprep.subr.mxu0 0.0
    %1172 = vmatpush2.msra.mxu0 0.0
    %1173 = vmatprep.mubr.f32.mxu0 0.0
    %v1174 = vand.u32 %v93, 4294901760
    %1175 = vmatmul.mubr.f32.gmra.mxu0 %v1174
    %v1176 = vpop.f32.mrf.mxu0
    %v1177 = vadd.f32 %v1097, %v1176
    %v1178 = vpop.f32.mrf.mxu0
    %v1179 = vadd.f32 %v1099, %v1178
    %1180 = vdwg.mxu0
    %v1181 = vand.u32 2147483647, %v634
    %vm1182 = vcmp.le.f32.partialorder %v1181, 0.7853982
    %vm1183 = vcmp.lt.s32.totalorder %v634, 0
    %v1184 = vand.u32 %v634, 2139095040
    %v1185 = vshrl.u32 %v1184, 23
    %v1186 = vsub.s32 %v1185, 127
    %v1187 = vand.u32 2147483647, %v634
    %v1188 = vand.u32 %v1187, 8388607
    %v1189 = vor.u32 %v1188, 8388608
    %v1190 = vsub.s32 0, %v1189
    %v1191 = vadd.s32 %v1186, 1
    %vm1192 = vcmp.gt.s32.totalorder %v1191, 0
    %v1193 = vsel %vm1192, %v1191, 0
    %v1194 = vshrl.u32 %v1193, 5
    %v1195 = vand.u32 %v1193, 31
    %v1196 = vsub.s32 32, %v1195
    %v1197 = vshrl.u32 683565275, %v1196
    %v1198 = vshll.u32 683565275, %v1195
    %v1199 = vshrl.u32 2475754826, %v1196
    %v1200 = vor.u32 %v1198, %v1199
    %v1201 = vshll.u32 2475754826, %v1195
    %v1202 = vshrl.u32 2131351028, %v1196
    %v1203 = vor.u32 %v1201, %v1202
    %v1204 = vshll.u32 2131351028, %v1195
    %v1205 = vshrl.u32 2102212464, %v1196
    %v1206 = vor.u32 %v1204, %v1205
    %v1207 = vshll.u32 2102212464, %v1195
    %v1208 = vshrl.u32 920167782, %v1196
    %v1209 = vor.u32 %v1207, %v1208
    %v1210 = vshll.u32 920167782, %v1195
    %v1211 = vshrl.u32 1326507024, %v1196
    %v1212 = vor.u32 %v1210, %v1211
    %vm1213 = vcmp.lt.s32.totalorder %v1194, 1
    %vm1214 = vcmp.lt.s32.totalorder %v1194, 2
    %vm1215 = vcmp.lt.s32.totalorder %v1194, 3
    %vm1216 = vcmp.lt.s32.totalorder %v1194, 4
    %v1217 = vsel %vm1213, %v1197, %v1200
    %v1218 = vsel %vm1216, %v1206, 2102212464
    %v1219 = vsel %vm1215, %v1203, %v1218
    %v1220 = vsel %vm1214, %v1217, %v1219
    %v1221 = vsel %vm1213, %v1200, %v1203
    %v1222 = vsel %vm1216, %v1209, 920167782
    %v1223 = vsel %vm1215, %v1206, %v1222
    %v1224 = vsel %vm1214, %v1221, %v1223
    %v1225 = vsel %vm1213, %v1203, %v1206
    %v1226 = vsel %vm1216, %v1212, 1326507024
    %v1227 = vsel %vm1215, %v1209, %v1226
    %v1228 = vsel %vm1214, %v1225, %v1227
    %v1229 = vshll.u32 %v1189, 8
    %v1230 = vmul.u32.u64.compose %v1229, %v1228
    %v1231 = vextract.low.u32 %v1230
    %v1232 = vextract.high.u32 %v1230
    %v1233 = vmul.u32.u64.compose %v1229, %v1224
    %v1234 = vextract.low.u32 %v1233
    %v1235 = vextract.high.u32 %v1233
    %v1236 = vmul.u32 %v1229, %v1220
    %v1237 = vadd.s32 %v1232, %v1234
    %vm1238 = vc.u32 %v1232, %v1234
    %v1239 = vadd.s32 %v1235, 1
    %v1240 = vsel %vm1238, %v1239, %v1235
    %v1241 = vadd.s32 %v1236, %v1240
    %v1242 = vadd.s32 %v1241, 536870912
    %v1243 = vshrl.u32 %v1242, 30
    %v1244 = vshll.u32 %v1243, 30
    %v1245 = vsub.s32 %v1241, %v1244
    %vm1246 = vcmp.lt.s32.totalorder %v1245, 0
    %v1247 = vsub.s32 0, %v1245
    %v1248 = vsel %vm1246, %v1247, %v1245
    %v1249 = vclz %v1248
    %v1250 = vsub.s32 %v1249, 2
    %vm1251 = vcmp.gt.s32.totalorder 0, %v1250
    %v1252 = vsel %vm1251, 0, %v1250
    %v1253 = vsub.s32 32, %v1252
    %v1254 = vshll.u32 %v1245, %v1252
    %v1255 = vshrl.u32 %v1237, %v1253
    %v1256 = vor.u32 %v1254, %v1255
    %v1257 = vsub.s32 4294967266, %v1252
    %v1258 = vadd.s32 %v1257, 127
    %v1259 = vshll.u32 %v1258, 23
    %v1260 = vor.u32 4788187, %v1259
    %v1261 = vand.u32 2147483647, %v1260
    %v1263 = vcvt.s32.f32 %v1256
    %v1264 = vmul.f32 %v1263, %v1261
    %v1265 = vxor.u32 %v1264, 2147483648
    %v1266 = vsel %vm1183, %v1265, %v1264
    %v1267 = vsub.s32 4, %v1243
    %v1268 = vsel %vm1183, %v1267, %v1243
    %v1269 = vsel %vm1182, %v634, %v1266
    %v1270 = vsel %vm1182, 0, %v1268
    %v1271 = vcosq.f32.pop %v1269
    %v1272 = vsinq.f32.pop %v1269
    %vm1273 = vweird.f32 %v634
    %v1274 = vadd.s32 %v1270, 3
    %v1275 = vand.u32 %v1274, 3
    %vm1276 = vcmp.lt.s32.totalorder %v1275, 2
    %vm1277 = vcmp.eq.s32.totalorder %v1275, 0
    %v1278 = vxor.u32 %v1272, 2147483648
    %v1279 = vsel %vm1277, %v1271, %v1278
    %vm1280 = vcmp.eq.s32.totalorder %v1275, 2
    %v1281 = vxor.u32 %v1271, 2147483648
    %v1282 = vsel %vm1280, %v1281, %v1272
    %v1283 = vsel %vm1276, %v1279, %v1282
    %v1284 = vsel %vm1273, nan, %v1283
    %v1285 = vand.u32 2147483647, %v636
    %vm1286 = vcmp.le.f32.partialorder %v1285, 0.7853982
    %vm1287 = vcmp.lt.s32.totalorder %v636, 0
    %v1288 = vand.u32 %v636, 2139095040
    %v1289 = vshrl.u32 %v1288, 23
    %v1290 = vsub.s32 %v1289, 127
    %v1291 = vand.u32 2147483647, %v636
    %v1292 = vand.u32 %v1291, 8388607
    %v1293 = vor.u32 %v1292, 8388608
    %v1294 = vsub.s32 0, %v1293
    %v1295 = vadd.s32 %v1290, 1
    %vm1296 = vcmp.gt.s32.totalorder %v1295, 0
    %v1297 = vsel %vm1296, %v1295, 0
    %v1298 = vshrl.u32 %v1297, 5
    %v1299 = vand.u32 %v1297, 31
    %v1300 = vsub.s32 32, %v1299
    %v1301 = vshrl.u32 683565275, %v1300
    %v1302 = vshll.u32 683565275, %v1299
    %v1303 = vshrl.u32 2475754826, %v1300
    %v1304 = vor.u32 %v1302, %v1303
    %v1305 = vshll.u32 2475754826, %v1299
    %v1306 = vshrl.u32 2131351028, %v1300
    %v1307 = vor.u32 %v1305, %v1306
    %v1308 = vshll.u32 2131351028, %v1299
    %v1309 = vshrl.u32 2102212464, %v1300
    %v1310 = vor.u32 %v1308, %v1309
    %v1311 = vshll.u32 2102212464, %v1299
    %v1312 = vshrl.u32 920167782, %v1300
    %v1313 = vor.u32 %v1311, %v1312
    %v1314 = vshll.u32 920167782, %v1299
    %v1315 = vshrl.u32 1326507024, %v1300
    %v1316 = vor.u32 %v1314, %v1315
    %vm1317 = vcmp.lt.s32.totalorder %v1298, 1
    %vm1318 = vcmp.lt.s32.totalorder %v1298, 2
    %vm1319 = vcmp.lt.s32.totalorder %v1298, 3
    %vm1320 = vcmp.lt.s32.totalorder %v1298, 4
    %v1321 = vsel %vm1317, %v1301, %v1304
    %v1322 = vsel %vm1320, %v1310, 2102212464
    %v1323 = vsel %vm1319, %v1307, %v1322
    %v1324 = vsel %vm1318, %v1321, %v1323
    %v1325 = vsel %vm1317, %v1304, %v1307
    %v1326 = vsel %vm1320, %v1313, 920167782
    %v1327 = vsel %vm1319, %v1310, %v1326
    %v1328 = vsel %vm1318, %v1325, %v1327
    %v1329 = vsel %vm1317, %v1307, %v1310
    %v1330 = vsel %vm1320, %v1316, 1326507024
    %v1331 = vsel %vm1319, %v1313, %v1330
    %v1332 = vsel %vm1318, %v1329, %v1331
    %v1333 = vshll.u32 %v1293, 8
    %v1334 = vmul.u32.u64.compose %v1333, %v1332
    %v1335 = vextract.low.u32 %v1334
    %v1336 = vextract.high.u32 %v1334
    %v1337 = vmul.u32.u64.compose %v1333, %v1328
    %v1338 = vextract.low.u32 %v1337
    %v1339 = vextract.high.u32 %v1337
    %v1340 = vmul.u32 %v1333, %v1324
    %v1341 = vadd.s32 %v1336, %v1338
    %vm1342 = vc.u32 %v1336, %v1338
    %v1343 = vadd.s32 %v1339, 1
    %v1344 = vsel %vm1342, %v1343, %v1339
    %v1345 = vadd.s32 %v1340, %v1344
    %v1346 = vadd.s32 %v1345, 536870912
    %v1347 = vshrl.u32 %v1346, 30
    %v1348 = vshll.u32 %v1347, 30
    %v1349 = vsub.s32 %v1345, %v1348
    %vm1350 = vcmp.lt.s32.totalorder %v1349, 0
    %v1351 = vsub.s32 0, %v1349
    %v1352 = vsel %vm1350, %v1351, %v1349
    %v1353 = vclz %v1352
    %v1354 = vsub.s32 %v1353, 2
    %vm1355 = vcmp.gt.s32.totalorder 0, %v1354
    %v1356 = vsel %vm1355, 0, %v1354
    %v1357 = vsub.s32 32, %v1356
    %v1358 = vshll.u32 %v1349, %v1356
    %v1359 = vshrl.u32 %v1341, %v1357
    %v1360 = vor.u32 %v1358, %v1359
    %v1361 = vsub.s32 4294967266, %v1356
    %v1362 = vadd.s32 %v1361, 127
    %v1363 = vshll.u32 %v1362, 23
    %v1364 = vor.u32 4788187, %v1363
    %v1365 = vand.u32 2147483647, %v1364
    %v1367 = vcvt.s32.f32 %v1360
    %v1368 = vmul.f32 %v1367, %v1365
    %v1369 = vxor.u32 %v1368, 2147483648
    %v1370 = vsel %vm1287, %v1369, %v1368
    %v1371 = vsub.s32 4, %v1347
    %v1372 = vsel %vm1287, %v1371, %v1347
    %v1373 = vsel %vm1286, %v636, %v1370
    %v1374 = vsel %vm1286, 0, %v1372
    %v1375 = vcosq.f32.pop %v1373
    %v1376 = vsinq.f32.pop %v1373
    %vm1377 = vweird.f32 %v636
    %v1378 = vadd.s32 %v1374, 3
    %v1379 = vand.u32 %v1378, 3
    %vm1380 = vcmp.lt.s32.totalorder %v1379, 2
    %vm1381 = vcmp.eq.s32.totalorder %v1379, 0
    %v1382 = vxor.u32 %v1376, 2147483648
    %v1383 = vsel %vm1381, %v1375, %v1382
    %vm1384 = vcmp.eq.s32.totalorder %v1379, 2
    %v1385 = vxor.u32 %v1375, 2147483648
    %v1386 = vsel %vm1384, %v1385, %v1376
    %v1387 = vsel %vm1380, %v1383, %v1386
    %v1388 = vsel %vm1377, nan, %v1387
    %v1389 = vand.u32 2147483647, %v1177
    %vm1390 = vcmp.le.f32.partialorder %v1389, 0.7853982
    %vm1391 = vcmp.lt.s32.totalorder %v1177, 0
    %v1392 = vand.u32 %v1177, 2139095040
    %v1393 = vshrl.u32 %v1392, 23
    %v1394 = vsub.s32 %v1393, 127
    %v1395 = vand.u32 2147483647, %v1177
    %v1396 = vand.u32 %v1395, 8388607
    %v1397 = vor.u32 %v1396, 8388608
    %v1398 = vsub.s32 0, %v1397
    %v1399 = vadd.s32 %v1394, 1
    %vm1400 = vcmp.gt.s32.totalorder %v1399, 0
    %v1401 = vsel %vm1400, %v1399, 0
    %v1402 = vshrl.u32 %v1401, 5
    %v1403 = vand.u32 %v1401, 31
    %v1404 = vsub.s32 32, %v1403
    %v1405 = vshrl.u32 683565275, %v1404
    %v1406 = vshll.u32 683565275, %v1403
    %v1407 = vshrl.u32 2475754826, %v1404
    %v1408 = vor.u32 %v1406, %v1407
    %v1409 = vshll.u32 2475754826, %v1403
    %v1410 = vshrl.u32 2131351028, %v1404
    %v1411 = vor.u32 %v1409, %v1410
    %v1412 = vshll.u32 2131351028, %v1403
    %v1413 = vshrl.u32 2102212464, %v1404
    %v1414 = vor.u32 %v1412, %v1413
    %v1415 = vshll.u32 2102212464, %v1403
    %v1416 = vshrl.u32 920167782, %v1404
    %v1417 = vor.u32 %v1415, %v1416
    %v1418 = vshll.u32 920167782, %v1403
    %v1419 = vshrl.u32 1326507024, %v1404
    %v1420 = vor.u32 %v1418, %v1419
    %vm1421 = vcmp.lt.s32.totalorder %v1402, 1
    %vm1422 = vcmp.lt.s32.totalorder %v1402, 2
    %vm1423 = vcmp.lt.s32.totalorder %v1402, 3
    %vm1424 = vcmp.lt.s32.totalorder %v1402, 4
    %v1425 = vsel %vm1421, %v1405, %v1408
    %v1426 = vsel %vm1424, %v1414, 2102212464
    %v1427 = vsel %vm1423, %v1411, %v1426
    %v1428 = vsel %vm1422, %v1425, %v1427
    %v1429 = vsel %vm1421, %v1408, %v1411
    %v1430 = vsel %vm1424, %v1417, 920167782
    %v1431 = vsel %vm1423, %v1414, %v1430
    %v1432 = vsel %vm1422, %v1429, %v1431
    %v1433 = vsel %vm1421, %v1411, %v1414
    %v1434 = vsel %vm1424, %v1420, 1326507024
    %v1435 = vsel %vm1423, %v1417, %v1434
    %v1436 = vsel %vm1422, %v1433, %v1435
    %v1437 = vshll.u32 %v1397, 8
    %v1438 = vmul.u32.u64.compose %v1437, %v1436
    %v1439 = vextract.low.u32 %v1438
    %v1440 = vextract.high.u32 %v1438
    %v1441 = vmul.u32.u64.compose %v1437, %v1432
    %v1442 = vextract.low.u32 %v1441
    %v1443 = vextract.high.u32 %v1441
    %v1444 = vmul.u32 %v1437, %v1428
    %v1445 = vadd.s32 %v1440, %v1442
    %vm1446 = vc.u32 %v1440, %v1442
    %v1447 = vadd.s32 %v1443, 1
    %v1448 = vsel %vm1446, %v1447, %v1443
    %v1449 = vadd.s32 %v1444, %v1448
    %v1450 = vadd.s32 %v1449, 536870912
    %v1451 = vshrl.u32 %v1450, 30
    %v1452 = vshll.u32 %v1451, 30
    %v1453 = vsub.s32 %v1449, %v1452
    %vm1454 = vcmp.lt.s32.totalorder %v1453, 0
    %v1455 = vsub.s32 0, %v1453
    %v1456 = vsel %vm1454, %v1455, %v1453
    %v1457 = vclz %v1456
    %v1458 = vsub.s32 %v1457, 2
    %vm1459 = vcmp.gt.s32.totalorder 0, %v1458
    %v1460 = vsel %vm1459, 0, %v1458
    %v1461 = vsub.s32 32, %v1460
    %v1462 = vshll.u32 %v1453, %v1460
    %v1463 = vshrl.u32 %v1445, %v1461
    %v1464 = vor.u32 %v1462, %v1463
    %v1465 = vsub.s32 4294967266, %v1460
    %v1466 = vadd.s32 %v1465, 127
    %v1467 = vshll.u32 %v1466, 23
    %v1468 = vor.u32 4788187, %v1467
    %v1469 = vand.u32 2147483647, %v1468
    %v1471 = vcvt.s32.f32 %v1464
    %v1472 = vmul.f32 %v1471, %v1469
    %v1473 = vxor.u32 %v1472, 2147483648
    %v1474 = vsel %vm1391, %v1473, %v1472
    %v1475 = vsub.s32 4, %v1451
    %v1476 = vsel %vm1391, %v1475, %v1451
    %v1477 = vsel %vm1390, %v1177, %v1474
    %v1478 = vsel %vm1390, 0, %v1476
    %v1479 = vcosq.f32.pop %v1477
    %v1480 = vsinq.f32.pop %v1477
    %vm1481 = vweird.f32 %v1177
    %v1482 = vadd.s32 %v1478, 3
    %v1483 = vand.u32 %v1482, 3
    %vm1484 = vcmp.lt.s32.totalorder %v1483, 2
    %vm1485 = vcmp.eq.s32.totalorder %v1483, 0
    %v1486 = vxor.u32 %v1480, 2147483648
    %v1487 = vsel %vm1485, %v1479, %v1486
    %vm1488 = vcmp.eq.s32.totalorder %v1483, 2
    %v1489 = vxor.u32 %v1479, 2147483648
    %v1490 = vsel %vm1488, %v1489, %v1480
    %v1491 = vsel %vm1484, %v1487, %v1490
    %v1492 = vsel %vm1481, nan, %v1491
    %v1493 = vand.u32 2147483647, %v1179
    %vm1494 = vcmp.le.f32.partialorder %v1493, 0.7853982
    %vm1495 = vcmp.lt.s32.totalorder %v1179, 0
    %v1496 = vand.u32 %v1179, 2139095040
    %v1497 = vshrl.u32 %v1496, 23
    %v1498 = vsub.s32 %v1497, 127
    %v1499 = vand.u32 2147483647, %v1179
    %v1500 = vand.u32 %v1499, 8388607
    %v1501 = vor.u32 %v1500, 8388608
    %v1502 = vsub.s32 0, %v1501
    %v1503 = vadd.s32 %v1498, 1
    %vm1504 = vcmp.gt.s32.totalorder %v1503, 0
    %v1505 = vsel %vm1504, %v1503, 0
    %v1506 = vshrl.u32 %v1505, 5
    %v1507 = vand.u32 %v1505, 31
    %v1508 = vsub.s32 32, %v1507
    %v1509 = vshrl.u32 683565275, %v1508
    %v1510 = vshll.u32 683565275, %v1507
    %v1511 = vshrl.u32 2475754826, %v1508
    %v1512 = vor.u32 %v1510, %v1511
    %v1513 = vshll.u32 2475754826, %v1507
    %v1514 = vshrl.u32 2131351028, %v1508
    %v1515 = vor.u32 %v1513, %v1514
    %v1516 = vshll.u32 2131351028, %v1507
    %v1517 = vshrl.u32 2102212464, %v1508
    %v1518 = vor.u32 %v1516, %v1517
    %v1519 = vshll.u32 2102212464, %v1507
    %v1520 = vshrl.u32 920167782, %v1508
    %v1521 = vor.u32 %v1519, %v1520
    %v1522 = vshll.u32 920167782, %v1507
    %v1523 = vshrl.u32 1326507024, %v1508
    %v1524 = vor.u32 %v1522, %v1523
    %vm1525 = vcmp.lt.s32.totalorder %v1506, 1
    %vm1526 = vcmp.lt.s32.totalorder %v1506, 2
    %vm1527 = vcmp.lt.s32.totalorder %v1506, 3
    %vm1528 = vcmp.lt.s32.totalorder %v1506, 4
    %v1529 = vsel %vm1525, %v1509, %v1512
    %v1530 = vsel %vm1528, %v1518, 2102212464
    %v1531 = vsel %vm1527, %v1515, %v1530
    %v1532 = vsel %vm1526, %v1529, %v1531
    %v1533 = vsel %vm1525, %v1512, %v1515
    %v1534 = vsel %vm1528, %v1521, 920167782
    %v1535 = vsel %vm1527, %v1518, %v1534
    %v1536 = vsel %vm1526, %v1533, %v1535
    %v1537 = vsel %vm1525, %v1515, %v1518
    %v1538 = vsel %vm1528, %v1524, 1326507024
    %v1539 = vsel %vm1527, %v1521, %v1538
    %v1540 = vsel %vm1526, %v1537, %v1539
    %v1541 = vshll.u32 %v1501, 8
    %v1542 = vmul.u32.u64.compose %v1541, %v1540
    %v1543 = vextract.low.u32 %v1542
    %v1544 = vextract.high.u32 %v1542
    %v1545 = vmul.u32.u64.compose %v1541, %v1536
    %v1546 = vextract.low.u32 %v1545
    %v1547 = vextract.high.u32 %v1545
    %v1548 = vmul.u32 %v1541, %v1532
    %v1549 = vadd.s32 %v1544, %v1546
    %vm1550 = vc.u32 %v1544, %v1546
    %v1551 = vadd.s32 %v1547, 1
    %v1552 = vsel %vm1550, %v1551, %v1547
    %v1553 = vadd.s32 %v1548, %v1552
    %v1554 = vadd.s32 %v1553, 536870912
    %v1555 = vshrl.u32 %v1554, 30
    %v1556 = vshll.u32 %v1555, 30
    %v1557 = vsub.s32 %v1553, %v1556
    %vm1558 = vcmp.lt.s32.totalorder %v1557, 0
    %v1559 = vsub.s32 0, %v1557
    %v1560 = vsel %vm1558, %v1559, %v1557
    %v1561 = vclz %v1560
    %v1562 = vsub.s32 %v1561, 2
    %vm1563 = vcmp.gt.s32.totalorder 0, %v1562
    %v1564 = vsel %vm1563, 0, %v1562
    %v1565 = vsub.s32 32, %v1564
    %v1566 = vshll.u32 %v1557, %v1564
    %v1567 = vshrl.u32 %v1549, %v1565
    %v1568 = vor.u32 %v1566, %v1567
    %v1569 = vsub.s32 4294967266, %v1564
    %v1570 = vadd.s32 %v1569, 127
    %v1571 = vshll.u32 %v1570, 23
    %v1572 = vor.u32 4788187, %v1571
    %v1573 = vand.u32 2147483647, %v1572
    %v1575 = vcvt.s32.f32 %v1568
    %v1576 = vmul.f32 %v1575, %v1573
    %v1577 = vxor.u32 %v1576, 2147483648
    %v1578 = vsel %vm1495, %v1577, %v1576
    %v1579 = vsub.s32 4, %v1555
    %v1580 = vsel %vm1495, %v1579, %v1555
    %v1581 = vsel %vm1494, %v1179, %v1578
    %v1582 = vsel %vm1494, 0, %v1580
    %v1583 = vcosq.f32.pop %v1581
    %v1584 = vsinq.f32.pop %v1581
    %vm1585 = vweird.f32 %v1179
    %v1586 = vadd.s32 %v1582, 3
    %v1587 = vand.u32 %v1586, 3
    %vm1588 = vcmp.lt.s32.totalorder %v1587, 2
    %vm1589 = vcmp.eq.s32.totalorder %v1587, 0
    %v1590 = vxor.u32 %v1584, 2147483648
    %v1591 = vsel %vm1589, %v1583, %v1590
    %vm1592 = vcmp.eq.s32.totalorder %v1587, 2
    %v1593 = vxor.u32 %v1583, 2147483648
    %v1594 = vsel %vm1592, %v1593, %v1584
    %v1595 = vsel %vm1588, %v1591, %v1594
    %v1596 = vsel %vm1585, nan, %v1595
    %v1601 = vcombine.low %v1284, %v1388
    %v1602 = vcombine.low %v1492, %v1596
    %v1604 = vunpack.c.l.s4 1983009808
    %v1605 = vunpack.c.0.s8 %v1604
    %v1606 = vlaneseq
    %v1607 = vshrl.u32 %v1606, 7
    %v1608 = vsub.s32 %v1605, %v1607
    %v1609 = vrot.slane %v1601, %v1608
    %v1611 = vunpack.c.l.s4 1983009808
    %v1612 = vunpack.c.0.s8 %v1611
    %v1613 = vlaneseq
    %v1614 = vshrl.u32 %v1613, 7
    %v1615 = vsub.s32 %v1612, %v1614
    %v1616 = vrot.slane %v1602, %v1615
    %v1617 = vcombine.low %v1609, %v1616
    %1619 = vst [vmem:[#allocation8] sm:$0xff] %v1617
    // Predicated region
    $region26: #{tpu_custom_call.1} parent=1 // pred_check
      _
    $region27: #{tpu_custom_call.1} parent=1 // pred_check_branch
      %1621 = sbr.rel (0) target = $region29
    $region28: #{tpu_custom_call.1} parent=1 // pred_region
      %s1623 = ssub.s32 128, 128
      %1624 = vsyncadd [#allocation4], %s1623
      %s1626 = sshll.u32 [#allocation8], 4
      %s1627 = int_to_ptr.vmem [resolvable:$true] %s1626
      %1629 = dma.vmem_to_hbm [thread:$0]  %s1627, 128, %s3, [#allocation4]
    $region29: #{tpu_custom_call.1} parent=1 // pred_fallthru
      _
    // Predicated region
    $region30: #{tpu_custom_call.1} parent=1 // pred_check
      _
    $region31: #{tpu_custom_call.1} parent=1 // pred_check_branch
      %1631 = sbr.rel (0) target = $region33
    $region32: #{tpu_custom_call.1} parent=1 // pred_region
      %1632 = dma.done [#allocation4], 128
    $region33: #{tpu_custom_call.1} parent=1 // pred_fallthru
      _
    %1633 = vsyncpa [#allocation3], 1
    %1634 = vsyncpa [#allocation6], 1
    %1635 = vsyncpa [#allocation4], 1

</llo_original>
